<compile_context>
chip_gen: v7x
topology: tpu7x:2x2x1
jax: 0.10.0
libtpu: 0.0.40
codegen_flags: <defaults>
</compile_context>

<pallas_src>
import jax
import jax.numpy as jnp
from jax.experimental import pallas as pl
from jax.experimental.pallas import tpu as pltpu


def _mlp_kernel(x1_ref, x2_ref,
                w1a_ref, w1b_ref, b1_ref,
                w2_ref, b2_ref,
                w3_ref, b3_ref,
                w4_ref, b4_ref,
                out_ref):
    bf16 = jnp.bfloat16
    # Layer 1: cat((x1, x2), dim=1) @ W1 == x1 @ W1[:768] + x2 @ W1[768:]
    h = jnp.dot(x1_ref[...], w1a_ref[...], preferred_element_type=jnp.float32)
    h = h + jnp.dot(x2_ref[...], w1b_ref[...], preferred_element_type=jnp.float32)
    h = jnp.maximum(h + b1_ref[...], 0.0)
    # Dropout(0.3): identity in eval mode.
    h = jnp.dot(h.astype(bf16), w2_ref[...], preferred_element_type=jnp.float32)
    h = jnp.maximum(h + b2_ref[...], 0.0)
    # Dropout(0.2): identity in eval mode.
    h = jnp.dot(h.astype(bf16), w3_ref[...], preferred_element_type=jnp.float32)
    h = jnp.maximum(h + b3_ref[...], 0.0)
    # Final layer (padded to 128 output lanes; real logits live in lanes 0:2).
    out_ref[...] = (jnp.dot(h.astype(bf16), w4_ref[...],
                            preferred_element_type=jnp.float32)
                    + b4_ref[...])


def mlp_classifier_forward(x1, x2, params, *, block_batch=256):
    """x1, x2: (B, 768) float32. Returns logits (B, 2) float32."""
    w1, b1, w2, b2, w3, b3, w4, b4 = params
    B, D = x1.shape
    bf16 = jnp.bfloat16

    # Fold the concat into two dots; weights in bf16, accumulate in f32.
    w1a = w1[:D].astype(bf16)          # (768, 512)
    w1b = w1[D:].astype(bf16)          # (768, 512)
    w2b = w2.astype(bf16)              # (512, 256)
    b1r = b1.reshape(1, -1)            # (1, 512) f32
    b2r = b2.reshape(1, -1)            # (1, 256) f32

    # Zero-pad the narrow tail layers to lane width 128 (lane-dense stores).
    w3p = jnp.zeros((256, 128), bf16).at[:, :64].set(w3.astype(bf16))
    b3p = jnp.zeros((1, 128), jnp.float32).at[:, :64].set(b3.reshape(1, -1))
    w4p = jnp.zeros((128, 128), bf16).at[:64, :2].set(w4.astype(bf16))
    b4p = jnp.zeros((1, 128), jnp.float32).at[:, :2].set(b4.reshape(1, -1))

    # Batch tile: multiple of 8 sublanes, capped at block_batch.
    TB = min(block_batch, ((B + 7) // 8) * 8)
    TB = max(8, ((TB + 7) // 8) * 8)
    n_tiles = pl.cdiv(B, TB)
    B_pad = n_tiles * TB

    x1p = jnp.zeros((B_pad, D), bf16).at[:B].set(x1.astype(bf16))
    x2p = jnp.zeros((B_pad, D), bf16).at[:B].set(x2.astype(bf16))

    batch_spec = pl.BlockSpec((TB, D), lambda i: (i, 0))
    const = lambda shape: pl.BlockSpec(shape, lambda i: (0, 0))

    out = pl.pallas_call(
        _mlp_kernel,
        out_shape=jax.ShapeDtypeStruct((B_pad, 128), jnp.float32),
        grid=(n_tiles,),
        in_specs=[
            batch_spec,            # x1 tile
            batch_spec,            # x2 tile
            const((D, 512)),       # w1a  (resident)
            const((D, 512)),       # w1b
            const((1, 512)),       # b1
            const((512, 256)),     # w2
            const((1, 256)),       # b2
            const((256, 128)),     # w3 (padded)
            const((1, 128)),       # b3 (padded)
            const((128, 128)),     # w4 (padded)
            const((1, 128)),       # b4 (padded)
        ],
        out_specs=pl.BlockSpec((TB, 128), lambda i: (i, 0)),
        compiler_params=pltpu.CompilerParams(
            dimension_semantics=("parallel",)),
    )(x1p, x2p, w1a, w1b, b1r, w2b, b2r, w3p, b3p, w4p, b4p)

    return out[:B, :2]


def init_params(key, input_dim=768 * 2):
    """Deterministic init matching nn.Linear default (U(-1/sqrt(fan_in), +))."""
    dims = [input_dim, 512, 256, 64, 2]
    params = []
    for i in range(4):
        fan_in, fan_out = dims[i], dims[i + 1]
        key, kw, kb = jax.random.split(key, 3)
        bound = 1.0 / (fan_in ** 0.5)
        w = jax.random.uniform(kw, (fan_in, fan_out), jnp.float32, -bound, bound)
        b = jax.random.uniform(kb, (fan_out,), jnp.float32, -bound, bound)
        params += [w, b]
    return tuple(params)


def _reference(x1, x2, params):
    """Reference with the same bf16-weight / f32-accumulation numerics."""
    w1, b1, w2, b2, w3, b3, w4, b4 = params
    bf = jnp.bfloat16
    x = jnp.concatenate([x1, x2], axis=1).astype(bf)
    h = jnp.dot(x, w1.astype(bf), preferred_element_type=jnp.float32) + b1
    h = jnp.maximum(h, 0.0)
    h = jnp.dot(h.astype(bf), w2.astype(bf), preferred_element_type=jnp.float32) + b2
    h = jnp.maximum(h, 0.0)
    h = jnp.dot(h.astype(bf), w3.astype(bf), preferred_element_type=jnp.float32) + b3
    h = jnp.maximum(h, 0.0)
    return jnp.dot(h.astype(bf), w4.astype(bf), preferred_element_type=jnp.float32) + b4


if __name__ == "__main__":
    key = jax.random.PRNGKey(0)
    kx1, kx2, kp = jax.random.split(key, 3)
    B, D = 13, 768   # odd batch to exercise padding; block_batch=8 -> 2 grid tiles
    x1 = jax.random.normal(kx1, (B, D), jnp.float32)
    x2 = jax.random.normal(kx2, (B, D), jnp.float32)
    params = init_params(kp, input_dim=2 * D)

    out = mlp_classifier_forward(x1, x2, params, block_batch=8)
    out = jax.block_until_ready(out)

    ref = _reference(x1, x2, params)
    assert out.shape == (B, 2) and out.dtype == jnp.float32
    assert jnp.allclose(out, ref, atol=1e-2, rtol=1e-2), \
        f"max abs err {jnp.max(jnp.abs(out - ref))}"
    print("KERNEL_OK")
</pallas_src>

<mosaic_0001>
module attributes {stable_mosaic.version = 11 : i64} {
  func.func @_mlp_kernel(%arg0: i32, %arg1: memref<8x768xbf16, #tpu.memory_space<vmem>>, %arg2: memref<8x768xbf16, #tpu.memory_space<vmem>>, %arg3: memref<768x512xbf16, #tpu.memory_space<vmem>>, %arg4: memref<768x512xbf16, #tpu.memory_space<vmem>>, %arg5: memref<1x512xf32, #tpu.memory_space<vmem>>, %arg6: memref<512x256xbf16, #tpu.memory_space<vmem>>, %arg7: memref<1x256xf32, #tpu.memory_space<vmem>>, %arg8: memref<256x128xbf16, #tpu.memory_space<vmem>>, %arg9: memref<1x128xf32, #tpu.memory_space<vmem>>, %arg10: memref<128x128xbf16, #tpu.memory_space<vmem>>, %arg11: memref<1x128xf32, #tpu.memory_space<vmem>>, %arg12: memref<8x128xf32, #tpu.memory_space<vmem>>) attributes {dimension_semantics = [#tpu.dimension_semantics<parallel>], iteration_bounds = array<i64: 2>, scalar_prefetch = 0 : i64, scratch_operands = 0 : i64, tpu.core_type = #tpu.core_type<tc>, window_params = [{transform_indices = @transform_0, window_bounds = array<i64: 8, 768>}, {transform_indices = @transform_1, window_bounds = array<i64: 8, 768>}, {pipeline_mode = #tpu.pipeline_mode<synchronous>, transform_indices = @transform_2, window_bounds = array<i64: 768, 512>}, {pipeline_mode = #tpu.pipeline_mode<synchronous>, transform_indices = @transform_3, window_bounds = array<i64: 768, 512>}, {pipeline_mode = #tpu.pipeline_mode<synchronous>, transform_indices = @transform_4, window_bounds = array<i64: 1, 512>}, {pipeline_mode = #tpu.pipeline_mode<synchronous>, transform_indices = @transform_5, window_bounds = array<i64: 512, 256>}, {pipeline_mode = #tpu.pipeline_mode<synchronous>, transform_indices = @transform_6, window_bounds = array<i64: 1, 256>}, {pipeline_mode = #tpu.pipeline_mode<synchronous>, transform_indices = @transform_7, window_bounds = array<i64: 256, 128>}, {pipeline_mode = #tpu.pipeline_mode<synchronous>, transform_indices = @transform_8, window_bounds = array<i64: 1, 128>}, {pipeline_mode = #tpu.pipeline_mode<synchronous>, transform_indices = @transform_9, window_bounds = array<i64: 128, 128>}, {pipeline_mode = #tpu.pipeline_mode<synchronous>, transform_indices = @transform_10, window_bounds = array<i64: 1, 128>}, {transform_indices = @transform_11, window_bounds = array<i64: 8, 128>}]} {
    %c0 = arith.constant 0 : index
    %c0_0 = arith.constant 0 : index
    %0 = vector.load %arg1[%c0, %c0_0] : memref<8x768xbf16, #tpu.memory_space<vmem>>, vector<8x768xbf16>
    %c0_1 = arith.constant 0 : index
    %c0_2 = arith.constant 0 : index
    %1 = vector.load %arg3[%c0_1, %c0_2] : memref<768x512xbf16, #tpu.memory_space<vmem>>, vector<768x512xbf16>
    %cst = arith.constant dense<0.000000e+00> : vector<8x512xf32>
    %2 = tpu.matmul %0, %1, %cst {dimension_numbers = #tpu.dot_dimension_numbers<[1], [0], [0], [1], [0, 0, 1, 1], [], []>} : vector<8x768xbf16>, vector<768x512xbf16>, vector<8x512xf32> -> vector<8x512xf32>
    %c0_3 = arith.constant 0 : index
    %c0_4 = arith.constant 0 : index
    %3 = vector.load %arg2[%c0_3, %c0_4] : memref<8x768xbf16, #tpu.memory_space<vmem>>, vector<8x768xbf16>
    %c0_5 = arith.constant 0 : index
    %c0_6 = arith.constant 0 : index
    %4 = vector.load %arg4[%c0_5, %c0_6] : memref<768x512xbf16, #tpu.memory_space<vmem>>, vector<768x512xbf16>
    %cst_7 = arith.constant dense<0.000000e+00> : vector<8x512xf32>
    %5 = tpu.matmul %3, %4, %cst_7 {dimension_numbers = #tpu.dot_dimension_numbers<[1], [0], [0], [1], [0, 0, 1, 1], [], []>} : vector<8x768xbf16>, vector<768x512xbf16>, vector<8x512xf32> -> vector<8x512xf32>
    %6 = arith.addf %2, %5 : vector<8x512xf32>
    %c0_8 = arith.constant 0 : index
    %c0_9 = arith.constant 0 : index
    %7 = vector.load %arg5[%c0_8, %c0_9] : memref<1x512xf32, #tpu.memory_space<vmem>>, vector<1x512xf32>
    %8 = vector.broadcast %7 : vector<1x512xf32> to vector<8x512xf32>
    %9 = arith.addf %6, %8 : vector<8x512xf32>
    %cst_10 = arith.constant 0.000000e+00 : f32
    %10 = vector.broadcast %cst_10 : f32 to vector<8x512xf32>
    %11 = arith.maximumf %9, %10 : vector<8x512xf32>
    %12 = arith.truncf %11 : vector<8x512xf32> to vector<8x512xbf16>
    %c0_11 = arith.constant 0 : index
    %c0_12 = arith.constant 0 : index
    %13 = vector.load %arg6[%c0_11, %c0_12] : memref<512x256xbf16, #tpu.memory_space<vmem>>, vector<512x256xbf16>
    %cst_13 = arith.constant dense<0.000000e+00> : vector<8x256xf32>
    %14 = tpu.matmul %12, %13, %cst_13 {dimension_numbers = #tpu.dot_dimension_numbers<[1], [0], [0], [1], [0, 0, 1, 1], [], []>} : vector<8x512xbf16>, vector<512x256xbf16>, vector<8x256xf32> -> vector<8x256xf32>
    %c0_14 = arith.constant 0 : index
    %c0_15 = arith.constant 0 : index
    %15 = vector.load %arg7[%c0_14, %c0_15] : memref<1x256xf32, #tpu.memory_space<vmem>>, vector<1x256xf32>
    %16 = vector.broadcast %15 : vector<1x256xf32> to vector<8x256xf32>
    %17 = arith.addf %14, %16 : vector<8x256xf32>
    %cst_16 = arith.constant 0.000000e+00 : f32
    %18 = vector.broadcast %cst_16 : f32 to vector<8x256xf32>
    %19 = arith.maximumf %17, %18 : vector<8x256xf32>
    %20 = arith.truncf %19 : vector<8x256xf32> to vector<8x256xbf16>
    %c0_17 = arith.constant 0 : index
    %c0_18 = arith.constant 0 : index
    %21 = vector.load %arg8[%c0_17, %c0_18] : memref<256x128xbf16, #tpu.memory_space<vmem>>, vector<256x128xbf16>
    %cst_19 = arith.constant dense<0.000000e+00> : vector<8x128xf32>
    %22 = tpu.matmul %20, %21, %cst_19 {dimension_numbers = #tpu.dot_dimension_numbers<[1], [0], [0], [1], [0, 0, 1, 1], [], []>} : vector<8x256xbf16>, vector<256x128xbf16>, vector<8x128xf32> -> vector<8x128xf32>
    %c0_20 = arith.constant 0 : index
    %c0_21 = arith.constant 0 : index
    %23 = vector.load %arg9[%c0_20, %c0_21] : memref<1x128xf32, #tpu.memory_space<vmem>>, vector<1x128xf32>
    %24 = vector.broadcast %23 : vector<1x128xf32> to vector<8x128xf32>
    %25 = arith.addf %22, %24 : vector<8x128xf32>
    %cst_22 = arith.constant 0.000000e+00 : f32
    %26 = vector.broadcast %cst_22 : f32 to vector<8x128xf32>
    %27 = arith.maximumf %25, %26 : vector<8x128xf32>
    %28 = arith.truncf %27 : vector<8x128xf32> to vector<8x128xbf16>
    %c0_23 = arith.constant 0 : index
    %c0_24 = arith.constant 0 : index
    %29 = vector.load %arg10[%c0_23, %c0_24] : memref<128x128xbf16, #tpu.memory_space<vmem>>, vector<128x128xbf16>
    %cst_25 = arith.constant dense<0.000000e+00> : vector<8x128xf32>
    %30 = tpu.matmul %28, %29, %cst_25 {dimension_numbers = #tpu.dot_dimension_numbers<[1], [0], [0], [1], [0, 0, 1, 1], [], []>} : vector<8x128xbf16>, vector<128x128xbf16>, vector<8x128xf32> -> vector<8x128xf32>
    %c0_26 = arith.constant 0 : index
    %c0_27 = arith.constant 0 : index
    %31 = vector.load %arg11[%c0_26, %c0_27] : memref<1x128xf32, #tpu.memory_space<vmem>>, vector<1x128xf32>
    %32 = vector.broadcast %31 : vector<1x128xf32> to vector<8x128xf32>
    %33 = arith.addf %30, %32 : vector<8x128xf32>
    %c0_28 = arith.constant 0 : index
    %c0_29 = arith.constant 0 : index
    %34 = vector.load %arg12[%c0_28, %c0_29] : memref<8x128xf32, #tpu.memory_space<vmem>>, vector<8x128xf32>
    tpu.vector_store %arg12[%c0_28, %c0_29], %33 {strides = array<i32>} : memref<8x128xf32, #tpu.memory_space<vmem>>, vector<8x128xf32>,
    return
  }
  func.func @transform_0(%arg0: i32) -> (i32, i32) {
    %c0_i32 = arith.constant 0 : i32
    %c0_i32_0 = arith.constant 0 : i32
    return %arg0, %c0_i32 : i32, i32
  }
  func.func @transform_1(%arg0: i32) -> (i32, i32) {
    %c0_i32 = arith.constant 0 : i32
    %c0_i32_0 = arith.constant 0 : i32
    return %arg0, %c0_i32 : i32, i32
  }
  func.func @transform_2(%arg0: i32) -> (i32, i32) {
    %c0_i32 = arith.constant 0 : i32
    %c0_i32_0 = arith.constant 0 : i32
    %c0_i32_1 = arith.constant 0 : i32
    return %c0_i32, %c0_i32_0 : i32, i32
  }
  func.func @transform_3(%arg0: i32) -> (i32, i32) {
    %c0_i32 = arith.constant 0 : i32
    %c0_i32_0 = arith.constant 0 : i32
    %c0_i32_1 = arith.constant 0 : i32
    return %c0_i32, %c0_i32_0 : i32, i32
  }
  func.func @transform_4(%arg0: i32) -> (i32, i32) {
    %c0_i32 = arith.constant 0 : i32
    %c0_i32_0 = arith.constant 0 : i32
    %c0_i32_1 = arith.constant 0 : i32
    return %c0_i32, %c0_i32_0 : i32, i32
  }
  func.func @transform_5(%arg0: i32) -> (i32, i32) {
    %c0_i32 = arith.constant 0 : i32
    %c0_i32_0 = arith.constant 0 : i32
    %c0_i32_1 = arith.constant 0 : i32
    return %c0_i32, %c0_i32_0 : i32, i32
  }
  func.func @transform_6(%arg0: i32) -> (i32, i32) {
    %c0_i32 = arith.constant 0 : i32
    %c0_i32_0 = arith.constant 0 : i32
    %c0_i32_1 = arith.constant 0 : i32
    return %c0_i32, %c0_i32_0 : i32, i32
  }
  func.func @transform_7(%arg0: i32) -> (i32, i32) {
    %c0_i32 = arith.constant 0 : i32
    %c0_i32_0 = arith.constant 0 : i32
    %c0_i32_1 = arith.constant 0 : i32
    return %c0_i32, %c0_i32_0 : i32, i32
  }
  func.func @transform_8(%arg0: i32) -> (i32, i32) {
    %c0_i32 = arith.constant 0 : i32
    %c0_i32_0 = arith.constant 0 : i32
    %c0_i32_1 = arith.constant 0 : i32
    return %c0_i32, %c0_i32_0 : i32, i32
  }
  func.func @transform_9(%arg0: i32) -> (i32, i32) {
    %c0_i32 = arith.constant 0 : i32
    %c0_i32_0 = arith.constant 0 : i32
    %c0_i32_1 = arith.constant 0 : i32
    return %c0_i32, %c0_i32_0 : i32, i32
  }
  func.func @transform_10(%arg0: i32) -> (i32, i32) {
    %c0_i32 = arith.constant 0 : i32
    %c0_i32_0 = arith.constant 0 : i32
    %c0_i32_1 = arith.constant 0 : i32
    return %c0_i32, %c0_i32_0 : i32, i32
  }
  func.func @transform_11(%arg0: i32) -> (i32, i32) {
    %c0_i32 = arith.constant 0 : i32
    %c0_i32_0 = arith.constant 0 : i32
    return %arg0, %c0_i32 : i32, i32
  }
}

</mosaic_0001>

<llo_original>
// kernel: tpu_custom_call.1
$region0: #{tpu_custom_call.1}
  #allocation0 [shape = 'u32[]', space=smem, size = 0x4, offset = 0x4, fixed_abs, tag = 'smem constant byte address 0x4 - core index']
  #allocation1 [shape = 'u32[144,128]{1,0:T(1,128)}', space=vmem, size = 0x12000, scoped, tag = 'internal scratch']
  %s0 = inlined_call_operand.hbm [shape: bf16[16,768], index: 0, kind: input, shape index: {}]
  %s1 = inlined_call_operand.hbm [shape: bf16[16,768], index: 1, kind: input, shape index: {}]
  %s2 = inlined_call_operand.hbm [shape: bf16[768,512], index: 2, kind: input, shape index: {}]
  %s3 = inlined_call_operand.hbm [shape: bf16[768,512], index: 3, kind: input, shape index: {}]
  %s4 = inlined_call_operand.vmem [shape: f32[1,512], index: 4, kind: input, shape index: {}]
  %s5 = inlined_call_operand.hbm [shape: bf16[512,256], index: 5, kind: input, shape index: {}]
  %s6 = inlined_call_operand.vmem [shape: f32[1,256], index: 6, kind: input, shape index: {}]
  %s7 = inlined_call_operand.hbm [shape: bf16[256,128], index: 7, kind: input, shape index: {}]
  %s8 = inlined_call_operand.vmem [shape: f32[1,128], index: 8, kind: input, shape index: {}]
  %s9 = inlined_call_operand.hbm [shape: bf16[128,128], index: 9, kind: input, shape index: {}]
  %s10 = inlined_call_operand.vmem [shape: f32[1,128], index: 10, kind: input, shape index: {}]
  %s11 = inlined_call_operand.hbm [shape: f32[16,128], index: 11, kind: output, shape index: {}]
  %s12 = sld [smem:[#allocation0]]
  $region105: #{tpu_custom_call.1} parent=0
    _
  %s14 = ssub.s32 1, %s12
  %s15 = scalar_select 0, %s14, %s12
  $region1: #{tpu_custom_call.1} parent=0
    #allocation2 [shape = 'u8[24576]{0}', space=vmem, size = 0x6000, scoped, tag = 'input window, operand 0']
    #allocation3 [shape = 's32[2]{0}', space=sflag, size = 0x8, scoped, tag = 'scoped memory for tpu_custom_call.1']
    #allocation4 [shape = 's32[2]{0}', space=sflag, size = 0x8, scoped, tag = 'scoped memory for tpu_custom_call.1']
    #allocation5 [shape = 'u8[24576]{0}', space=vmem, size = 0x6000, scoped, tag = 'input window, operand 1']
    #allocation6 [shape = 's32[2]{0}', space=sflag, size = 0x8, scoped, tag = 'scoped memory for tpu_custom_call.1']
    #allocation7 [shape = 'u8[786432]{0}', space=vmem, size = 0xc0000, scoped, tag = 'input window, operand 2, single buffered']
    #allocation8 [shape = 'u8[786432]{0}', space=vmem, size = 0xc0000, scoped, tag = 'input window, operand 3, single buffered']
    #allocation9 [shape = 's32[1]{0}', space=sflag, size = 0x4, scoped, tag = 'scoped memory for tpu_custom_call.1']
    #allocation10 [shape = 'u8[262144]{0}', space=vmem, size = 0x40000, scoped, tag = 'input window, operand 5, single buffered']
    #allocation11 [shape = 'u8[65536]{0}', space=vmem, size = 0x10000, scoped, tag = 'input window, operand 7, single buffered']
    #allocation12 [shape = 's32[1]{0}', space=sflag, size = 0x4, scoped, tag = 'scoped memory for tpu_custom_call.1']
    #allocation13 [shape = 'u8[32768]{0}', space=vmem, size = 0x8000, scoped, tag = 'input window, operand 9, single buffered']
    #allocation14 [shape = 'u8[8192]{0}', space=vmem, size = 0x2000, scoped, tag = 'output window, operand 0']
    %16 = vsyncpa [#allocation3], 0
    %s17 = scalar_lea.sflag [#allocation3], 1
    %18 = vsyncpa %s17, 0
    %19 = vsyncpa [#allocation6], 0
    %s20 = scalar_lea.sflag [#allocation6], 1
    %21 = vsyncpa %s20, 0
    %22 = vsyncpa [#allocation9], 0
    %23 = vsyncpa [#allocation12], 0
    %24 = vsyncpa [#allocation4], 0
    %s25 = scalar_lea.sflag [#allocation4], 1
    %26 = vsyncpa %s25, 0
    loop: start=0, step=1, limit=4
    $region2: #{tpu_custom_call.1} parent=1 // loop_pre_header
      _
    $region3: #{tpu_custom_call.1} parent=1 // loop_header
      %s28 = sphi 0, %s32
      %p29 = scmp.ge.s32.totalorder %s28, 4
      %s38 = sphi 0, %s40
      %s41 = sphi 0, %s38
      %s42 = sphi 0, %s41
      %s58 = sphi 0, %s42
      %s64 = sphi 0, %s66
      %s67 = sphi 0, %s64
      %s68 = sphi 0, %s67
      %s84 = sphi 0, %s68
      %s88 = sphi 0, %s88
      %s90 = sphi 0, %s88
      %s91 = sphi 0, %s90
      %s105 = sphi 0, %s91
      %s109 = sphi 0, %s109
      %s111 = sphi 0, %s109
      %s112 = sphi 0, %s111
      %s126 = sphi 0, %s112
      %s130 = sphi 0, %s130
      %s132 = sphi 0, %s130
      %s133 = sphi 0, %s132
      %s147 = sphi 0, %s133
      %s151 = sphi 0, %s151
      %s153 = sphi 0, %s151
      %s154 = sphi 0, %s153
      %s168 = sphi 0, %s154
      %s172 = sphi 0, %s172
      %s174 = sphi 0, %s172
      %s175 = sphi 0, %s174
      %s189 = sphi 0, %s175
      %s193 = sphi 0, %s193
      %s195 = sphi 0, %s193
      %s196 = sphi 0, %s195
      %s210 = sphi 0, %s196
      %s214 = sphi 0, %s214
      %s216 = sphi 0, %s214
      %s217 = sphi 0, %s216
      %s231 = sphi 0, %s217
      %s235 = sphi 0, %s235
      %s237 = sphi 0, %s235
      %s238 = sphi 0, %s237
      %s252 = sphi 0, %s238
      %s256 = sphi 0, %s256
      %s258 = sphi 0, %s256
      %s259 = sphi 0, %s258
      %s273 = sphi 0, %s259
      %s279 = sphi 0, %s281
      %s282 = sphi 0, %s279
      %s283 = sphi 0, %s282
      %s299 = sphi 0, %s283
    $region4: #{tpu_custom_call.1} parent=1 // loop_header_branch
      %31 = sbr.rel (%p29) target = $region8
    $region5: #{tpu_custom_call.1} parent=1 // loop_body
      %s33 = ssub.s32 %s28, 1
      %s34 = ssub.s32 %s28, 2
      %s35 = sadd.s32 %s28, 1
      %s36 = ssub.s32 %s28, %s35
      %p37 = scmp.eq.s32.totalorder %s36, 0
      %s39 = sadd.s32 %s38, 1
      %s40 = scalar_select %p37, %s38, %s39
      %p43 = pneg %p37
      %p44 = scmp.eq.s32.totalorder %s28, 1
      %p45 = por %p43, %p44
      %p46 = scmp.ne.s32.totalorder %s38, %s41
      %p47 = scmp.eq.s32.totalorder %s28, 0
      %p48 = por %p46, %p47
      %p49 = scmp.ne.s32.totalorder %s38, %s41
      %p50 = scmp.eq.s32.totalorder %s33, 1
      %p51 = por %p49, %p50
      %p52 = scmp.ne.s32.totalorder %s41, %s42
      %p53 = scmp.eq.s32.totalorder %s33, 0
      %p54 = por %p52, %p53
      %p55 = scmp.ne.s32.totalorder %s41, %s42
      %p56 = scmp.eq.s32.totalorder %s34, 1
      %p57 = por %p55, %p56
      %p59 = scmp.ne.s32.totalorder %s42, %s58
      %p60 = scmp.eq.s32.totalorder %s34, 0
      %p61 = por %p59, %p60
      %s62 = ssub.s32 %s28, %s35
      %p63 = scmp.eq.s32.totalorder %s62, 0
      %s65 = sadd.s32 %s64, 1
      %s66 = scalar_select %p63, %s64, %s65
      %p69 = pneg %p63
      %p70 = scmp.eq.s32.totalorder %s28, 1
      %p71 = por %p69, %p70
      %p72 = scmp.ne.s32.totalorder %s64, %s67
      %p73 = scmp.eq.s32.totalorder %s28, 0
      %p74 = por %p72, %p73
      %p75 = scmp.ne.s32.totalorder %s64, %s67
      %p76 = scmp.eq.s32.totalorder %s33, 1
      %p77 = por %p75, %p76
      %p78 = scmp.ne.s32.totalorder %s67, %s68
      %p79 = scmp.eq.s32.totalorder %s33, 0
      %p80 = por %p78, %p79
      %p81 = scmp.ne.s32.totalorder %s67, %s68
      %p82 = scmp.eq.s32.totalorder %s34, 1
      %p83 = por %p81, %p82
      %p85 = scmp.ne.s32.totalorder %s68, %s84
      %p86 = scmp.eq.s32.totalorder %s34, 0
      %p87 = por %p85, %p86
      %s89 = sadd.s32 %s88, 1
      %p92 = scmp.eq.s32.totalorder %s28, 1
      %p93 = scmp.ne.s32.totalorder %s88, %s90
      %p94 = scmp.eq.s32.totalorder %s28, 0
      %p95 = por %p93, %p94
      %p96 = scmp.ne.s32.totalorder %s88, %s90
      %p97 = scmp.eq.s32.totalorder %s33, 1
      %p98 = por %p96, %p97
      %p99 = scmp.ne.s32.totalorder %s90, %s91
      %p100 = scmp.eq.s32.totalorder %s33, 0
      %p101 = por %p99, %p100
      %p102 = scmp.ne.s32.totalorder %s90, %s91
      %p103 = scmp.eq.s32.totalorder %s34, 1
      %p104 = por %p102, %p103
      %p106 = scmp.ne.s32.totalorder %s91, %s105
      %p107 = scmp.eq.s32.totalorder %s34, 0
      %p108 = por %p106, %p107
      %s110 = sadd.s32 %s109, 1
      %p113 = scmp.eq.s32.totalorder %s28, 1
      %p114 = scmp.ne.s32.totalorder %s109, %s111
      %p115 = scmp.eq.s32.totalorder %s28, 0
      %p116 = por %p114, %p115
      %p117 = scmp.ne.s32.totalorder %s109, %s111
      %p118 = scmp.eq.s32.totalorder %s33, 1
      %p119 = por %p117, %p118
      %p120 = scmp.ne.s32.totalorder %s111, %s112
      %p121 = scmp.eq.s32.totalorder %s33, 0
      %p122 = por %p120, %p121
      %p123 = scmp.ne.s32.totalorder %s111, %s112
      %p124 = scmp.eq.s32.totalorder %s34, 1
      %p125 = por %p123, %p124
      %p127 = scmp.ne.s32.totalorder %s112, %s126
      %p128 = scmp.eq.s32.totalorder %s34, 0
      %p129 = por %p127, %p128
      %s131 = sadd.s32 %s130, 1
      %p134 = scmp.eq.s32.totalorder %s28, 1
      %p135 = scmp.ne.s32.totalorder %s130, %s132
      %p136 = scmp.eq.s32.totalorder %s28, 0
      %p137 = por %p135, %p136
      %p138 = scmp.ne.s32.totalorder %s130, %s132
      %p139 = scmp.eq.s32.totalorder %s33, 1
      %p140 = por %p138, %p139
      %p141 = scmp.ne.s32.totalorder %s132, %s133
      %p142 = scmp.eq.s32.totalorder %s33, 0
      %p143 = por %p141, %p142
      %p144 = scmp.ne.s32.totalorder %s132, %s133
      %p145 = scmp.eq.s32.totalorder %s34, 1
      %p146 = por %p144, %p145
      %p148 = scmp.ne.s32.totalorder %s133, %s147
      %p149 = scmp.eq.s32.totalorder %s34, 0
      %p150 = por %p148, %p149
      %s152 = sadd.s32 %s151, 1
      %p155 = scmp.eq.s32.totalorder %s28, 1
      %p156 = scmp.ne.s32.totalorder %s151, %s153
      %p157 = scmp.eq.s32.totalorder %s28, 0
      %p158 = por %p156, %p157
      %p159 = scmp.ne.s32.totalorder %s151, %s153
      %p160 = scmp.eq.s32.totalorder %s33, 1
      %p161 = por %p159, %p160
      %p162 = scmp.ne.s32.totalorder %s153, %s154
      %p163 = scmp.eq.s32.totalorder %s33, 0
      %p164 = por %p162, %p163
      %p165 = scmp.ne.s32.totalorder %s153, %s154
      %p166 = scmp.eq.s32.totalorder %s34, 1
      %p167 = por %p165, %p166
      %p169 = scmp.ne.s32.totalorder %s154, %s168
      %p170 = scmp.eq.s32.totalorder %s34, 0
      %p171 = por %p169, %p170
      %s173 = sadd.s32 %s172, 1
      %p176 = scmp.eq.s32.totalorder %s28, 1
      %p177 = scmp.ne.s32.totalorder %s172, %s174
      %p178 = scmp.eq.s32.totalorder %s28, 0
      %p179 = por %p177, %p178
      %p180 = scmp.ne.s32.totalorder %s172, %s174
      %p181 = scmp.eq.s32.totalorder %s33, 1
      %p182 = por %p180, %p181
      %p183 = scmp.ne.s32.totalorder %s174, %s175
      %p184 = scmp.eq.s32.totalorder %s33, 0
      %p185 = por %p183, %p184
      %p186 = scmp.ne.s32.totalorder %s174, %s175
      %p187 = scmp.eq.s32.totalorder %s34, 1
      %p188 = por %p186, %p187
      %p190 = scmp.ne.s32.totalorder %s175, %s189
      %p191 = scmp.eq.s32.totalorder %s34, 0
      %p192 = por %p190, %p191
      %s194 = sadd.s32 %s193, 1
      %p197 = scmp.eq.s32.totalorder %s28, 1
      %p198 = scmp.ne.s32.totalorder %s193, %s195
      %p199 = scmp.eq.s32.totalorder %s28, 0
      %p200 = por %p198, %p199
      %p201 = scmp.ne.s32.totalorder %s193, %s195
      %p202 = scmp.eq.s32.totalorder %s33, 1
      %p203 = por %p201, %p202
      %p204 = scmp.ne.s32.totalorder %s195, %s196
      %p205 = scmp.eq.s32.totalorder %s33, 0
      %p206 = por %p204, %p205
      %p207 = scmp.ne.s32.totalorder %s195, %s196
      %p208 = scmp.eq.s32.totalorder %s34, 1
      %p209 = por %p207, %p208
      %p211 = scmp.ne.s32.totalorder %s196, %s210
      %p212 = scmp.eq.s32.totalorder %s34, 0
      %p213 = por %p211, %p212
      %s215 = sadd.s32 %s214, 1
      %p218 = scmp.eq.s32.totalorder %s28, 1
      %p219 = scmp.ne.s32.totalorder %s214, %s216
      %p220 = scmp.eq.s32.totalorder %s28, 0
      %p221 = por %p219, %p220
      %p222 = scmp.ne.s32.totalorder %s214, %s216
      %p223 = scmp.eq.s32.totalorder %s33, 1
      %p224 = por %p222, %p223
      %p225 = scmp.ne.s32.totalorder %s216, %s217
      %p226 = scmp.eq.s32.totalorder %s33, 0
      %p227 = por %p225, %p226
      %p228 = scmp.ne.s32.totalorder %s216, %s217
      %p229 = scmp.eq.s32.totalorder %s34, 1
      %p230 = por %p228, %p229
      %p232 = scmp.ne.s32.totalorder %s217, %s231
      %p233 = scmp.eq.s32.totalorder %s34, 0
      %p234 = por %p232, %p233
      %s236 = sadd.s32 %s235, 1
      %p239 = scmp.eq.s32.totalorder %s28, 1
      %p240 = scmp.ne.s32.totalorder %s235, %s237
      %p241 = scmp.eq.s32.totalorder %s28, 0
      %p242 = por %p240, %p241
      %p243 = scmp.ne.s32.totalorder %s235, %s237
      %p244 = scmp.eq.s32.totalorder %s33, 1
      %p245 = por %p243, %p244
      %p246 = scmp.ne.s32.totalorder %s237, %s238
      %p247 = scmp.eq.s32.totalorder %s33, 0
      %p248 = por %p246, %p247
      %p249 = scmp.ne.s32.totalorder %s237, %s238
      %p250 = scmp.eq.s32.totalorder %s34, 1
      %p251 = por %p249, %p250
      %p253 = scmp.ne.s32.totalorder %s238, %s252
      %p254 = scmp.eq.s32.totalorder %s34, 0
      %p255 = por %p253, %p254
      %s257 = sadd.s32 %s256, 1
      %p260 = scmp.eq.s32.totalorder %s28, 1
      %p261 = scmp.ne.s32.totalorder %s256, %s258
      %p262 = scmp.eq.s32.totalorder %s28, 0
      %p263 = por %p261, %p262
      %p264 = scmp.ne.s32.totalorder %s256, %s258
      %p265 = scmp.eq.s32.totalorder %s33, 1
      %p266 = por %p264, %p265
      %p267 = scmp.ne.s32.totalorder %s258, %s259
      %p268 = scmp.eq.s32.totalorder %s33, 0
      %p269 = por %p267, %p268
      %p270 = scmp.ne.s32.totalorder %s258, %s259
      %p271 = scmp.eq.s32.totalorder %s34, 1
      %p272 = por %p270, %p271
      %p274 = scmp.ne.s32.totalorder %s259, %s273
      %p275 = scmp.eq.s32.totalorder %s34, 0
      %p276 = por %p274, %p275
      %s277 = ssub.s32 %s28, %s35
      %p278 = scmp.eq.s32.totalorder %s277, 0
      %s280 = sadd.s32 %s279, 1
      %s281 = scalar_select %p278, %s279, %s280
      %p284 = pneg %p278
      %p285 = scmp.eq.s32.totalorder %s28, 1
      %p286 = por %p284, %p285
      %p287 = scmp.ne.s32.totalorder %s279, %s282
      %p288 = scmp.eq.s32.totalorder %s28, 0
      %p289 = por %p287, %p288
      %p290 = scmp.ne.s32.totalorder %s279, %s282
      %p291 = scmp.eq.s32.totalorder %s33, 1
      %p292 = por %p290, %p291
      %p293 = scmp.ne.s32.totalorder %s282, %s283
      %p294 = scmp.eq.s32.totalorder %s33, 0
      %p295 = por %p293, %p294
      %p296 = scmp.ne.s32.totalorder %s282, %s283
      %p297 = scmp.eq.s32.totalorder %s34, 1
      %p298 = por %p296, %p297
      %p300 = scmp.ne.s32.totalorder %s283, %s299
      %p301 = scmp.eq.s32.totalorder %s34, 0
      %p302 = por %p300, %p301
      %p303 = scmp.le.s32.totalorder 1, %s28
      %p304 = scmp.lt.s32.totalorder %s28, 3
      %p305 = pnand %p303, %p304
      %p306 = pneg %p305
      // Predicated region
      $region9: #{tpu_custom_call.1} parent=5 // pred_check
        _
      $region10: #{tpu_custom_call.1} parent=5 // pred_check_branch
        %308 = sbr.rel (%p305) target = $region12
      $region11: #{tpu_custom_call.1} parent=5 // pred_region
        %s309 = ssub.s32 %s28, 1
        // Predicated region
        $region13: #{tpu_custom_call.1} parent=11 // pred_check
          %p310 = pneg %p101
        $region14: #{tpu_custom_call.1} parent=11 // pred_check_branch
          %312 = sbr.rel (%p310) target = $region16
        $region15: #{tpu_custom_call.1} parent=11 // pred_region
          %s314 = ssub.s32 24576, 24576
          %315 = vsyncadd [#allocation6], %s314
          %s316 = sshll.u32 [#allocation7], 4
          %s317 = int_to_ptr.vmem [resolvable:$true] %s316
          %322 = dma.hbm_to_vmem [thread:$0]  %s2, 24576, %s317, [#allocation6], 256, 256, 16
        $region16: #{tpu_custom_call.1} parent=11 // pred_fallthru
          _
        // Predicated region
        $region17: #{tpu_custom_call.1} parent=11 // pred_check
          %p323 = pneg %p122
        $region18: #{tpu_custom_call.1} parent=11 // pred_check_branch
          %325 = sbr.rel (%p323) target = $region20
        $region19: #{tpu_custom_call.1} parent=11 // pred_region
          %s327 = ssub.s32 24576, 24576
          %328 = vsyncadd [#allocation9], %s327
          %s329 = sshll.u32 [#allocation8], 4
          %s330 = int_to_ptr.vmem [resolvable:$true] %s329
          %335 = dma.hbm_to_vmem [thread:$0]  %s3, 24576, %s330, [#allocation9], 256, 256, 16
        $region20: #{tpu_custom_call.1} parent=11 // pred_fallthru
          _
        // Predicated region
        $region21: #{tpu_custom_call.1} parent=11 // pred_check
          %p336 = pneg %p143
        $region22: #{tpu_custom_call.1} parent=11 // pred_check_branch
          %338 = sbr.rel (%p336) target = $region24
        $region23: #{tpu_custom_call.1} parent=11 // pred_region
          _
        $region24: #{tpu_custom_call.1} parent=11 // pred_fallthru
          _
        // Predicated region
        $region25: #{tpu_custom_call.1} parent=11 // pred_check
          %p339 = pneg %p164
        $region26: #{tpu_custom_call.1} parent=11 // pred_check_branch
          %341 = sbr.rel (%p339) target = $region28
        $region27: #{tpu_custom_call.1} parent=11 // pred_region
          %s343 = ssub.s32 8192, 8192
          %344 = vsyncadd [#allocation9], %s343
          %s345 = sshll.u32 [#allocation10], 4
          %s346 = int_to_ptr.vmem [resolvable:$true] %s345
          %351 = dma.hbm_to_vmem [thread:$0]  %s5, 8192, %s346, [#allocation9], 128, 128, 8
        $region28: #{tpu_custom_call.1} parent=11 // pred_fallthru
          _
        // Predicated region
        $region29: #{tpu_custom_call.1} parent=11 // pred_check
          %p352 = pneg %p185
        $region30: #{tpu_custom_call.1} parent=11 // pred_check_branch
          %354 = sbr.rel (%p352) target = $region32
        $region31: #{tpu_custom_call.1} parent=11 // pred_region
          _
        $region32: #{tpu_custom_call.1} parent=11 // pred_fallthru
          _
        // Predicated region
        $region33: #{tpu_custom_call.1} parent=11 // pred_check
          %p355 = pneg %p206
        $region34: #{tpu_custom_call.1} parent=11 // pred_check_branch
          %357 = sbr.rel (%p355) target = $region36
        $region35: #{tpu_custom_call.1} parent=11 // pred_region
          %s359 = ssub.s32 2048, 2048
          %360 = vsyncadd [#allocation12], %s359
          %s361 = sshll.u32 [#allocation11], 4
          %s362 = int_to_ptr.vmem [resolvable:$true] %s361
          %367 = dma.hbm_to_vmem [thread:$0]  %s7, 2048, %s362, [#allocation12], 64, 64, 4
        $region36: #{tpu_custom_call.1} parent=11 // pred_fallthru
          _
        // Predicated region
        $region37: #{tpu_custom_call.1} parent=11 // pred_check
          %p368 = pneg %p227
        $region38: #{tpu_custom_call.1} parent=11 // pred_check_branch
          %370 = sbr.rel (%p368) target = $region40
        $region39: #{tpu_custom_call.1} parent=11 // pred_region
          _
        $region40: #{tpu_custom_call.1} parent=11 // pred_fallthru
          _
        // Predicated region
        $region41: #{tpu_custom_call.1} parent=11 // pred_check
          %p371 = pneg %p248
        $region42: #{tpu_custom_call.1} parent=11 // pred_check_branch
          %373 = sbr.rel (%p371) target = $region44
        $region43: #{tpu_custom_call.1} parent=11 // pred_region
          %s375 = ssub.s32 1024, 1024
          %376 = vsyncadd [#allocation12], %s375
          %s377 = sshll.u32 [#allocation13], 4
          %s378 = int_to_ptr.vmem [resolvable:$true] %s377
          %383 = dma.hbm_to_vmem [thread:$0]  %s9, 1024, %s378, [#allocation12], 64, 64, 4
        $region44: #{tpu_custom_call.1} parent=11 // pred_fallthru
          _
        // Predicated region
        $region45: #{tpu_custom_call.1} parent=11 // pred_check
          %p384 = pneg %p269
        $region46: #{tpu_custom_call.1} parent=11 // pred_check_branch
          %386 = sbr.rel (%p384) target = $region48
        $region47: #{tpu_custom_call.1} parent=11 // pred_region
          _
        $region48: #{tpu_custom_call.1} parent=11 // pred_fallthru
          _
      $region12: #{tpu_custom_call.1} parent=5 // pred_fallthru
        _
      %p387 = scmp.lt.s32.totalorder %s28, 2
      // Predicated region
      $region49: #{tpu_custom_call.1} parent=5 // pred_check
        %p388 = pneg %p387
      $region50: #{tpu_custom_call.1} parent=5 // pred_check_branch
        %390 = sbr.rel (%p388) target = $region52
      $region51: #{tpu_custom_call.1} parent=5 // pred_region
        // Predicated region
        $region53: #{tpu_custom_call.1} parent=51 // pred_check
          %p391 = pneg %p48
        $region54: #{tpu_custom_call.1} parent=51 // pred_check_branch
          %393 = sbr.rel (%p391) target = $region56
        $region55: #{tpu_custom_call.1} parent=51 // pred_region
          %s394 = sand.u32 %s38, 1
          %s395 = scalar_lea.sflag [#allocation3], %s394
          %s396 = sand.u32 %s38, 1
          %s397 = smul.addr %s396, 24
          %s398 = scalar_lea.vmem [#allocation2], %s397
          %s400 = ssub.s32 384, 384
          %401 = vsyncadd %s395, %s400
          %s402 = smul.addr %s28, 6
          %s403 = smul.addr %s402, 64
          %s404 = scalar_lea.hbm %s0, %s403
          %s406 = sshll.u32 %s398, 4
          %s407 = int_to_ptr.vmem [resolvable:$true] %s406
          %409 = dma.hbm_to_vmem [thread:$0]  %s404, 384, %s407, %s395
        $region56: #{tpu_custom_call.1} parent=51 // pred_fallthru
          _
        // Predicated region
        $region57: #{tpu_custom_call.1} parent=51 // pred_check
          %p410 = pneg %p74
        $region58: #{tpu_custom_call.1} parent=51 // pred_check_branch
          %412 = sbr.rel (%p410) target = $region60
        $region59: #{tpu_custom_call.1} parent=51 // pred_region
          %s413 = sand.u32 %s28, 1
          %s414 = scalar_lea.sflag [#allocation6], %s413
          %s415 = sand.u32 %s64, 1
          %s416 = smul.addr %s415, 24
          %s417 = scalar_lea.vmem [#allocation5], %s416
          %s419 = ssub.s32 384, 384
          %420 = vsyncadd %s414, %s419
          %s421 = smul.addr %s28, 6
          %s422 = smul.addr %s421, 64
          %s423 = scalar_lea.hbm %s1, %s422
          %s425 = sshll.u32 %s417, 4
          %s426 = int_to_ptr.vmem [resolvable:$true] %s425
          %428 = dma.hbm_to_vmem [thread:$0]  %s423, 384, %s426, %s414
        $region60: #{tpu_custom_call.1} parent=51 // pred_fallthru
          _
      $region52: #{tpu_custom_call.1} parent=5 // pred_fallthru
        _
      %p429 = scmp.le.s32.totalorder 1, %s28
      %p430 = scmp.lt.s32.totalorder %s28, 3
      %p431 = pnand %p429, %p430
      %p432 = pneg %p431
      // Predicated region
      $region61: #{tpu_custom_call.1} parent=5 // pred_check
        _
      $region62: #{tpu_custom_call.1} parent=5 // pred_check_branch
        %434 = sbr.rel (%p431) target = $region64
      $region63: #{tpu_custom_call.1} parent=5 // pred_region
        %s435 = ssub.s32 %s28, 1
        %s436 = sand.u32 %s41, 1
        %s437 = scalar_lea.sflag [#allocation3], %s436
        %s438 = sand.u32 %s41, 1
        %s439 = smul.addr %s438, 24
        %s440 = scalar_lea.vmem [#allocation2], %s439
        // Predicated region
        $region65: #{tpu_custom_call.1} parent=63 // pred_check
          %p441 = pneg %p54
        $region66: #{tpu_custom_call.1} parent=63 // pred_check_branch
          %443 = sbr.rel (%p441) target = $region68
        $region67: #{tpu_custom_call.1} parent=63 // pred_region
          %444 = dma.done %s437, 384
        $region68: #{tpu_custom_call.1} parent=63 // pred_fallthru
          _
        %s445 = sand.u32 %s33, 1
        %s446 = scalar_lea.sflag [#allocation6], %s445
        %s447 = sand.u32 %s67, 1
        %s448 = smul.addr %s447, 24
        %s449 = scalar_lea.vmem [#allocation5], %s448
        // Predicated region
        $region69: #{tpu_custom_call.1} parent=63 // pred_check
          %p450 = pneg %p80
        $region70: #{tpu_custom_call.1} parent=63 // pred_check_branch
          %452 = sbr.rel (%p450) target = $region72
        $region71: #{tpu_custom_call.1} parent=63 // pred_region
          %453 = dma.done %s446, 384
        $region72: #{tpu_custom_call.1} parent=63 // pred_fallthru
          _
        // Predicated region
        $region73: #{tpu_custom_call.1} parent=63 // pred_check
          %p454 = pneg %p101
        $region74: #{tpu_custom_call.1} parent=63 // pred_check_branch
          %456 = sbr.rel (%p454) target = $region76
        $region75: #{tpu_custom_call.1} parent=63 // pred_region
          %457 = dma.done [#allocation6], 24576
        $region76: #{tpu_custom_call.1} parent=63 // pred_fallthru
          _
        // Predicated region
        $region77: #{tpu_custom_call.1} parent=63 // pred_check
          %p458 = pneg %p122
        $region78: #{tpu_custom_call.1} parent=63 // pred_check_branch
          %460 = sbr.rel (%p458) target = $region80
        $region79: #{tpu_custom_call.1} parent=63 // pred_region
          %461 = dma.done [#allocation9], 24576
        $region80: #{tpu_custom_call.1} parent=63 // pred_fallthru
          _
        // Predicated region
        $region81: #{tpu_custom_call.1} parent=63 // pred_check
          %p462 = pneg %p164
        $region82: #{tpu_custom_call.1} parent=63 // pred_check_branch
          %464 = sbr.rel (%p462) target = $region84
        $region83: #{tpu_custom_call.1} parent=63 // pred_region
          %465 = dma.done [#allocation9], 8192
        $region84: #{tpu_custom_call.1} parent=63 // pred_fallthru
          _
        // Predicated region
        $region85: #{tpu_custom_call.1} parent=63 // pred_check
          %p466 = pneg %p206
        $region86: #{tpu_custom_call.1} parent=63 // pred_check_branch
          %468 = sbr.rel (%p466) target = $region88
        $region87: #{tpu_custom_call.1} parent=63 // pred_region
          %469 = dma.done [#allocation12], 2048
        $region88: #{tpu_custom_call.1} parent=63 // pred_fallthru
          _
        // Predicated region
        $region89: #{tpu_custom_call.1} parent=63 // pred_check
          %p470 = pneg %p248
        $region90: #{tpu_custom_call.1} parent=63 // pred_check_branch
          %472 = sbr.rel (%p470) target = $region92
        $region91: #{tpu_custom_call.1} parent=63 // pred_region
          %473 = dma.done [#allocation12], 1024
        $region92: #{tpu_custom_call.1} parent=63 // pred_fallthru
          _
        %s474 = sand.u32 %s41, 1
        %s475 = scalar_lea.sflag [#allocation3], %s474
        %s476 = sand.u32 %s41, 1
        %s477 = smul.addr %s476, 24
        %s478 = scalar_lea.vmem [#allocation2], %s477
        %p479 = pneg %p54
        %p480 = pneg %p51
        %s481 = sand.u32 %s33, 1
        %s482 = scalar_lea.sflag [#allocation6], %s481
        %s483 = sand.u32 %s67, 1
        %s484 = smul.addr %s483, 24
        %s485 = scalar_lea.vmem [#allocation5], %s484
        %p486 = pneg %p80
        %p487 = pneg %p77
        %p488 = pneg %p101
        %p489 = pneg %p98
        %p490 = pneg %p122
        %p491 = pneg %p119
        %p492 = pneg %p143
        %p493 = pneg %p140
        %p494 = pneg %p164
        %p495 = pneg %p161
        %p496 = pneg %p185
        %p497 = pneg %p182
        %p498 = pneg %p206
        %p499 = pneg %p203
        %p500 = pneg %p227
        %p501 = pneg %p224
        %p502 = pneg %p248
        %p503 = pneg %p245
        %p504 = pneg %p269
        %p505 = pneg %p266
        %p506 = pneg %p295
        %p507 = pneg %p292
        %s508 = sand.u32 %s282, 1
        %s509 = scalar_lea.sflag [#allocation4], %s508
        %s510 = sand.u32 %s282, 1
        %s511 = smul.addr %s510, 8
        %s512 = scalar_lea.vmem [#allocation14], %s511
        %v514 = vld [vmem:[%s440] sm:$0xff]
        %v515 = vld [vmem:[%s440 + $0x8] sm:$0xff]
        %v516 = vld [vmem:[%s440 + $0x10] sm:$0xff]
        %v517 = vld [vmem:[#allocation7] sm:$0xff]
        %v518 = vld [vmem:[#allocation7 + $0x8] sm:$0xff]
        %v519 = vld [vmem:[#allocation7 + $0x10] sm:$0xff]
        %v520 = vld [vmem:[#allocation7 + $0x18] sm:$0xff]
        %v521 = vld [vmem:[#allocation7 + $0x20] sm:$0xff]
        %v522 = vld [vmem:[#allocation7 + $0x28] sm:$0xff]
        %v523 = vld [vmem:[#allocation7 + $0x30] sm:$0xff]
        %v524 = vld [vmem:[#allocation7 + $0x38] sm:$0xff]
        %v525 = vld [vmem:[#allocation7 + $0x40] sm:$0xff]
        %v526 = vld [vmem:[#allocation7 + $0x48] sm:$0xff]
        %v527 = vld [vmem:[#allocation7 + $0x50] sm:$0xff]
        %v528 = vld [vmem:[#allocation7 + $0x58] sm:$0xff]
        %v529 = vld [vmem:[#allocation7 + $0x60] sm:$0xff]
        %v530 = vld [vmem:[#allocation7 + $0x68] sm:$0xff]
        %v531 = vld [vmem:[#allocation7 + $0x70] sm:$0xff]
        %v532 = vld [vmem:[#allocation7 + $0x78] sm:$0xff]
        %v533 = vld [vmem:[#allocation7 + $0x80] sm:$0xff]
        %v534 = vld [vmem:[#allocation7 + $0x88] sm:$0xff]
        %v535 = vld [vmem:[#allocation7 + $0x90] sm:$0xff]
        %v536 = vld [vmem:[#allocation7 + $0x98] sm:$0xff]
        %v537 = vld [vmem:[#allocation7 + $0xa0] sm:$0xff]
        %v538 = vld [vmem:[#allocation7 + $0xa8] sm:$0xff]
        %v539 = vld [vmem:[#allocation7 + $0xb0] sm:$0xff]
        %v540 = vld [vmem:[#allocation7 + $0xb8] sm:$0xff]
        %v541 = vld [vmem:[#allocation7 + $0xc0] sm:$0xff]
        %v542 = vld [vmem:[#allocation7 + $0xc8] sm:$0xff]
        %v543 = vld [vmem:[#allocation7 + $0xd0] sm:$0xff]
        %v544 = vld [vmem:[#allocation7 + $0xd8] sm:$0xff]
        %v545 = vld [vmem:[#allocation7 + $0xe0] sm:$0xff]
        %v546 = vld [vmem:[#allocation7 + $0xe8] sm:$0xff]
        %v547 = vld [vmem:[#allocation7 + $0xf0] sm:$0xff]
        %v548 = vld [vmem:[#allocation7 + $0xf8] sm:$0xff]
        %v549 = vld [vmem:[#allocation7 + $0x100] sm:$0xff]
        %v550 = vld [vmem:[#allocation7 + $0x108] sm:$0xff]
        %v551 = vld [vmem:[#allocation7 + $0x110] sm:$0xff]
        %v552 = vld [vmem:[#allocation7 + $0x118] sm:$0xff]
        %v553 = vld [vmem:[#allocation7 + $0x120] sm:$0xff]
        %v554 = vld [vmem:[#allocation7 + $0x128] sm:$0xff]
        %v555 = vld [vmem:[#allocation7 + $0x130] sm:$0xff]
        %v556 = vld [vmem:[#allocation7 + $0x138] sm:$0xff]
        %v557 = vld [vmem:[#allocation7 + $0x140] sm:$0xff]
        %v558 = vld [vmem:[#allocation7 + $0x148] sm:$0xff]
        %v559 = vld [vmem:[#allocation7 + $0x150] sm:$0xff]
        %v560 = vld [vmem:[#allocation7 + $0x158] sm:$0xff]
        %v561 = vld [vmem:[#allocation7 + $0x160] sm:$0xff]
        %v562 = vld [vmem:[#allocation7 + $0x168] sm:$0xff]
        %v563 = vld [vmem:[#allocation7 + $0x170] sm:$0xff]
        %v564 = vld [vmem:[#allocation7 + $0x178] sm:$0xff]
        %v565 = vld [vmem:[#allocation7 + $0x180] sm:$0xff]
        %v566 = vld [vmem:[#allocation7 + $0x188] sm:$0xff]
        %v567 = vld [vmem:[#allocation7 + $0x190] sm:$0xff]
        %v568 = vld [vmem:[#allocation7 + $0x198] sm:$0xff]
        %v569 = vld [vmem:[#allocation7 + $0x1a0] sm:$0xff]
        %v570 = vld [vmem:[#allocation7 + $0x1a8] sm:$0xff]
        %v571 = vld [vmem:[#allocation7 + $0x1b0] sm:$0xff]
        %v572 = vld [vmem:[#allocation7 + $0x1b8] sm:$0xff]
        %v573 = vld [vmem:[#allocation7 + $0x1c0] sm:$0xff]
        %v574 = vld [vmem:[#allocation7 + $0x1c8] sm:$0xff]
        %v575 = vld [vmem:[#allocation7 + $0x1d0] sm:$0xff]
        %v576 = vld [vmem:[#allocation7 + $0x1d8] sm:$0xff]
        %v577 = vld [vmem:[#allocation7 + $0x1e0] sm:$0xff]
        %v578 = vld [vmem:[#allocation7 + $0x1e8] sm:$0xff]
        %v579 = vld [vmem:[#allocation7 + $0x1f0] sm:$0xff]
        %v580 = vld [vmem:[#allocation7 + $0x1f8] sm:$0xff]
        %v581 = vld [vmem:[#allocation7 + $0x200] sm:$0xff]
        %v582 = vld [vmem:[#allocation7 + $0x208] sm:$0xff]
        %v583 = vld [vmem:[#allocation7 + $0x210] sm:$0xff]
        %v584 = vld [vmem:[#allocation7 + $0x218] sm:$0xff]
        %v585 = vld [vmem:[#allocation7 + $0x220] sm:$0xff]
        %v586 = vld [vmem:[#allocation7 + $0x228] sm:$0xff]
        %v587 = vld [vmem:[#allocation7 + $0x230] sm:$0xff]
        %v588 = vld [vmem:[#allocation7 + $0x238] sm:$0xff]
        %v589 = vld [vmem:[#allocation7 + $0x240] sm:$0xff]
        %v590 = vld [vmem:[#allocation7 + $0x248] sm:$0xff]
        %v591 = vld [vmem:[#allocation7 + $0x250] sm:$0xff]
        %v592 = vld [vmem:[#allocation7 + $0x258] sm:$0xff]
        %v593 = vld [vmem:[#allocation7 + $0x260] sm:$0xff]
        %v594 = vld [vmem:[#allocation7 + $0x268] sm:$0xff]
        %v595 = vld [vmem:[#allocation7 + $0x270] sm:$0xff]
        %v596 = vld [vmem:[#allocation7 + $0x278] sm:$0xff]
        %v597 = vld [vmem:[#allocation7 + $0x280] sm:$0xff]
        %v598 = vld [vmem:[#allocation7 + $0x288] sm:$0xff]
        %v599 = vld [vmem:[#allocation7 + $0x290] sm:$0xff]
        %v600 = vld [vmem:[#allocation7 + $0x298] sm:$0xff]
        %v601 = vld [vmem:[#allocation7 + $0x2a0] sm:$0xff]
        %v602 = vld [vmem:[#allocation7 + $0x2a8] sm:$0xff]
        %v603 = vld [vmem:[#allocation7 + $0x2b0] sm:$0xff]
        %v604 = vld [vmem:[#allocation7 + $0x2b8] sm:$0xff]
        %v605 = vld [vmem:[#allocation7 + $0x2c0] sm:$0xff]
        %v606 = vld [vmem:[#allocation7 + $0x2c8] sm:$0xff]
        %v607 = vld [vmem:[#allocation7 + $0x2d0] sm:$0xff]
        %v608 = vld [vmem:[#allocation7 + $0x2d8] sm:$0xff]
        %v609 = vld [vmem:[#allocation7 + $0x2e0] sm:$0xff]
        %v610 = vld [vmem:[#allocation7 + $0x2e8] sm:$0xff]
        %v611 = vld [vmem:[#allocation7 + $0x2f0] sm:$0xff]
        %v612 = vld [vmem:[#allocation7 + $0x2f8] sm:$0xff]
        %v613 = vld [vmem:[#allocation7 + $0x300] sm:$0xff]
        %v614 = vld [vmem:[#allocation7 + $0x308] sm:$0xff]
        %v615 = vld [vmem:[#allocation7 + $0x310] sm:$0xff]
        %v616 = vld [vmem:[#allocation7 + $0x318] sm:$0xff]
        %v617 = vld [vmem:[#allocation7 + $0x320] sm:$0xff]
        %v618 = vld [vmem:[#allocation7 + $0x328] sm:$0xff]
        %v619 = vld [vmem:[#allocation7 + $0x330] sm:$0xff]
        %v620 = vld [vmem:[#allocation7 + $0x338] sm:$0xff]
        %v621 = vld [vmem:[#allocation7 + $0x340] sm:$0xff]
        %v622 = vld [vmem:[#allocation7 + $0x348] sm:$0xff]
        %v623 = vld [vmem:[#allocation7 + $0x350] sm:$0xff]
        %v624 = vld [vmem:[#allocation7 + $0x358] sm:$0xff]
        %v625 = vld [vmem:[#allocation7 + $0x360] sm:$0xff]
        %v626 = vld [vmem:[#allocation7 + $0x368] sm:$0xff]
        %v627 = vld [vmem:[#allocation7 + $0x370] sm:$0xff]
        %v628 = vld [vmem:[#allocation7 + $0x378] sm:$0xff]
        %v629 = vld [vmem:[#allocation7 + $0x380] sm:$0xff]
        %v630 = vld [vmem:[#allocation7 + $0x388] sm:$0xff]
        %v631 = vld [vmem:[#allocation7 + $0x390] sm:$0xff]
        %v632 = vld [vmem:[#allocation7 + $0x398] sm:$0xff]
        %v633 = vld [vmem:[#allocation7 + $0x3a0] sm:$0xff]
        %v634 = vld [vmem:[#allocation7 + $0x3a8] sm:$0xff]
        %v635 = vld [vmem:[#allocation7 + $0x3b0] sm:$0xff]
        %v636 = vld [vmem:[#allocation7 + $0x3b8] sm:$0xff]
        %v637 = vld [vmem:[#allocation7 + $0x3c0] sm:$0xff]
        %v638 = vld [vmem:[#allocation7 + $0x3c8] sm:$0xff]
        %v639 = vld [vmem:[#allocation7 + $0x3d0] sm:$0xff]
        %v640 = vld [vmem:[#allocation7 + $0x3d8] sm:$0xff]
        %v641 = vld [vmem:[#allocation7 + $0x3e0] sm:$0xff]
        %v642 = vld [vmem:[#allocation7 + $0x3e8] sm:$0xff]
        %v643 = vld [vmem:[#allocation7 + $0x3f0] sm:$0xff]
        %v644 = vld [vmem:[#allocation7 + $0x3f8] sm:$0xff]
        %v645 = vld [vmem:[#allocation7 + $0x400] sm:$0xff]
        %v646 = vld [vmem:[#allocation7 + $0x408] sm:$0xff]
        %v647 = vld [vmem:[#allocation7 + $0x410] sm:$0xff]
        %v648 = vld [vmem:[#allocation7 + $0x418] sm:$0xff]
        %v649 = vld [vmem:[#allocation7 + $0x420] sm:$0xff]
        %v650 = vld [vmem:[#allocation7 + $0x428] sm:$0xff]
        %v651 = vld [vmem:[#allocation7 + $0x430] sm:$0xff]
        %v652 = vld [vmem:[#allocation7 + $0x438] sm:$0xff]
        %v653 = vld [vmem:[#allocation7 + $0x440] sm:$0xff]
        %v654 = vld [vmem:[#allocation7 + $0x448] sm:$0xff]
        %v655 = vld [vmem:[#allocation7 + $0x450] sm:$0xff]
        %v656 = vld [vmem:[#allocation7 + $0x458] sm:$0xff]
        %v657 = vld [vmem:[#allocation7 + $0x460] sm:$0xff]
        %v658 = vld [vmem:[#allocation7 + $0x468] sm:$0xff]
        %v659 = vld [vmem:[#allocation7 + $0x470] sm:$0xff]
        %v660 = vld [vmem:[#allocation7 + $0x478] sm:$0xff]
        %v661 = vld [vmem:[#allocation7 + $0x480] sm:$0xff]
        %v662 = vld [vmem:[#allocation7 + $0x488] sm:$0xff]
        %v663 = vld [vmem:[#allocation7 + $0x490] sm:$0xff]
        %v664 = vld [vmem:[#allocation7 + $0x498] sm:$0xff]
        %v665 = vld [vmem:[#allocation7 + $0x4a0] sm:$0xff]
        %v666 = vld [vmem:[#allocation7 + $0x4a8] sm:$0xff]
        %v667 = vld [vmem:[#allocation7 + $0x4b0] sm:$0xff]
        %v668 = vld [vmem:[#allocation7 + $0x4b8] sm:$0xff]
        %v669 = vld [vmem:[#allocation7 + $0x4c0] sm:$0xff]
        %v670 = vld [vmem:[#allocation7 + $0x4c8] sm:$0xff]
        %v671 = vld [vmem:[#allocation7 + $0x4d0] sm:$0xff]
        %v672 = vld [vmem:[#allocation7 + $0x4d8] sm:$0xff]
        %v673 = vld [vmem:[#allocation7 + $0x4e0] sm:$0xff]
        %v674 = vld [vmem:[#allocation7 + $0x4e8] sm:$0xff]
        %v675 = vld [vmem:[#allocation7 + $0x4f0] sm:$0xff]
        %v676 = vld [vmem:[#allocation7 + $0x4f8] sm:$0xff]
        %v677 = vld [vmem:[#allocation7 + $0x500] sm:$0xff]
        %v678 = vld [vmem:[#allocation7 + $0x508] sm:$0xff]
        %v679 = vld [vmem:[#allocation7 + $0x510] sm:$0xff]
        %v680 = vld [vmem:[#allocation7 + $0x518] sm:$0xff]
        %v681 = vld [vmem:[#allocation7 + $0x520] sm:$0xff]
        %v682 = vld [vmem:[#allocation7 + $0x528] sm:$0xff]
        %v683 = vld [vmem:[#allocation7 + $0x530] sm:$0xff]
        %v684 = vld [vmem:[#allocation7 + $0x538] sm:$0xff]
        %v685 = vld [vmem:[#allocation7 + $0x540] sm:$0xff]
        %v686 = vld [vmem:[#allocation7 + $0x548] sm:$0xff]
        %v687 = vld [vmem:[#allocation7 + $0x550] sm:$0xff]
        %v688 = vld [vmem:[#allocation7 + $0x558] sm:$0xff]
        %v689 = vld [vmem:[#allocation7 + $0x560] sm:$0xff]
        %v690 = vld [vmem:[#allocation7 + $0x568] sm:$0xff]
        %v691 = vld [vmem:[#allocation7 + $0x570] sm:$0xff]
        %v692 = vld [vmem:[#allocation7 + $0x578] sm:$0xff]
        %v693 = vld [vmem:[#allocation7 + $0x580] sm:$0xff]
        %v694 = vld [vmem:[#allocation7 + $0x588] sm:$0xff]
        %v695 = vld [vmem:[#allocation7 + $0x590] sm:$0xff]
        %v696 = vld [vmem:[#allocation7 + $0x598] sm:$0xff]
        %v697 = vld [vmem:[#allocation7 + $0x5a0] sm:$0xff]
        %v698 = vld [vmem:[#allocation7 + $0x5a8] sm:$0xff]
        %v699 = vld [vmem:[#allocation7 + $0x5b0] sm:$0xff]
        %v700 = vld [vmem:[#allocation7 + $0x5b8] sm:$0xff]
        %v701 = vld [vmem:[#allocation7 + $0x5c0] sm:$0xff]
        %v702 = vld [vmem:[#allocation7 + $0x5c8] sm:$0xff]
        %v703 = vld [vmem:[#allocation7 + $0x5d0] sm:$0xff]
        %v704 = vld [vmem:[#allocation7 + $0x5d8] sm:$0xff]
        %v705 = vld [vmem:[#allocation7 + $0x5e0] sm:$0xff]
        %v706 = vld [vmem:[#allocation7 + $0x5e8] sm:$0xff]
        %v707 = vld [vmem:[#allocation7 + $0x5f0] sm:$0xff]
        %v708 = vld [vmem:[#allocation7 + $0x5f8] sm:$0xff]
        %v709 = vld [vmem:[%s449] sm:$0xff]
        %v710 = vld [vmem:[%s449 + $0x8] sm:$0xff]
        %v711 = vld [vmem:[%s449 + $0x10] sm:$0xff]
        %v712 = vld [vmem:[#allocation8] sm:$0xff]
        %v713 = vld [vmem:[#allocation8 + $0x8] sm:$0xff]
        %v714 = vld [vmem:[#allocation8 + $0x10] sm:$0xff]
        %v715 = vld [vmem:[#allocation8 + $0x18] sm:$0xff]
        %v716 = vld [vmem:[#allocation8 + $0x20] sm:$0xff]
        %v717 = vld [vmem:[#allocation8 + $0x28] sm:$0xff]
        %v718 = vld [vmem:[#allocation8 + $0x30] sm:$0xff]
        %v719 = vld [vmem:[#allocation8 + $0x38] sm:$0xff]
        %v720 = vld [vmem:[#allocation8 + $0x40] sm:$0xff]
        %v721 = vld [vmem:[#allocation8 + $0x48] sm:$0xff]
        %v722 = vld [vmem:[#allocation8 + $0x50] sm:$0xff]
        %v723 = vld [vmem:[#allocation8 + $0x58] sm:$0xff]
        %v724 = vld [vmem:[#allocation8 + $0x60] sm:$0xff]
        %v725 = vld [vmem:[#allocation8 + $0x68] sm:$0xff]
        %v726 = vld [vmem:[#allocation8 + $0x70] sm:$0xff]
        %v727 = vld [vmem:[#allocation8 + $0x78] sm:$0xff]
        %v728 = vld [vmem:[#allocation8 + $0x80] sm:$0xff]
        %v729 = vld [vmem:[#allocation8 + $0x88] sm:$0xff]
        %v730 = vld [vmem:[#allocation8 + $0x90] sm:$0xff]
        %v731 = vld [vmem:[#allocation8 + $0x98] sm:$0xff]
        %v732 = vld [vmem:[#allocation8 + $0xa0] sm:$0xff]
        %v733 = vld [vmem:[#allocation8 + $0xa8] sm:$0xff]
        %v734 = vld [vmem:[#allocation8 + $0xb0] sm:$0xff]
        %v735 = vld [vmem:[#allocation8 + $0xb8] sm:$0xff]
        %v736 = vld [vmem:[#allocation8 + $0xc0] sm:$0xff]
        %v737 = vld [vmem:[#allocation8 + $0xc8] sm:$0xff]
        %v738 = vld [vmem:[#allocation8 + $0xd0] sm:$0xff]
        %v739 = vld [vmem:[#allocation8 + $0xd8] sm:$0xff]
        %v740 = vld [vmem:[#allocation8 + $0xe0] sm:$0xff]
        %v741 = vld [vmem:[#allocation8 + $0xe8] sm:$0xff]
        %v742 = vld [vmem:[#allocation8 + $0xf0] sm:$0xff]
        %v743 = vld [vmem:[#allocation8 + $0xf8] sm:$0xff]
        %v744 = vld [vmem:[#allocation8 + $0x100] sm:$0xff]
        %v745 = vld [vmem:[#allocation8 + $0x108] sm:$0xff]
        %v746 = vld [vmem:[#allocation8 + $0x110] sm:$0xff]
        %v747 = vld [vmem:[#allocation8 + $0x118] sm:$0xff]
        %v748 = vld [vmem:[#allocation8 + $0x120] sm:$0xff]
        %v749 = vld [vmem:[#allocation8 + $0x128] sm:$0xff]
        %v750 = vld [vmem:[#allocation8 + $0x130] sm:$0xff]
        %v751 = vld [vmem:[#allocation8 + $0x138] sm:$0xff]
        %v752 = vld [vmem:[#allocation8 + $0x140] sm:$0xff]
        %v753 = vld [vmem:[#allocation8 + $0x148] sm:$0xff]
        %v754 = vld [vmem:[#allocation8 + $0x150] sm:$0xff]
        %v755 = vld [vmem:[#allocation8 + $0x158] sm:$0xff]
        %v756 = vld [vmem:[#allocation8 + $0x160] sm:$0xff]
        %v757 = vld [vmem:[#allocation8 + $0x168] sm:$0xff]
        %v758 = vld [vmem:[#allocation8 + $0x170] sm:$0xff]
        %v759 = vld [vmem:[#allocation8 + $0x178] sm:$0xff]
        %v760 = vld [vmem:[#allocation8 + $0x180] sm:$0xff]
        %v761 = vld [vmem:[#allocation8 + $0x188] sm:$0xff]
        %v762 = vld [vmem:[#allocation8 + $0x190] sm:$0xff]
        %v763 = vld [vmem:[#allocation8 + $0x198] sm:$0xff]
        %v764 = vld [vmem:[#allocation8 + $0x1a0] sm:$0xff]
        %v765 = vld [vmem:[#allocation8 + $0x1a8] sm:$0xff]
        %v766 = vld [vmem:[#allocation8 + $0x1b0] sm:$0xff]
        %v767 = vld [vmem:[#allocation8 + $0x1b8] sm:$0xff]
        %v768 = vld [vmem:[#allocation8 + $0x1c0] sm:$0xff]
        %v769 = vld [vmem:[#allocation8 + $0x1c8] sm:$0xff]
        %v770 = vld [vmem:[#allocation8 + $0x1d0] sm:$0xff]
        %v771 = vld [vmem:[#allocation8 + $0x1d8] sm:$0xff]
        %v772 = vld [vmem:[#allocation8 + $0x1e0] sm:$0xff]
        %v773 = vld [vmem:[#allocation8 + $0x1e8] sm:$0xff]
        %v774 = vld [vmem:[#allocation8 + $0x1f0] sm:$0xff]
        %v775 = vld [vmem:[#allocation8 + $0x1f8] sm:$0xff]
        %v776 = vld [vmem:[#allocation8 + $0x200] sm:$0xff]
        %v777 = vld [vmem:[#allocation8 + $0x208] sm:$0xff]
        %v778 = vld [vmem:[#allocation8 + $0x210] sm:$0xff]
        %v779 = vld [vmem:[#allocation8 + $0x218] sm:$0xff]
        %v780 = vld [vmem:[#allocation8 + $0x220] sm:$0xff]
        %v781 = vld [vmem:[#allocation8 + $0x228] sm:$0xff]
        %v782 = vld [vmem:[#allocation8 + $0x230] sm:$0xff]
        %v783 = vld [vmem:[#allocation8 + $0x238] sm:$0xff]
        %v784 = vld [vmem:[#allocation8 + $0x240] sm:$0xff]
        %v785 = vld [vmem:[#allocation8 + $0x248] sm:$0xff]
        %v786 = vld [vmem:[#allocation8 + $0x250] sm:$0xff]
        %v787 = vld [vmem:[#allocation8 + $0x258] sm:$0xff]
        %v788 = vld [vmem:[#allocation8 + $0x260] sm:$0xff]
        %v789 = vld [vmem:[#allocation8 + $0x268] sm:$0xff]
        %v790 = vld [vmem:[#allocation8 + $0x270] sm:$0xff]
        %v791 = vld [vmem:[#allocation8 + $0x278] sm:$0xff]
        %v792 = vld [vmem:[#allocation8 + $0x280] sm:$0xff]
        %v793 = vld [vmem:[#allocation8 + $0x288] sm:$0xff]
        %v794 = vld [vmem:[#allocation8 + $0x290] sm:$0xff]
        %v795 = vld [vmem:[#allocation8 + $0x298] sm:$0xff]
        %v796 = vld [vmem:[#allocation8 + $0x2a0] sm:$0xff]
        %v797 = vld [vmem:[#allocation8 + $0x2a8] sm:$0xff]
        %v798 = vld [vmem:[#allocation8 + $0x2b0] sm:$0xff]
        %v799 = vld [vmem:[#allocation8 + $0x2b8] sm:$0xff]
        %v800 = vld [vmem:[#allocation8 + $0x2c0] sm:$0xff]
        %v801 = vld [vmem:[#allocation8 + $0x2c8] sm:$0xff]
        %v802 = vld [vmem:[#allocation8 + $0x2d0] sm:$0xff]
        %v803 = vld [vmem:[#allocation8 + $0x2d8] sm:$0xff]
        %v804 = vld [vmem:[#allocation8 + $0x2e0] sm:$0xff]
        %v805 = vld [vmem:[#allocation8 + $0x2e8] sm:$0xff]
        %v806 = vld [vmem:[#allocation8 + $0x2f0] sm:$0xff]
        %v807 = vld [vmem:[#allocation8 + $0x2f8] sm:$0xff]
        %v808 = vld [vmem:[#allocation8 + $0x300] sm:$0xff]
        %v809 = vld [vmem:[#allocation8 + $0x308] sm:$0xff]
        %v810 = vld [vmem:[#allocation8 + $0x310] sm:$0xff]
        %v811 = vld [vmem:[#allocation8 + $0x318] sm:$0xff]
        %v812 = vld [vmem:[#allocation8 + $0x320] sm:$0xff]
        %v813 = vld [vmem:[#allocation8 + $0x328] sm:$0xff]
        %v814 = vld [vmem:[#allocation8 + $0x330] sm:$0xff]
        %v815 = vld [vmem:[#allocation8 + $0x338] sm:$0xff]
        %v816 = vld [vmem:[#allocation8 + $0x340] sm:$0xff]
        %v817 = vld [vmem:[#allocation8 + $0x348] sm:$0xff]
        %v818 = vld [vmem:[#allocation8 + $0x350] sm:$0xff]
        %v819 = vld [vmem:[#allocation8 + $0x358] sm:$0xff]
        %v820 = vld [vmem:[#allocation8 + $0x360] sm:$0xff]
        %v821 = vld [vmem:[#allocation8 + $0x368] sm:$0xff]
        %v822 = vld [vmem:[#allocation8 + $0x370] sm:$0xff]
        %v823 = vld [vmem:[#allocation8 + $0x378] sm:$0xff]
        %v824 = vld [vmem:[#allocation8 + $0x380] sm:$0xff]
        %v825 = vld [vmem:[#allocation8 + $0x388] sm:$0xff]
        %v826 = vld [vmem:[#allocation8 + $0x390] sm:$0xff]
        %v827 = vld [vmem:[#allocation8 + $0x398] sm:$0xff]
        %v828 = vld [vmem:[#allocation8 + $0x3a0] sm:$0xff]
        %v829 = vld [vmem:[#allocation8 + $0x3a8] sm:$0xff]
        %v830 = vld [vmem:[#allocation8 + $0x3b0] sm:$0xff]
        %v831 = vld [vmem:[#allocation8 + $0x3b8] sm:$0xff]
        %v832 = vld [vmem:[#allocation8 + $0x3c0] sm:$0xff]
        %v833 = vld [vmem:[#allocation8 + $0x3c8] sm:$0xff]
        %v834 = vld [vmem:[#allocation8 + $0x3d0] sm:$0xff]
        %v835 = vld [vmem:[#allocation8 + $0x3d8] sm:$0xff]
        %v836 = vld [vmem:[#allocation8 + $0x3e0] sm:$0xff]
        %v837 = vld [vmem:[#allocation8 + $0x3e8] sm:$0xff]
        %v838 = vld [vmem:[#allocation8 + $0x3f0] sm:$0xff]
        %v839 = vld [vmem:[#allocation8 + $0x3f8] sm:$0xff]
        %v840 = vld [vmem:[#allocation8 + $0x400] sm:$0xff]
        %v841 = vld [vmem:[#allocation8 + $0x408] sm:$0xff]
        %v842 = vld [vmem:[#allocation8 + $0x410] sm:$0xff]
        %v843 = vld [vmem:[#allocation8 + $0x418] sm:$0xff]
        %v844 = vld [vmem:[#allocation8 + $0x420] sm:$0xff]
        %v845 = vld [vmem:[#allocation8 + $0x428] sm:$0xff]
        %v846 = vld [vmem:[#allocation8 + $0x430] sm:$0xff]
        %v847 = vld [vmem:[#allocation8 + $0x438] sm:$0xff]
        %v848 = vld [vmem:[#allocation8 + $0x440] sm:$0xff]
        %v849 = vld [vmem:[#allocation8 + $0x448] sm:$0xff]
        %v850 = vld [vmem:[#allocation8 + $0x450] sm:$0xff]
        %v851 = vld [vmem:[#allocation8 + $0x458] sm:$0xff]
        %v852 = vld [vmem:[#allocation8 + $0x460] sm:$0xff]
        %v853 = vld [vmem:[#allocation8 + $0x468] sm:$0xff]
        %v854 = vld [vmem:[#allocation8 + $0x470] sm:$0xff]
        %v855 = vld [vmem:[#allocation8 + $0x478] sm:$0xff]
        %v856 = vld [vmem:[#allocation8 + $0x480] sm:$0xff]
        %v857 = vld [vmem:[#allocation8 + $0x488] sm:$0xff]
        %v858 = vld [vmem:[#allocation8 + $0x490] sm:$0xff]
        %v859 = vld [vmem:[#allocation8 + $0x498] sm:$0xff]
        %v860 = vld [vmem:[#allocation8 + $0x4a0] sm:$0xff]
        %v861 = vld [vmem:[#allocation8 + $0x4a8] sm:$0xff]
        %v862 = vld [vmem:[#allocation8 + $0x4b0] sm:$0xff]
        %v863 = vld [vmem:[#allocation8 + $0x4b8] sm:$0xff]
        %v864 = vld [vmem:[#allocation8 + $0x4c0] sm:$0xff]
        %v865 = vld [vmem:[#allocation8 + $0x4c8] sm:$0xff]
        %v866 = vld [vmem:[#allocation8 + $0x4d0] sm:$0xff]
        %v867 = vld [vmem:[#allocation8 + $0x4d8] sm:$0xff]
        %v868 = vld [vmem:[#allocation8 + $0x4e0] sm:$0xff]
        %v869 = vld [vmem:[#allocation8 + $0x4e8] sm:$0xff]
        %v870 = vld [vmem:[#allocation8 + $0x4f0] sm:$0xff]
        %v871 = vld [vmem:[#allocation8 + $0x4f8] sm:$0xff]
        %v872 = vld [vmem:[#allocation8 + $0x500] sm:$0xff]
        %v873 = vld [vmem:[#allocation8 + $0x508] sm:$0xff]
        %v874 = vld [vmem:[#allocation8 + $0x510] sm:$0xff]
        %v875 = vld [vmem:[#allocation8 + $0x518] sm:$0xff]
        %v876 = vld [vmem:[#allocation8 + $0x520] sm:$0xff]
        %v877 = vld [vmem:[#allocation8 + $0x528] sm:$0xff]
        %v878 = vld [vmem:[#allocation8 + $0x530] sm:$0xff]
        %v879 = vld [vmem:[#allocation8 + $0x538] sm:$0xff]
        %v880 = vld [vmem:[#allocation8 + $0x540] sm:$0xff]
        %v881 = vld [vmem:[#allocation8 + $0x548] sm:$0xff]
        %v882 = vld [vmem:[#allocation8 + $0x550] sm:$0xff]
        %v883 = vld [vmem:[#allocation8 + $0x558] sm:$0xff]
        %v884 = vld [vmem:[#allocation8 + $0x560] sm:$0xff]
        %v885 = vld [vmem:[#allocation8 + $0x568] sm:$0xff]
        %v886 = vld [vmem:[#allocation8 + $0x570] sm:$0xff]
        %v887 = vld [vmem:[#allocation8 + $0x578] sm:$0xff]
        %v888 = vld [vmem:[#allocation8 + $0x580] sm:$0xff]
        %v889 = vld [vmem:[#allocation8 + $0x588] sm:$0xff]
        %v890 = vld [vmem:[#allocation8 + $0x590] sm:$0xff]
        %v891 = vld [vmem:[#allocation8 + $0x598] sm:$0xff]
        %v892 = vld [vmem:[#allocation8 + $0x5a0] sm:$0xff]
        %v893 = vld [vmem:[#allocation8 + $0x5a8] sm:$0xff]
        %v894 = vld [vmem:[#allocation8 + $0x5b0] sm:$0xff]
        %v895 = vld [vmem:[#allocation8 + $0x5b8] sm:$0xff]
        %v896 = vld [vmem:[#allocation8 + $0x5c0] sm:$0xff]
        %v897 = vld [vmem:[#allocation8 + $0x5c8] sm:$0xff]
        %v898 = vld [vmem:[#allocation8 + $0x5d0] sm:$0xff]
        %v899 = vld [vmem:[#allocation8 + $0x5d8] sm:$0xff]
        %v900 = vld [vmem:[#allocation8 + $0x5e0] sm:$0xff]
        %v901 = vld [vmem:[#allocation8 + $0x5e8] sm:$0xff]
        %v902 = vld [vmem:[#allocation8 + $0x5f0] sm:$0xff]
        %v903 = vld [vmem:[#allocation8 + $0x5f8] sm:$0xff]
        %v907 = vunpack.c.l.b16 %v709
        %v908 = vunpack.c.h.b16 %v709
        %v909 = vunpack.c.l.b16 %v710
        %v910 = vunpack.c.h.b16 %v710
        %v911 = vunpack.c.l.b16 %v711
        %v912 = vunpack.c.h.b16 %v711
        %v913 = vpack.c.b16 %v907, %v907
        %v914 = vpack.c.b16 %v908, %v908
        %v915 = vpack.c.b16 %v909, %v909
        %v916 = vpack.c.b16 %v910, %v910
        %v917 = vpack.c.b16 %v911, %v911
        %v918 = vpack.c.b16 %v912, %v912
        %v1117 = vunpack.c.l.b16 %v712
        %v1118 = vunpack.c.h.b16 %v712
        %v1119 = vunpack.c.l.b16 %v713
        %v1120 = vunpack.c.h.b16 %v713
        %v1121 = vunpack.c.l.b16 %v714
        %v1122 = vunpack.c.h.b16 %v714
        %v1123 = vunpack.c.l.b16 %v715
        %v1124 = vunpack.c.h.b16 %v715
        %v1125 = vunpack.c.l.b16 %v716
        %v1126 = vunpack.c.h.b16 %v716
        %v1127 = vunpack.c.l.b16 %v717
        %v1128 = vunpack.c.h.b16 %v717
        %v1129 = vunpack.c.l.b16 %v718
        %v1130 = vunpack.c.h.b16 %v718
        %v1131 = vunpack.c.l.b16 %v719
        %v1132 = vunpack.c.h.b16 %v719
        %v1133 = vunpack.c.l.b16 %v720
        %v1134 = vunpack.c.h.b16 %v720
        %v1135 = vunpack.c.l.b16 %v721
        %v1136 = vunpack.c.h.b16 %v721
        %v1137 = vunpack.c.l.b16 %v722
        %v1138 = vunpack.c.h.b16 %v722
        %v1139 = vunpack.c.l.b16 %v723
        %v1140 = vunpack.c.h.b16 %v723
        %v1141 = vunpack.c.l.b16 %v724
        %v1142 = vunpack.c.h.b16 %v724
        %v1143 = vunpack.c.l.b16 %v725
        %v1144 = vunpack.c.h.b16 %v725
        %v1145 = vunpack.c.l.b16 %v726
        %v1146 = vunpack.c.h.b16 %v726
        %v1147 = vunpack.c.l.b16 %v727
        %v1148 = vunpack.c.h.b16 %v727
        %v1149 = vunpack.c.l.b16 %v728
        %v1150 = vunpack.c.h.b16 %v728
        %v1151 = vunpack.c.l.b16 %v729
        %v1152 = vunpack.c.h.b16 %v729
        %v1153 = vunpack.c.l.b16 %v730
        %v1154 = vunpack.c.h.b16 %v730
        %v1155 = vunpack.c.l.b16 %v731
        %v1156 = vunpack.c.h.b16 %v731
        %v1157 = vunpack.c.l.b16 %v732
        %v1158 = vunpack.c.h.b16 %v732
        %v1159 = vunpack.c.l.b16 %v733
        %v1160 = vunpack.c.h.b16 %v733
        %v1161 = vunpack.c.l.b16 %v734
        %v1162 = vunpack.c.h.b16 %v734
        %v1163 = vunpack.c.l.b16 %v735
        %v1164 = vunpack.c.h.b16 %v735
        %v1165 = vunpack.c.l.b16 %v736
        %v1166 = vunpack.c.h.b16 %v736
        %v1167 = vunpack.c.l.b16 %v737
        %v1168 = vunpack.c.h.b16 %v737
        %v1169 = vunpack.c.l.b16 %v738
        %v1170 = vunpack.c.h.b16 %v738
        %v1171 = vunpack.c.l.b16 %v739
        %v1172 = vunpack.c.h.b16 %v739
        %v1173 = vunpack.c.l.b16 %v740
        %v1174 = vunpack.c.h.b16 %v740
        %v1175 = vunpack.c.l.b16 %v741
        %v1176 = vunpack.c.h.b16 %v741
        %v1177 = vunpack.c.l.b16 %v742
        %v1178 = vunpack.c.h.b16 %v742
        %v1179 = vunpack.c.l.b16 %v743
        %v1180 = vunpack.c.h.b16 %v743
        %v1181 = vunpack.c.l.b16 %v744
        %v1182 = vunpack.c.h.b16 %v744
        %v1183 = vunpack.c.l.b16 %v745
        %v1184 = vunpack.c.h.b16 %v745
        %v1185 = vunpack.c.l.b16 %v746
        %v1186 = vunpack.c.h.b16 %v746
        %v1187 = vunpack.c.l.b16 %v747
        %v1188 = vunpack.c.h.b16 %v747
        %v1189 = vunpack.c.l.b16 %v748
        %v1190 = vunpack.c.h.b16 %v748
        %v1191 = vunpack.c.l.b16 %v749
        %v1192 = vunpack.c.h.b16 %v749
        %v1193 = vunpack.c.l.b16 %v750
        %v1194 = vunpack.c.h.b16 %v750
        %v1195 = vunpack.c.l.b16 %v751
        %v1196 = vunpack.c.h.b16 %v751
        %v1197 = vunpack.c.l.b16 %v752
        %v1198 = vunpack.c.h.b16 %v752
        %v1199 = vunpack.c.l.b16 %v753
        %v1200 = vunpack.c.h.b16 %v753
        %v1201 = vunpack.c.l.b16 %v754
        %v1202 = vunpack.c.h.b16 %v754
        %v1203 = vunpack.c.l.b16 %v755
        %v1204 = vunpack.c.h.b16 %v755
        %v1205 = vunpack.c.l.b16 %v756
        %v1206 = vunpack.c.h.b16 %v756
        %v1207 = vunpack.c.l.b16 %v757
        %v1208 = vunpack.c.h.b16 %v757
        %v1209 = vunpack.c.l.b16 %v758
        %v1210 = vunpack.c.h.b16 %v758
        %v1211 = vunpack.c.l.b16 %v759
        %v1212 = vunpack.c.h.b16 %v759
        %v1213 = vunpack.c.l.b16 %v760
        %v1214 = vunpack.c.h.b16 %v760
        %v1215 = vunpack.c.l.b16 %v761
        %v1216 = vunpack.c.h.b16 %v761
        %v1217 = vunpack.c.l.b16 %v762
        %v1218 = vunpack.c.h.b16 %v762
        %v1219 = vunpack.c.l.b16 %v763
        %v1220 = vunpack.c.h.b16 %v763
        %v1221 = vunpack.c.l.b16 %v764
        %v1222 = vunpack.c.h.b16 %v764
        %v1223 = vunpack.c.l.b16 %v765
        %v1224 = vunpack.c.h.b16 %v765
        %v1225 = vunpack.c.l.b16 %v766
        %v1226 = vunpack.c.h.b16 %v766
        %v1227 = vunpack.c.l.b16 %v767
        %v1228 = vunpack.c.h.b16 %v767
        %v1229 = vunpack.c.l.b16 %v768
        %v1230 = vunpack.c.h.b16 %v768
        %v1231 = vunpack.c.l.b16 %v769
        %v1232 = vunpack.c.h.b16 %v769
        %v1233 = vunpack.c.l.b16 %v770
        %v1234 = vunpack.c.h.b16 %v770
        %v1235 = vunpack.c.l.b16 %v771
        %v1236 = vunpack.c.h.b16 %v771
        %v1237 = vunpack.c.l.b16 %v772
        %v1238 = vunpack.c.h.b16 %v772
        %v1239 = vunpack.c.l.b16 %v773
        %v1240 = vunpack.c.h.b16 %v773
        %v1241 = vunpack.c.l.b16 %v774
        %v1242 = vunpack.c.h.b16 %v774
        %v1243 = vunpack.c.l.b16 %v775
        %v1244 = vunpack.c.h.b16 %v775
        %v1245 = vunpack.c.l.b16 %v776
        %v1246 = vunpack.c.h.b16 %v776
        %v1247 = vunpack.c.l.b16 %v777
        %v1248 = vunpack.c.h.b16 %v777
        %v1249 = vunpack.c.l.b16 %v778
        %v1250 = vunpack.c.h.b16 %v778
        %v1251 = vunpack.c.l.b16 %v779
        %v1252 = vunpack.c.h.b16 %v779
        %v1253 = vunpack.c.l.b16 %v780
        %v1254 = vunpack.c.h.b16 %v780
        %v1255 = vunpack.c.l.b16 %v781
        %v1256 = vunpack.c.h.b16 %v781
        %v1257 = vunpack.c.l.b16 %v782
        %v1258 = vunpack.c.h.b16 %v782
        %v1259 = vunpack.c.l.b16 %v783
        %v1260 = vunpack.c.h.b16 %v783
        %v1261 = vunpack.c.l.b16 %v784
        %v1262 = vunpack.c.h.b16 %v784
        %v1263 = vunpack.c.l.b16 %v785
        %v1264 = vunpack.c.h.b16 %v785
        %v1265 = vunpack.c.l.b16 %v786
        %v1266 = vunpack.c.h.b16 %v786
        %v1267 = vunpack.c.l.b16 %v787
        %v1268 = vunpack.c.h.b16 %v787
        %v1269 = vunpack.c.l.b16 %v788
        %v1270 = vunpack.c.h.b16 %v788
        %v1271 = vunpack.c.l.b16 %v789
        %v1272 = vunpack.c.h.b16 %v789
        %v1273 = vunpack.c.l.b16 %v790
        %v1274 = vunpack.c.h.b16 %v790
        %v1275 = vunpack.c.l.b16 %v791
        %v1276 = vunpack.c.h.b16 %v791
        %v1277 = vunpack.c.l.b16 %v792
        %v1278 = vunpack.c.h.b16 %v792
        %v1279 = vunpack.c.l.b16 %v793
        %v1280 = vunpack.c.h.b16 %v793
        %v1281 = vunpack.c.l.b16 %v794
        %v1282 = vunpack.c.h.b16 %v794
        %v1283 = vunpack.c.l.b16 %v795
        %v1284 = vunpack.c.h.b16 %v795
        %v1285 = vunpack.c.l.b16 %v796
        %v1286 = vunpack.c.h.b16 %v796
        %v1287 = vunpack.c.l.b16 %v797
        %v1288 = vunpack.c.h.b16 %v797
        %v1289 = vunpack.c.l.b16 %v798
        %v1290 = vunpack.c.h.b16 %v798
        %v1291 = vunpack.c.l.b16 %v799
        %v1292 = vunpack.c.h.b16 %v799
        %v1293 = vunpack.c.l.b16 %v800
        %v1294 = vunpack.c.h.b16 %v800
        %v1295 = vunpack.c.l.b16 %v801
        %v1296 = vunpack.c.h.b16 %v801
        %v1297 = vunpack.c.l.b16 %v802
        %v1298 = vunpack.c.h.b16 %v802
        %v1299 = vunpack.c.l.b16 %v803
        %v1300 = vunpack.c.h.b16 %v803
        %v1301 = vunpack.c.l.b16 %v804
        %v1302 = vunpack.c.h.b16 %v804
        %v1303 = vunpack.c.l.b16 %v805
        %v1304 = vunpack.c.h.b16 %v805
        %v1305 = vunpack.c.l.b16 %v806
        %v1306 = vunpack.c.h.b16 %v806
        %v1307 = vunpack.c.l.b16 %v807
        %v1308 = vunpack.c.h.b16 %v807
        %v1309 = vunpack.c.l.b16 %v808
        %v1310 = vunpack.c.h.b16 %v808
        %v1311 = vunpack.c.l.b16 %v809
        %v1312 = vunpack.c.h.b16 %v809
        %v1313 = vunpack.c.l.b16 %v810
        %v1314 = vunpack.c.h.b16 %v810
        %v1315 = vunpack.c.l.b16 %v811
        %v1316 = vunpack.c.h.b16 %v811
        %v1317 = vunpack.c.l.b16 %v812
        %v1318 = vunpack.c.h.b16 %v812
        %v1319 = vunpack.c.l.b16 %v813
        %v1320 = vunpack.c.h.b16 %v813
        %v1321 = vunpack.c.l.b16 %v814
        %v1322 = vunpack.c.h.b16 %v814
        %v1323 = vunpack.c.l.b16 %v815
        %v1324 = vunpack.c.h.b16 %v815
        %v1325 = vunpack.c.l.b16 %v816
        %v1326 = vunpack.c.h.b16 %v816
        %v1327 = vunpack.c.l.b16 %v817
        %v1328 = vunpack.c.h.b16 %v817
        %v1329 = vunpack.c.l.b16 %v818
        %v1330 = vunpack.c.h.b16 %v818
        %v1331 = vunpack.c.l.b16 %v819
        %v1332 = vunpack.c.h.b16 %v819
        %v1333 = vunpack.c.l.b16 %v820
        %v1334 = vunpack.c.h.b16 %v820
        %v1335 = vunpack.c.l.b16 %v821
        %v1336 = vunpack.c.h.b16 %v821
        %v1337 = vunpack.c.l.b16 %v822
        %v1338 = vunpack.c.h.b16 %v822
        %v1339 = vunpack.c.l.b16 %v823
        %v1340 = vunpack.c.h.b16 %v823
        %v1341 = vunpack.c.l.b16 %v824
        %v1342 = vunpack.c.h.b16 %v824
        %v1343 = vunpack.c.l.b16 %v825
        %v1344 = vunpack.c.h.b16 %v825
        %v1345 = vunpack.c.l.b16 %v826
        %v1346 = vunpack.c.h.b16 %v826
        %v1347 = vunpack.c.l.b16 %v827
        %v1348 = vunpack.c.h.b16 %v827
        %v1349 = vunpack.c.l.b16 %v828
        %v1350 = vunpack.c.h.b16 %v828
        %v1351 = vunpack.c.l.b16 %v829
        %v1352 = vunpack.c.h.b16 %v829
        %v1353 = vunpack.c.l.b16 %v830
        %v1354 = vunpack.c.h.b16 %v830
        %v1355 = vunpack.c.l.b16 %v831
        %v1356 = vunpack.c.h.b16 %v831
        %v1357 = vunpack.c.l.b16 %v832
        %v1358 = vunpack.c.h.b16 %v832
        %v1359 = vunpack.c.l.b16 %v833
        %v1360 = vunpack.c.h.b16 %v833
        %v1361 = vunpack.c.l.b16 %v834
        %v1362 = vunpack.c.h.b16 %v834
        %v1363 = vunpack.c.l.b16 %v835
        %v1364 = vunpack.c.h.b16 %v835
        %v1365 = vunpack.c.l.b16 %v836
        %v1366 = vunpack.c.h.b16 %v836
        %v1367 = vunpack.c.l.b16 %v837
        %v1368 = vunpack.c.h.b16 %v837
        %v1369 = vunpack.c.l.b16 %v838
        %v1370 = vunpack.c.h.b16 %v838
        %v1371 = vunpack.c.l.b16 %v839
        %v1372 = vunpack.c.h.b16 %v839
        %v1373 = vunpack.c.l.b16 %v840
        %v1374 = vunpack.c.h.b16 %v840
        %v1375 = vunpack.c.l.b16 %v841
        %v1376 = vunpack.c.h.b16 %v841
        %v1377 = vunpack.c.l.b16 %v842
        %v1378 = vunpack.c.h.b16 %v842
        %v1379 = vunpack.c.l.b16 %v843
        %v1380 = vunpack.c.h.b16 %v843
        %v1381 = vunpack.c.l.b16 %v844
        %v1382 = vunpack.c.h.b16 %v844
        %v1383 = vunpack.c.l.b16 %v845
        %v1384 = vunpack.c.h.b16 %v845
        %v1385 = vunpack.c.l.b16 %v846
        %v1386 = vunpack.c.h.b16 %v846
        %v1387 = vunpack.c.l.b16 %v847
        %v1388 = vunpack.c.h.b16 %v847
        %v1389 = vunpack.c.l.b16 %v848
        %v1390 = vunpack.c.h.b16 %v848
        %v1391 = vunpack.c.l.b16 %v849
        %v1392 = vunpack.c.h.b16 %v849
        %v1393 = vunpack.c.l.b16 %v850
        %v1394 = vunpack.c.h.b16 %v850
        %v1395 = vunpack.c.l.b16 %v851
        %v1396 = vunpack.c.h.b16 %v851
        %v1397 = vunpack.c.l.b16 %v852
        %v1398 = vunpack.c.h.b16 %v852
        %v1399 = vunpack.c.l.b16 %v853
        %v1400 = vunpack.c.h.b16 %v853
        %v1401 = vunpack.c.l.b16 %v854
        %v1402 = vunpack.c.h.b16 %v854
        %v1403 = vunpack.c.l.b16 %v855
        %v1404 = vunpack.c.h.b16 %v855
        %v1405 = vunpack.c.l.b16 %v856
        %v1406 = vunpack.c.h.b16 %v856
        %v1407 = vunpack.c.l.b16 %v857
        %v1408 = vunpack.c.h.b16 %v857
        %v1409 = vunpack.c.l.b16 %v858
        %v1410 = vunpack.c.h.b16 %v858
        %v1411 = vunpack.c.l.b16 %v859
        %v1412 = vunpack.c.h.b16 %v859
        %v1413 = vunpack.c.l.b16 %v860
        %v1414 = vunpack.c.h.b16 %v860
        %v1415 = vunpack.c.l.b16 %v861
        %v1416 = vunpack.c.h.b16 %v861
        %v1417 = vunpack.c.l.b16 %v862
        %v1418 = vunpack.c.h.b16 %v862
        %v1419 = vunpack.c.l.b16 %v863
        %v1420 = vunpack.c.h.b16 %v863
        %v1421 = vunpack.c.l.b16 %v864
        %v1422 = vunpack.c.h.b16 %v864
        %v1423 = vunpack.c.l.b16 %v865
        %v1424 = vunpack.c.h.b16 %v865
        %v1425 = vunpack.c.l.b16 %v866
        %v1426 = vunpack.c.h.b16 %v866
        %v1427 = vunpack.c.l.b16 %v867
        %v1428 = vunpack.c.h.b16 %v867
        %v1429 = vunpack.c.l.b16 %v868
        %v1430 = vunpack.c.h.b16 %v868
        %v1431 = vunpack.c.l.b16 %v869
        %v1432 = vunpack.c.h.b16 %v869
        %v1433 = vunpack.c.l.b16 %v870
        %v1434 = vunpack.c.h.b16 %v870
        %v1435 = vunpack.c.l.b16 %v871
        %v1436 = vunpack.c.h.b16 %v871
        %v1437 = vunpack.c.l.b16 %v872
        %v1438 = vunpack.c.h.b16 %v872
        %v1439 = vunpack.c.l.b16 %v873
        %v1440 = vunpack.c.h.b16 %v873
        %v1441 = vunpack.c.l.b16 %v874
        %v1442 = vunpack.c.h.b16 %v874
        %v1443 = vunpack.c.l.b16 %v875
        %v1444 = vunpack.c.h.b16 %v875
        %v1445 = vunpack.c.l.b16 %v876
        %v1446 = vunpack.c.h.b16 %v876
        %v1447 = vunpack.c.l.b16 %v877
        %v1448 = vunpack.c.h.b16 %v877
        %v1449 = vunpack.c.l.b16 %v878
        %v1450 = vunpack.c.h.b16 %v878
        %v1451 = vunpack.c.l.b16 %v879
        %v1452 = vunpack.c.h.b16 %v879
        %v1453 = vunpack.c.l.b16 %v880
        %v1454 = vunpack.c.h.b16 %v880
        %v1455 = vunpack.c.l.b16 %v881
        %v1456 = vunpack.c.h.b16 %v881
        %v1457 = vunpack.c.l.b16 %v882
        %v1458 = vunpack.c.h.b16 %v882
        %v1459 = vunpack.c.l.b16 %v883
        %v1460 = vunpack.c.h.b16 %v883
        %v1461 = vunpack.c.l.b16 %v884
        %v1462 = vunpack.c.h.b16 %v884
        %v1463 = vunpack.c.l.b16 %v885
        %v1464 = vunpack.c.h.b16 %v885
        %v1465 = vunpack.c.l.b16 %v886
        %v1466 = vunpack.c.h.b16 %v886
        %v1467 = vunpack.c.l.b16 %v887
        %v1468 = vunpack.c.h.b16 %v887
        %v1469 = vunpack.c.l.b16 %v888
        %v1470 = vunpack.c.h.b16 %v888
        %v1471 = vunpack.c.l.b16 %v889
        %v1472 = vunpack.c.h.b16 %v889
        %v1473 = vunpack.c.l.b16 %v890
        %v1474 = vunpack.c.h.b16 %v890
        %v1475 = vunpack.c.l.b16 %v891
        %v1476 = vunpack.c.h.b16 %v891
        %v1477 = vunpack.c.l.b16 %v892
        %v1478 = vunpack.c.h.b16 %v892
        %v1479 = vunpack.c.l.b16 %v893
        %v1480 = vunpack.c.h.b16 %v893
        %v1481 = vunpack.c.l.b16 %v894
        %v1482 = vunpack.c.h.b16 %v894
        %v1483 = vunpack.c.l.b16 %v895
        %v1484 = vunpack.c.h.b16 %v895
        %v1485 = vunpack.c.l.b16 %v896
        %v1486 = vunpack.c.h.b16 %v896
        %v1487 = vunpack.c.l.b16 %v897
        %v1488 = vunpack.c.h.b16 %v897
        %v1489 = vunpack.c.l.b16 %v898
        %v1490 = vunpack.c.h.b16 %v898
        %v1491 = vunpack.c.l.b16 %v899
        %v1492 = vunpack.c.h.b16 %v899
        %v1493 = vunpack.c.l.b16 %v900
        %v1494 = vunpack.c.h.b16 %v900
        %v1495 = vunpack.c.l.b16 %v901
        %v1496 = vunpack.c.h.b16 %v901
        %v1497 = vunpack.c.l.b16 %v902
        %v1498 = vunpack.c.h.b16 %v902
        %v1499 = vunpack.c.l.b16 %v903
        %v1500 = vunpack.c.h.b16 %v903
        %v1501 = vpack.c.b16 %v1121, %v1117
        %v1502 = vpack.c.b16 %v1122, %v1118
        %v1503 = vpack.c.b16 %v1123, %v1119
        %v1504 = vpack.c.b16 %v1124, %v1120
        %v1505 = vpack.c.b16 %v1129, %v1125
        %v1506 = vpack.c.b16 %v1130, %v1126
        %v1507 = vpack.c.b16 %v1131, %v1127
        %v1508 = vpack.c.b16 %v1132, %v1128
        %v1509 = vpack.c.b16 %v1137, %v1133
        %v1510 = vpack.c.b16 %v1138, %v1134
        %v1511 = vpack.c.b16 %v1139, %v1135
        %v1512 = vpack.c.b16 %v1140, %v1136
        %v1513 = vpack.c.b16 %v1145, %v1141
        %v1514 = vpack.c.b16 %v1146, %v1142
        %v1515 = vpack.c.b16 %v1147, %v1143
        %v1516 = vpack.c.b16 %v1148, %v1144
        %v1517 = vpack.c.b16 %v1153, %v1149
        %v1518 = vpack.c.b16 %v1154, %v1150
        %v1519 = vpack.c.b16 %v1155, %v1151
        %v1520 = vpack.c.b16 %v1156, %v1152
        %v1521 = vpack.c.b16 %v1161, %v1157
        %v1522 = vpack.c.b16 %v1162, %v1158
        %v1523 = vpack.c.b16 %v1163, %v1159
        %v1524 = vpack.c.b16 %v1164, %v1160
        %v1525 = vpack.c.b16 %v1169, %v1165
        %v1526 = vpack.c.b16 %v1170, %v1166
        %v1527 = vpack.c.b16 %v1171, %v1167
        %v1528 = vpack.c.b16 %v1172, %v1168
        %v1529 = vpack.c.b16 %v1177, %v1173
        %v1530 = vpack.c.b16 %v1178, %v1174
        %v1531 = vpack.c.b16 %v1179, %v1175
        %v1532 = vpack.c.b16 %v1180, %v1176
        %v1533 = vpack.c.b16 %v1185, %v1181
        %v1534 = vpack.c.b16 %v1186, %v1182
        %v1535 = vpack.c.b16 %v1187, %v1183
        %v1536 = vpack.c.b16 %v1188, %v1184
        %v1537 = vpack.c.b16 %v1193, %v1189
        %v1538 = vpack.c.b16 %v1194, %v1190
        %v1539 = vpack.c.b16 %v1195, %v1191
        %v1540 = vpack.c.b16 %v1196, %v1192
        %v1541 = vpack.c.b16 %v1201, %v1197
        %v1542 = vpack.c.b16 %v1202, %v1198
        %v1543 = vpack.c.b16 %v1203, %v1199
        %v1544 = vpack.c.b16 %v1204, %v1200
        %v1545 = vpack.c.b16 %v1209, %v1205
        %v1546 = vpack.c.b16 %v1210, %v1206
        %v1547 = vpack.c.b16 %v1211, %v1207
        %v1548 = vpack.c.b16 %v1212, %v1208
        %v1549 = vpack.c.b16 %v1217, %v1213
        %v1550 = vpack.c.b16 %v1218, %v1214
        %v1551 = vpack.c.b16 %v1219, %v1215
        %v1552 = vpack.c.b16 %v1220, %v1216
        %v1553 = vpack.c.b16 %v1225, %v1221
        %v1554 = vpack.c.b16 %v1226, %v1222
        %v1555 = vpack.c.b16 %v1227, %v1223
        %v1556 = vpack.c.b16 %v1228, %v1224
        %v1557 = vpack.c.b16 %v1233, %v1229
        %v1558 = vpack.c.b16 %v1234, %v1230
        %v1559 = vpack.c.b16 %v1235, %v1231
        %v1560 = vpack.c.b16 %v1236, %v1232
        %v1561 = vpack.c.b16 %v1241, %v1237
        %v1562 = vpack.c.b16 %v1242, %v1238
        %v1563 = vpack.c.b16 %v1243, %v1239
        %v1564 = vpack.c.b16 %v1244, %v1240
        %v1565 = vpack.c.b16 %v1249, %v1245
        %v1566 = vpack.c.b16 %v1250, %v1246
        %v1567 = vpack.c.b16 %v1251, %v1247
        %v1568 = vpack.c.b16 %v1252, %v1248
        %v1569 = vpack.c.b16 %v1257, %v1253
        %v1570 = vpack.c.b16 %v1258, %v1254
        %v1571 = vpack.c.b16 %v1259, %v1255
        %v1572 = vpack.c.b16 %v1260, %v1256
        %v1573 = vpack.c.b16 %v1265, %v1261
        %v1574 = vpack.c.b16 %v1266, %v1262
        %v1575 = vpack.c.b16 %v1267, %v1263
        %v1576 = vpack.c.b16 %v1268, %v1264
        %v1577 = vpack.c.b16 %v1273, %v1269
        %v1578 = vpack.c.b16 %v1274, %v1270
        %v1579 = vpack.c.b16 %v1275, %v1271
        %v1580 = vpack.c.b16 %v1276, %v1272
        %v1581 = vpack.c.b16 %v1281, %v1277
        %v1582 = vpack.c.b16 %v1282, %v1278
        %v1583 = vpack.c.b16 %v1283, %v1279
        %v1584 = vpack.c.b16 %v1284, %v1280
        %v1585 = vpack.c.b16 %v1289, %v1285
        %v1586 = vpack.c.b16 %v1290, %v1286
        %v1587 = vpack.c.b16 %v1291, %v1287
        %v1588 = vpack.c.b16 %v1292, %v1288
        %v1589 = vpack.c.b16 %v1297, %v1293
        %v1590 = vpack.c.b16 %v1298, %v1294
        %v1591 = vpack.c.b16 %v1299, %v1295
        %v1592 = vpack.c.b16 %v1300, %v1296
        %v1593 = vpack.c.b16 %v1305, %v1301
        %v1594 = vpack.c.b16 %v1306, %v1302
        %v1595 = vpack.c.b16 %v1307, %v1303
        %v1596 = vpack.c.b16 %v1308, %v1304
        %v1597 = vpack.c.b16 %v1313, %v1309
        %v1598 = vpack.c.b16 %v1314, %v1310
        %v1599 = vpack.c.b16 %v1315, %v1311
        %v1600 = vpack.c.b16 %v1316, %v1312
        %v1601 = vpack.c.b16 %v1321, %v1317
        %v1602 = vpack.c.b16 %v1322, %v1318
        %v1603 = vpack.c.b16 %v1323, %v1319
        %v1604 = vpack.c.b16 %v1324, %v1320
        %v1605 = vpack.c.b16 %v1329, %v1325
        %v1606 = vpack.c.b16 %v1330, %v1326
        %v1607 = vpack.c.b16 %v1331, %v1327
        %v1608 = vpack.c.b16 %v1332, %v1328
        %v1609 = vpack.c.b16 %v1337, %v1333
        %v1610 = vpack.c.b16 %v1338, %v1334
        %v1611 = vpack.c.b16 %v1339, %v1335
        %v1612 = vpack.c.b16 %v1340, %v1336
        %v1613 = vpack.c.b16 %v1345, %v1341
        %v1614 = vpack.c.b16 %v1346, %v1342
        %v1615 = vpack.c.b16 %v1347, %v1343
        %v1616 = vpack.c.b16 %v1348, %v1344
        %v1617 = vpack.c.b16 %v1353, %v1349
        %v1618 = vpack.c.b16 %v1354, %v1350
        %v1619 = vpack.c.b16 %v1355, %v1351
        %v1620 = vpack.c.b16 %v1356, %v1352
        %v1621 = vpack.c.b16 %v1361, %v1357
        %v1622 = vpack.c.b16 %v1362, %v1358
        %v1623 = vpack.c.b16 %v1363, %v1359
        %v1624 = vpack.c.b16 %v1364, %v1360
        %v1625 = vpack.c.b16 %v1369, %v1365
        %v1626 = vpack.c.b16 %v1370, %v1366
        %v1627 = vpack.c.b16 %v1371, %v1367
        %v1628 = vpack.c.b16 %v1372, %v1368
        %v1629 = vpack.c.b16 %v1377, %v1373
        %v1630 = vpack.c.b16 %v1378, %v1374
        %v1631 = vpack.c.b16 %v1379, %v1375
        %v1632 = vpack.c.b16 %v1380, %v1376
        %v1633 = vpack.c.b16 %v1385, %v1381
        %v1634 = vpack.c.b16 %v1386, %v1382
        %v1635 = vpack.c.b16 %v1387, %v1383
        %v1636 = vpack.c.b16 %v1388, %v1384
        %v1637 = vpack.c.b16 %v1393, %v1389
        %v1638 = vpack.c.b16 %v1394, %v1390
        %v1639 = vpack.c.b16 %v1395, %v1391
        %v1640 = vpack.c.b16 %v1396, %v1392
        %v1641 = vpack.c.b16 %v1401, %v1397
        %v1642 = vpack.c.b16 %v1402, %v1398
        %v1643 = vpack.c.b16 %v1403, %v1399
        %v1644 = vpack.c.b16 %v1404, %v1400
        %v1645 = vpack.c.b16 %v1409, %v1405
        %v1646 = vpack.c.b16 %v1410, %v1406
        %v1647 = vpack.c.b16 %v1411, %v1407
        %v1648 = vpack.c.b16 %v1412, %v1408
        %v1649 = vpack.c.b16 %v1417, %v1413
        %v1650 = vpack.c.b16 %v1418, %v1414
        %v1651 = vpack.c.b16 %v1419, %v1415
        %v1652 = vpack.c.b16 %v1420, %v1416
        %v1653 = vpack.c.b16 %v1425, %v1421
        %v1654 = vpack.c.b16 %v1426, %v1422
        %v1655 = vpack.c.b16 %v1427, %v1423
        %v1656 = vpack.c.b16 %v1428, %v1424
        %v1657 = vpack.c.b16 %v1433, %v1429
        %v1658 = vpack.c.b16 %v1434, %v1430
        %v1659 = vpack.c.b16 %v1435, %v1431
        %v1660 = vpack.c.b16 %v1436, %v1432
        %v1661 = vpack.c.b16 %v1441, %v1437
        %v1662 = vpack.c.b16 %v1442, %v1438
        %v1663 = vpack.c.b16 %v1443, %v1439
        %v1664 = vpack.c.b16 %v1444, %v1440
        %v1665 = vpack.c.b16 %v1449, %v1445
        %v1666 = vpack.c.b16 %v1450, %v1446
        %v1667 = vpack.c.b16 %v1451, %v1447
        %v1668 = vpack.c.b16 %v1452, %v1448
        %v1669 = vpack.c.b16 %v1457, %v1453
        %v1670 = vpack.c.b16 %v1458, %v1454
        %v1671 = vpack.c.b16 %v1459, %v1455
        %v1672 = vpack.c.b16 %v1460, %v1456
        %v1673 = vpack.c.b16 %v1465, %v1461
        %v1674 = vpack.c.b16 %v1466, %v1462
        %v1675 = vpack.c.b16 %v1467, %v1463
        %v1676 = vpack.c.b16 %v1468, %v1464
        %v1677 = vpack.c.b16 %v1473, %v1469
        %v1678 = vpack.c.b16 %v1474, %v1470
        %v1679 = vpack.c.b16 %v1475, %v1471
        %v1680 = vpack.c.b16 %v1476, %v1472
        %v1681 = vpack.c.b16 %v1481, %v1477
        %v1682 = vpack.c.b16 %v1482, %v1478
        %v1683 = vpack.c.b16 %v1483, %v1479
        %v1684 = vpack.c.b16 %v1484, %v1480
        %v1685 = vpack.c.b16 %v1489, %v1485
        %v1686 = vpack.c.b16 %v1490, %v1486
        %v1687 = vpack.c.b16 %v1491, %v1487
        %v1688 = vpack.c.b16 %v1492, %v1488
        %v1689 = vpack.c.b16 %v1497, %v1493
        %v1690 = vpack.c.b16 %v1498, %v1494
        %v1691 = vpack.c.b16 %v1499, %v1495
        %v1692 = vpack.c.b16 %v1500, %v1496
        %1885 = vmatprep.subr.bf16.mxu0 %v1502
        %1886 = vmatpush1.bf16.msra.mxu0 %v1501
        %1887 = vmatprep.subr.bf16.mxu0 %v1506
        %1888 = vmatpush1.bf16.msra.mxu0 %v1505
        %1889 = vmatprep.subr.bf16.mxu0 %v1510
        %1890 = vmatpush1.bf16.msra.mxu0 %v1509
        %1891 = vmatprep.subr.bf16.mxu0 %v1514
        %1892 = vmatpush1.bf16.msra.mxu0 %v1513
        %1893 = vmatprep.subr.bf16.mxu0 %v1518
        %1894 = vmatpush1.bf16.msra.mxu0 %v1517
        %1895 = vmatprep.subr.bf16.mxu0 %v1522
        %1896 = vmatpush1.bf16.msra.mxu0 %v1521
        %1897 = vmatprep.subr.bf16.mxu0 %v1526
        %1898 = vmatpush1.bf16.msra.mxu0 %v1525
        %1899 = vmatprep.subr.bf16.mxu0 %v1530
        %1900 = vmatpush1.bf16.msra.mxu0 %v1529
        %1901 = vmatprep.subr.bf16.mxu0 %v1534
        %1902 = vmatpush1.bf16.msra.mxu0 %v1533
        %1903 = vmatprep.subr.bf16.mxu0 %v1538
        %1904 = vmatpush1.bf16.msra.mxu0 %v1537
        %1905 = vmatprep.subr.bf16.mxu0 %v1542
        %1906 = vmatpush1.bf16.msra.mxu0 %v1541
        %1907 = vmatprep.subr.bf16.mxu0 %v1546
        %1908 = vmatpush1.bf16.msra.mxu0 %v1545
        %1909 = vmatprep.subr.bf16.mxu0 %v1550
        %1910 = vmatpush1.bf16.msra.mxu0 %v1549
        %1911 = vmatprep.subr.bf16.mxu0 %v1554
        %1912 = vmatpush1.bf16.msra.mxu0 %v1553
        %1913 = vmatprep.subr.bf16.mxu0 %v1558
        %1914 = vmatpush1.bf16.msra.mxu0 %v1557
        %1915 = vmatprep.subr.bf16.mxu0 %v1562
        %1916 = vmatpush1.bf16.msra.mxu0 %v1561
        %1917 = vmatprep.mubr.bf16.mxu0 %v914
        %1918 = vmatmul.mubr.bf16.gmra.mrb[0].mxu0 %v913
        %v1919 = vpop.f32.mrb[0].mxu0
        %v1920 = vadd.f32 0.0, %v1919
        %v1921 = vpop.f32.mrb[0].mxu0
        %v1922 = vadd.f32 0.0, %v1921
        %v1923 = vpop.f32.mrb[0].mxu0
        %v1924 = vpop.f32.mrb[0].mxu0
        %1925 = vdwg.mxu0
        %1926 = vmatprep.subr.bf16.mxu0 %v1566
        %1927 = vmatpush1.bf16.msra.mxu0 %v1565
        %1928 = vmatprep.subr.bf16.mxu0 %v1570
        %1929 = vmatpush1.bf16.msra.mxu0 %v1569
        %1930 = vmatprep.subr.bf16.mxu0 %v1574
        %1931 = vmatpush1.bf16.msra.mxu0 %v1573
        %1932 = vmatprep.subr.bf16.mxu0 %v1578
        %1933 = vmatpush1.bf16.msra.mxu0 %v1577
        %1934 = vmatprep.subr.bf16.mxu0 %v1582
        %1935 = vmatpush1.bf16.msra.mxu0 %v1581
        %1936 = vmatprep.subr.bf16.mxu0 %v1586
        %1937 = vmatpush1.bf16.msra.mxu0 %v1585
        %1938 = vmatprep.subr.bf16.mxu0 %v1590
        %1939 = vmatpush1.bf16.msra.mxu0 %v1589
        %1940 = vmatprep.subr.bf16.mxu0 %v1594
        %1941 = vmatpush1.bf16.msra.mxu0 %v1593
        %1942 = vmatprep.subr.bf16.mxu0 %v1598
        %1943 = vmatpush1.bf16.msra.mxu0 %v1597
        %1944 = vmatprep.subr.bf16.mxu0 %v1602
        %1945 = vmatpush1.bf16.msra.mxu0 %v1601
        %1946 = vmatprep.subr.bf16.mxu0 %v1606
        %1947 = vmatpush1.bf16.msra.mxu0 %v1605
        %1948 = vmatprep.subr.bf16.mxu0 %v1610
        %1949 = vmatpush1.bf16.msra.mxu0 %v1609
        %1950 = vmatprep.subr.bf16.mxu0 %v1614
        %1951 = vmatpush1.bf16.msra.mxu0 %v1613
        %1952 = vmatprep.subr.bf16.mxu0 %v1618
        %1953 = vmatpush1.bf16.msra.mxu0 %v1617
        %1954 = vmatprep.subr.bf16.mxu0 %v1622
        %1955 = vmatpush1.bf16.msra.mxu0 %v1621
        %1956 = vmatprep.subr.bf16.mxu0 %v1626
        %1957 = vmatpush1.bf16.msra.mxu0 %v1625
        %1958 = vmatprep.mubr.bf16.mxu0 %v916
        %1959 = vmatmul.mubr.bf16.gmra.mrb[0].mxu0 %v915
        %v1960 = vpop.f32.mrb[0].mxu0
        %v1961 = vadd.f32 %v1920, %v1960
        %v1962 = vpop.f32.mrb[0].mxu0
        %v1963 = vadd.f32 %v1922, %v1962
        %v1964 = vpop.f32.mrb[0].mxu0
        %v1965 = vpop.f32.mrb[0].mxu0
        %1966 = vdwg.mxu0
        %1967 = vmatprep.subr.bf16.mxu0 %v1630
        %1968 = vmatpush1.bf16.msra.mxu0 %v1629
        %1969 = vmatprep.subr.bf16.mxu0 %v1634
        %1970 = vmatpush1.bf16.msra.mxu0 %v1633
        %1971 = vmatprep.subr.bf16.mxu0 %v1638
        %1972 = vmatpush1.bf16.msra.mxu0 %v1637
        %1973 = vmatprep.subr.bf16.mxu0 %v1642
        %1974 = vmatpush1.bf16.msra.mxu0 %v1641
        %1975 = vmatprep.subr.bf16.mxu0 %v1646
        %1976 = vmatpush1.bf16.msra.mxu0 %v1645
        %1977 = vmatprep.subr.bf16.mxu0 %v1650
        %1978 = vmatpush1.bf16.msra.mxu0 %v1649
        %1979 = vmatprep.subr.bf16.mxu0 %v1654
        %1980 = vmatpush1.bf16.msra.mxu0 %v1653
        %1981 = vmatprep.subr.bf16.mxu0 %v1658
        %1982 = vmatpush1.bf16.msra.mxu0 %v1657
        %1983 = vmatprep.subr.bf16.mxu0 %v1662
        %1984 = vmatpush1.bf16.msra.mxu0 %v1661
        %1985 = vmatprep.subr.bf16.mxu0 %v1666
        %1986 = vmatpush1.bf16.msra.mxu0 %v1665
        %1987 = vmatprep.subr.bf16.mxu0 %v1670
        %1988 = vmatpush1.bf16.msra.mxu0 %v1669
        %1989 = vmatprep.subr.bf16.mxu0 %v1674
        %1990 = vmatpush1.bf16.msra.mxu0 %v1673
        %1991 = vmatprep.subr.bf16.mxu0 %v1678
        %1992 = vmatpush1.bf16.msra.mxu0 %v1677
        %1993 = vmatprep.subr.bf16.mxu0 %v1682
        %1994 = vmatpush1.bf16.msra.mxu0 %v1681
        %1995 = vmatprep.subr.bf16.mxu0 %v1686
        %1996 = vmatpush1.bf16.msra.mxu0 %v1685
        %1997 = vmatprep.subr.bf16.mxu0 %v1690
        %1998 = vmatpush1.bf16.msra.mxu0 %v1689
        %1999 = vmatprep.mubr.bf16.mxu0 %v918
        %2000 = vmatmul.mubr.bf16.gmra.mrb[0].mxu0 %v917
        %v2001 = vpop.f32.mrb[0].mxu0
        %v2002 = vadd.f32 %v1961, %v2001
        %v2003 = vpop.f32.mrb[0].mxu0
        %v2004 = vadd.f32 %v1963, %v2003
        %v2005 = vpop.f32.mrb[0].mxu0
        %v2006 = vpop.f32.mrb[0].mxu0
        %2007 = vdwg.mxu0
        %2008 = vmatprep.subr.bf16.mxu0 %v1504
        %2009 = vmatpush1.bf16.msra.mxu0 %v1503
        %2010 = vmatprep.subr.bf16.mxu0 %v1508
        %2011 = vmatpush1.bf16.msra.mxu0 %v1507
        %2012 = vmatprep.subr.bf16.mxu0 %v1512
        %2013 = vmatpush1.bf16.msra.mxu0 %v1511
        %2014 = vmatprep.subr.bf16.mxu0 %v1516
        %2015 = vmatpush1.bf16.msra.mxu0 %v1515
        %2016 = vmatprep.subr.bf16.mxu0 %v1520
        %2017 = vmatpush1.bf16.msra.mxu0 %v1519
        %2018 = vmatprep.subr.bf16.mxu0 %v1524
        %2019 = vmatpush1.bf16.msra.mxu0 %v1523
        %2020 = vmatprep.subr.bf16.mxu0 %v1528
        %2021 = vmatpush1.bf16.msra.mxu0 %v1527
        %2022 = vmatprep.subr.bf16.mxu0 %v1532
        %2023 = vmatpush1.bf16.msra.mxu0 %v1531
        %2024 = vmatprep.subr.bf16.mxu0 %v1536
        %2025 = vmatpush1.bf16.msra.mxu0 %v1535
        %2026 = vmatprep.subr.bf16.mxu0 %v1540
        %2027 = vmatpush1.bf16.msra.mxu0 %v1539
        %2028 = vmatprep.subr.bf16.mxu0 %v1544
        %2029 = vmatpush1.bf16.msra.mxu0 %v1543
        %2030 = vmatprep.subr.bf16.mxu0 %v1548
        %2031 = vmatpush1.bf16.msra.mxu0 %v1547
        %2032 = vmatprep.subr.bf16.mxu0 %v1552
        %2033 = vmatpush1.bf16.msra.mxu0 %v1551
        %2034 = vmatprep.subr.bf16.mxu0 %v1556
        %2035 = vmatpush1.bf16.msra.mxu0 %v1555
        %2036 = vmatprep.subr.bf16.mxu0 %v1560
        %2037 = vmatpush1.bf16.msra.mxu0 %v1559
        %2038 = vmatprep.subr.bf16.mxu0 %v1564
        %2039 = vmatpush1.bf16.msra.mxu0 %v1563
        %2040 = vmatprep.mubr.bf16.mxu0 %v914
        %2041 = vmatmul.mubr.bf16.gmra.mrb[0].mxu0 %v913
        %v2042 = vpop.f32.mrb[0].mxu0
        %v2043 = vadd.f32 0.0, %v2042
        %v2044 = vpop.f32.mrb[0].mxu0
        %v2045 = vadd.f32 0.0, %v2044
        %v2046 = vpop.f32.mrb[0].mxu0
        %v2047 = vpop.f32.mrb[0].mxu0
        %2048 = vdwg.mxu0
        %2049 = vmatprep.subr.bf16.mxu0 %v1568
        %2050 = vmatpush1.bf16.msra.mxu0 %v1567
        %2051 = vmatprep.subr.bf16.mxu0 %v1572
        %2052 = vmatpush1.bf16.msra.mxu0 %v1571
        %2053 = vmatprep.subr.bf16.mxu0 %v1576
        %2054 = vmatpush1.bf16.msra.mxu0 %v1575
        %2055 = vmatprep.subr.bf16.mxu0 %v1580
        %2056 = vmatpush1.bf16.msra.mxu0 %v1579
        %2057 = vmatprep.subr.bf16.mxu0 %v1584
        %2058 = vmatpush1.bf16.msra.mxu0 %v1583
        %2059 = vmatprep.subr.bf16.mxu0 %v1588
        %2060 = vmatpush1.bf16.msra.mxu0 %v1587
        %2061 = vmatprep.subr.bf16.mxu0 %v1592
        %2062 = vmatpush1.bf16.msra.mxu0 %v1591
        %2063 = vmatprep.subr.bf16.mxu0 %v1596
        %2064 = vmatpush1.bf16.msra.mxu0 %v1595
        %2065 = vmatprep.subr.bf16.mxu0 %v1600
        %2066 = vmatpush1.bf16.msra.mxu0 %v1599
        %2067 = vmatprep.subr.bf16.mxu0 %v1604
        %2068 = vmatpush1.bf16.msra.mxu0 %v1603
        %2069 = vmatprep.subr.bf16.mxu0 %v1608
        %2070 = vmatpush1.bf16.msra.mxu0 %v1607
        %2071 = vmatprep.subr.bf16.mxu0 %v1612
        %2072 = vmatpush1.bf16.msra.mxu0 %v1611
        %2073 = vmatprep.subr.bf16.mxu0 %v1616
        %2074 = vmatpush1.bf16.msra.mxu0 %v1615
        %2075 = vmatprep.subr.bf16.mxu0 %v1620
        %2076 = vmatpush1.bf16.msra.mxu0 %v1619
        %2077 = vmatprep.subr.bf16.mxu0 %v1624
        %2078 = vmatpush1.bf16.msra.mxu0 %v1623
        %2079 = vmatprep.subr.bf16.mxu0 %v1628
        %2080 = vmatpush1.bf16.msra.mxu0 %v1627
        %2081 = vmatprep.mubr.bf16.mxu0 %v916
        %2082 = vmatmul.mubr.bf16.gmra.mrb[0].mxu0 %v915
        %v2083 = vpop.f32.mrb[0].mxu0
        %v2084 = vadd.f32 %v2043, %v2083
        %v2085 = vpop.f32.mrb[0].mxu0
        %v2086 = vadd.f32 %v2045, %v2085
        %v2087 = vpop.f32.mrb[0].mxu0
        %v2088 = vpop.f32.mrb[0].mxu0
        %2089 = vdwg.mxu0
        %2090 = vmatprep.subr.bf16.mxu0 %v1632
        %2091 = vmatpush1.bf16.msra.mxu0 %v1631
        %2092 = vmatprep.subr.bf16.mxu0 %v1636
        %2093 = vmatpush1.bf16.msra.mxu0 %v1635
        %2094 = vmatprep.subr.bf16.mxu0 %v1640
        %2095 = vmatpush1.bf16.msra.mxu0 %v1639
        %2096 = vmatprep.subr.bf16.mxu0 %v1644
        %2097 = vmatpush1.bf16.msra.mxu0 %v1643
        %2098 = vmatprep.subr.bf16.mxu0 %v1648
        %2099 = vmatpush1.bf16.msra.mxu0 %v1647
        %2100 = vmatprep.subr.bf16.mxu0 %v1652
        %2101 = vmatpush1.bf16.msra.mxu0 %v1651
        %2102 = vmatprep.subr.bf16.mxu0 %v1656
        %2103 = vmatpush1.bf16.msra.mxu0 %v1655
        %2104 = vmatprep.subr.bf16.mxu0 %v1660
        %2105 = vmatpush1.bf16.msra.mxu0 %v1659
        %2106 = vmatprep.subr.bf16.mxu0 %v1664
        %2107 = vmatpush1.bf16.msra.mxu0 %v1663
        %2108 = vmatprep.subr.bf16.mxu0 %v1668
        %2109 = vmatpush1.bf16.msra.mxu0 %v1667
        %2110 = vmatprep.subr.bf16.mxu0 %v1672
        %2111 = vmatpush1.bf16.msra.mxu0 %v1671
        %2112 = vmatprep.subr.bf16.mxu0 %v1676
        %2113 = vmatpush1.bf16.msra.mxu0 %v1675
        %2114 = vmatprep.subr.bf16.mxu0 %v1680
        %2115 = vmatpush1.bf16.msra.mxu0 %v1679
        %2116 = vmatprep.subr.bf16.mxu0 %v1684
        %2117 = vmatpush1.bf16.msra.mxu0 %v1683
        %2118 = vmatprep.subr.bf16.mxu0 %v1688
        %2119 = vmatpush1.bf16.msra.mxu0 %v1687
        %2120 = vmatprep.subr.bf16.mxu0 %v1692
        %2121 = vmatpush1.bf16.msra.mxu0 %v1691
        %2122 = vmatprep.mubr.bf16.mxu0 %v918
        %2123 = vmatmul.mubr.bf16.gmra.mrb[0].mxu0 %v917
        %v2124 = vpop.f32.mrb[0].mxu0
        %v2125 = vadd.f32 %v2084, %v2124
        %v2126 = vpop.f32.mrb[0].mxu0
        %v2127 = vadd.f32 %v2086, %v2126
        %v2128 = vpop.f32.mrb[0].mxu0
        %v2129 = vpop.f32.mrb[0].mxu0
        %2130 = vdwg.mxu0
        %v2134 = vunpack.c.l.b16 %v514
        %v2135 = vunpack.c.h.b16 %v514
        %v2136 = vunpack.c.l.b16 %v515
        %v2137 = vunpack.c.h.b16 %v515
        %v2138 = vunpack.c.l.b16 %v516
        %v2139 = vunpack.c.h.b16 %v516
        %v2140 = vpack.c.b16 %v2134, %v2134
        %v2141 = vpack.c.b16 %v2135, %v2135
        %v2142 = vpack.c.b16 %v2136, %v2136
        %v2143 = vpack.c.b16 %v2137, %v2137
        %v2144 = vpack.c.b16 %v2138, %v2138
        %v2145 = vpack.c.b16 %v2139, %v2139
        %v2344 = vunpack.c.l.b16 %v517
        %v2345 = vunpack.c.h.b16 %v517
        %v2346 = vunpack.c.l.b16 %v518
        %v2347 = vunpack.c.h.b16 %v518
        %v2348 = vunpack.c.l.b16 %v519
        %v2349 = vunpack.c.h.b16 %v519
        %v2350 = vunpack.c.l.b16 %v520
        %v2351 = vunpack.c.h.b16 %v520
        %v2352 = vunpack.c.l.b16 %v521
        %v2353 = vunpack.c.h.b16 %v521
        %v2354 = vunpack.c.l.b16 %v522
        %v2355 = vunpack.c.h.b16 %v522
        %v2356 = vunpack.c.l.b16 %v523
        %v2357 = vunpack.c.h.b16 %v523
        %v2358 = vunpack.c.l.b16 %v524
        %v2359 = vunpack.c.h.b16 %v524
        %v2360 = vunpack.c.l.b16 %v525
        %v2361 = vunpack.c.h.b16 %v525
        %v2362 = vunpack.c.l.b16 %v526
        %v2363 = vunpack.c.h.b16 %v526
        %v2364 = vunpack.c.l.b16 %v527
        %v2365 = vunpack.c.h.b16 %v527
        %v2366 = vunpack.c.l.b16 %v528
        %v2367 = vunpack.c.h.b16 %v528
        %v2368 = vunpack.c.l.b16 %v529
        %v2369 = vunpack.c.h.b16 %v529
        %v2370 = vunpack.c.l.b16 %v530
        %v2371 = vunpack.c.h.b16 %v530
        %v2372 = vunpack.c.l.b16 %v531
        %v2373 = vunpack.c.h.b16 %v531
        %v2374 = vunpack.c.l.b16 %v532
        %v2375 = vunpack.c.h.b16 %v532
        %v2376 = vunpack.c.l.b16 %v533
        %v2377 = vunpack.c.h.b16 %v533
        %v2378 = vunpack.c.l.b16 %v534
        %v2379 = vunpack.c.h.b16 %v534
        %v2380 = vunpack.c.l.b16 %v535
        %v2381 = vunpack.c.h.b16 %v535
        %v2382 = vunpack.c.l.b16 %v536
        %v2383 = vunpack.c.h.b16 %v536
        %v2384 = vunpack.c.l.b16 %v537
        %v2385 = vunpack.c.h.b16 %v537
        %v2386 = vunpack.c.l.b16 %v538
        %v2387 = vunpack.c.h.b16 %v538
        %v2388 = vunpack.c.l.b16 %v539
        %v2389 = vunpack.c.h.b16 %v539
        %v2390 = vunpack.c.l.b16 %v540
        %v2391 = vunpack.c.h.b16 %v540
        %v2392 = vunpack.c.l.b16 %v541
        %v2393 = vunpack.c.h.b16 %v541
        %v2394 = vunpack.c.l.b16 %v542
        %v2395 = vunpack.c.h.b16 %v542
        %v2396 = vunpack.c.l.b16 %v543
        %v2397 = vunpack.c.h.b16 %v543
        %v2398 = vunpack.c.l.b16 %v544
        %v2399 = vunpack.c.h.b16 %v544
        %v2400 = vunpack.c.l.b16 %v545
        %v2401 = vunpack.c.h.b16 %v545
        %v2402 = vunpack.c.l.b16 %v546
        %v2403 = vunpack.c.h.b16 %v546
        %v2404 = vunpack.c.l.b16 %v547
        %v2405 = vunpack.c.h.b16 %v547
        %v2406 = vunpack.c.l.b16 %v548
        %v2407 = vunpack.c.h.b16 %v548
        %v2408 = vunpack.c.l.b16 %v549
        %v2409 = vunpack.c.h.b16 %v549
        %v2410 = vunpack.c.l.b16 %v550
        %v2411 = vunpack.c.h.b16 %v550
        %v2412 = vunpack.c.l.b16 %v551
        %v2413 = vunpack.c.h.b16 %v551
        %v2414 = vunpack.c.l.b16 %v552
        %v2415 = vunpack.c.h.b16 %v552
        %v2416 = vunpack.c.l.b16 %v553
        %v2417 = vunpack.c.h.b16 %v553
        %v2418 = vunpack.c.l.b16 %v554
        %v2419 = vunpack.c.h.b16 %v554
        %v2420 = vunpack.c.l.b16 %v555
        %v2421 = vunpack.c.h.b16 %v555
        %v2422 = vunpack.c.l.b16 %v556
        %v2423 = vunpack.c.h.b16 %v556
        %v2424 = vunpack.c.l.b16 %v557
        %v2425 = vunpack.c.h.b16 %v557
        %v2426 = vunpack.c.l.b16 %v558
        %v2427 = vunpack.c.h.b16 %v558
        %v2428 = vunpack.c.l.b16 %v559
        %v2429 = vunpack.c.h.b16 %v559
        %v2430 = vunpack.c.l.b16 %v560
        %v2431 = vunpack.c.h.b16 %v560
        %v2432 = vunpack.c.l.b16 %v561
        %v2433 = vunpack.c.h.b16 %v561
        %v2434 = vunpack.c.l.b16 %v562
        %v2435 = vunpack.c.h.b16 %v562
        %v2436 = vunpack.c.l.b16 %v563
        %v2437 = vunpack.c.h.b16 %v563
        %v2438 = vunpack.c.l.b16 %v564
        %v2439 = vunpack.c.h.b16 %v564
        %v2440 = vunpack.c.l.b16 %v565
        %v2441 = vunpack.c.h.b16 %v565
        %v2442 = vunpack.c.l.b16 %v566
        %v2443 = vunpack.c.h.b16 %v566
        %v2444 = vunpack.c.l.b16 %v567
        %v2445 = vunpack.c.h.b16 %v567
        %v2446 = vunpack.c.l.b16 %v568
        %v2447 = vunpack.c.h.b16 %v568
        %v2448 = vunpack.c.l.b16 %v569
        %v2449 = vunpack.c.h.b16 %v569
        %v2450 = vunpack.c.l.b16 %v570
        %v2451 = vunpack.c.h.b16 %v570
        %v2452 = vunpack.c.l.b16 %v571
        %v2453 = vunpack.c.h.b16 %v571
        %v2454 = vunpack.c.l.b16 %v572
        %v2455 = vunpack.c.h.b16 %v572
        %v2456 = vunpack.c.l.b16 %v573
        %v2457 = vunpack.c.h.b16 %v573
        %v2458 = vunpack.c.l.b16 %v574
        %v2459 = vunpack.c.h.b16 %v574
        %v2460 = vunpack.c.l.b16 %v575
        %v2461 = vunpack.c.h.b16 %v575
        %v2462 = vunpack.c.l.b16 %v576
        %v2463 = vunpack.c.h.b16 %v576
        %v2464 = vunpack.c.l.b16 %v577
        %v2465 = vunpack.c.h.b16 %v577
        %v2466 = vunpack.c.l.b16 %v578
        %v2467 = vunpack.c.h.b16 %v578
        %v2468 = vunpack.c.l.b16 %v579
        %v2469 = vunpack.c.h.b16 %v579
        %v2470 = vunpack.c.l.b16 %v580
        %v2471 = vunpack.c.h.b16 %v580
        %v2472 = vunpack.c.l.b16 %v581
        %v2473 = vunpack.c.h.b16 %v581
        %v2474 = vunpack.c.l.b16 %v582
        %v2475 = vunpack.c.h.b16 %v582
        %v2476 = vunpack.c.l.b16 %v583
        %v2477 = vunpack.c.h.b16 %v583
        %v2478 = vunpack.c.l.b16 %v584
        %v2479 = vunpack.c.h.b16 %v584
        %v2480 = vunpack.c.l.b16 %v585
        %v2481 = vunpack.c.h.b16 %v585
        %v2482 = vunpack.c.l.b16 %v586
        %v2483 = vunpack.c.h.b16 %v586
        %v2484 = vunpack.c.l.b16 %v587
        %v2485 = vunpack.c.h.b16 %v587
        %v2486 = vunpack.c.l.b16 %v588
        %v2487 = vunpack.c.h.b16 %v588
        %v2488 = vunpack.c.l.b16 %v589
        %v2489 = vunpack.c.h.b16 %v589
        %v2490 = vunpack.c.l.b16 %v590
        %v2491 = vunpack.c.h.b16 %v590
        %v2492 = vunpack.c.l.b16 %v591
        %v2493 = vunpack.c.h.b16 %v591
        %v2494 = vunpack.c.l.b16 %v592
        %v2495 = vunpack.c.h.b16 %v592
        %v2496 = vunpack.c.l.b16 %v593
        %v2497 = vunpack.c.h.b16 %v593
        %v2498 = vunpack.c.l.b16 %v594
        %v2499 = vunpack.c.h.b16 %v594
        %v2500 = vunpack.c.l.b16 %v595
        %v2501 = vunpack.c.h.b16 %v595
        %v2502 = vunpack.c.l.b16 %v596
        %v2503 = vunpack.c.h.b16 %v596
        %v2504 = vunpack.c.l.b16 %v597
        %v2505 = vunpack.c.h.b16 %v597
        %v2506 = vunpack.c.l.b16 %v598
        %v2507 = vunpack.c.h.b16 %v598
        %v2508 = vunpack.c.l.b16 %v599
        %v2509 = vunpack.c.h.b16 %v599
        %v2510 = vunpack.c.l.b16 %v600
        %v2511 = vunpack.c.h.b16 %v600
        %v2512 = vunpack.c.l.b16 %v601
        %v2513 = vunpack.c.h.b16 %v601
        %v2514 = vunpack.c.l.b16 %v602
        %v2515 = vunpack.c.h.b16 %v602
        %v2516 = vunpack.c.l.b16 %v603
        %v2517 = vunpack.c.h.b16 %v603
        %v2518 = vunpack.c.l.b16 %v604
        %v2519 = vunpack.c.h.b16 %v604
        %v2520 = vunpack.c.l.b16 %v605
        %v2521 = vunpack.c.h.b16 %v605
        %v2522 = vunpack.c.l.b16 %v606
        %v2523 = vunpack.c.h.b16 %v606
        %v2524 = vunpack.c.l.b16 %v607
        %v2525 = vunpack.c.h.b16 %v607
        %v2526 = vunpack.c.l.b16 %v608
        %v2527 = vunpack.c.h.b16 %v608
        %v2528 = vunpack.c.l.b16 %v609
        %v2529 = vunpack.c.h.b16 %v609
        %v2530 = vunpack.c.l.b16 %v610
        %v2531 = vunpack.c.h.b16 %v610
        %v2532 = vunpack.c.l.b16 %v611
        %v2533 = vunpack.c.h.b16 %v611
        %v2534 = vunpack.c.l.b16 %v612
        %v2535 = vunpack.c.h.b16 %v612
        %v2536 = vunpack.c.l.b16 %v613
        %v2537 = vunpack.c.h.b16 %v613
        %v2538 = vunpack.c.l.b16 %v614
        %v2539 = vunpack.c.h.b16 %v614
        %v2540 = vunpack.c.l.b16 %v615
        %v2541 = vunpack.c.h.b16 %v615
        %v2542 = vunpack.c.l.b16 %v616
        %v2543 = vunpack.c.h.b16 %v616
        %v2544 = vunpack.c.l.b16 %v617
        %v2545 = vunpack.c.h.b16 %v617
        %v2546 = vunpack.c.l.b16 %v618
        %v2547 = vunpack.c.h.b16 %v618
        %v2548 = vunpack.c.l.b16 %v619
        %v2549 = vunpack.c.h.b16 %v619
        %v2550 = vunpack.c.l.b16 %v620
        %v2551 = vunpack.c.h.b16 %v620
        %v2552 = vunpack.c.l.b16 %v621
        %v2553 = vunpack.c.h.b16 %v621
        %v2554 = vunpack.c.l.b16 %v622
        %v2555 = vunpack.c.h.b16 %v622
        %v2556 = vunpack.c.l.b16 %v623
        %v2557 = vunpack.c.h.b16 %v623
        %v2558 = vunpack.c.l.b16 %v624
        %v2559 = vunpack.c.h.b16 %v624
        %v2560 = vunpack.c.l.b16 %v625
        %v2561 = vunpack.c.h.b16 %v625
        %v2562 = vunpack.c.l.b16 %v626
        %v2563 = vunpack.c.h.b16 %v626
        %v2564 = vunpack.c.l.b16 %v627
        %v2565 = vunpack.c.h.b16 %v627
        %v2566 = vunpack.c.l.b16 %v628
        %v2567 = vunpack.c.h.b16 %v628
        %v2568 = vunpack.c.l.b16 %v629
        %v2569 = vunpack.c.h.b16 %v629
        %v2570 = vunpack.c.l.b16 %v630
        %v2571 = vunpack.c.h.b16 %v630
        %v2572 = vunpack.c.l.b16 %v631
        %v2573 = vunpack.c.h.b16 %v631
        %v2574 = vunpack.c.l.b16 %v632
        %v2575 = vunpack.c.h.b16 %v632
        %v2576 = vunpack.c.l.b16 %v633
        %v2577 = vunpack.c.h.b16 %v633
        %v2578 = vunpack.c.l.b16 %v634
        %v2579 = vunpack.c.h.b16 %v634
        %v2580 = vunpack.c.l.b16 %v635
        %v2581 = vunpack.c.h.b16 %v635
        %v2582 = vunpack.c.l.b16 %v636
        %v2583 = vunpack.c.h.b16 %v636
        %v2584 = vunpack.c.l.b16 %v637
        %v2585 = vunpack.c.h.b16 %v637
        %v2586 = vunpack.c.l.b16 %v638
        %v2587 = vunpack.c.h.b16 %v638
        %v2588 = vunpack.c.l.b16 %v639
        %v2589 = vunpack.c.h.b16 %v639
        %v2590 = vunpack.c.l.b16 %v640
        %v2591 = vunpack.c.h.b16 %v640
        %v2592 = vunpack.c.l.b16 %v641
        %v2593 = vunpack.c.h.b16 %v641
        %v2594 = vunpack.c.l.b16 %v642
        %v2595 = vunpack.c.h.b16 %v642
        %v2596 = vunpack.c.l.b16 %v643
        %v2597 = vunpack.c.h.b16 %v643
        %v2598 = vunpack.c.l.b16 %v644
        %v2599 = vunpack.c.h.b16 %v644
        %v2600 = vunpack.c.l.b16 %v645
        %v2601 = vunpack.c.h.b16 %v645
        %v2602 = vunpack.c.l.b16 %v646
        %v2603 = vunpack.c.h.b16 %v646
        %v2604 = vunpack.c.l.b16 %v647
        %v2605 = vunpack.c.h.b16 %v647
        %v2606 = vunpack.c.l.b16 %v648
        %v2607 = vunpack.c.h.b16 %v648
        %v2608 = vunpack.c.l.b16 %v649
        %v2609 = vunpack.c.h.b16 %v649
        %v2610 = vunpack.c.l.b16 %v650
        %v2611 = vunpack.c.h.b16 %v650
        %v2612 = vunpack.c.l.b16 %v651
        %v2613 = vunpack.c.h.b16 %v651
        %v2614 = vunpack.c.l.b16 %v652
        %v2615 = vunpack.c.h.b16 %v652
        %v2616 = vunpack.c.l.b16 %v653
        %v2617 = vunpack.c.h.b16 %v653
        %v2618 = vunpack.c.l.b16 %v654
        %v2619 = vunpack.c.h.b16 %v654
        %v2620 = vunpack.c.l.b16 %v655
        %v2621 = vunpack.c.h.b16 %v655
        %v2622 = vunpack.c.l.b16 %v656
        %v2623 = vunpack.c.h.b16 %v656
        %v2624 = vunpack.c.l.b16 %v657
        %v2625 = vunpack.c.h.b16 %v657
        %v2626 = vunpack.c.l.b16 %v658
        %v2627 = vunpack.c.h.b16 %v658
        %v2628 = vunpack.c.l.b16 %v659
        %v2629 = vunpack.c.h.b16 %v659
        %v2630 = vunpack.c.l.b16 %v660
        %v2631 = vunpack.c.h.b16 %v660
        %v2632 = vunpack.c.l.b16 %v661
        %v2633 = vunpack.c.h.b16 %v661
        %v2634 = vunpack.c.l.b16 %v662
        %v2635 = vunpack.c.h.b16 %v662
        %v2636 = vunpack.c.l.b16 %v663
        %v2637 = vunpack.c.h.b16 %v663
        %v2638 = vunpack.c.l.b16 %v664
        %v2639 = vunpack.c.h.b16 %v664
        %v2640 = vunpack.c.l.b16 %v665
        %v2641 = vunpack.c.h.b16 %v665
        %v2642 = vunpack.c.l.b16 %v666
        %v2643 = vunpack.c.h.b16 %v666
        %v2644 = vunpack.c.l.b16 %v667
        %v2645 = vunpack.c.h.b16 %v667
        %v2646 = vunpack.c.l.b16 %v668
        %v2647 = vunpack.c.h.b16 %v668
        %v2648 = vunpack.c.l.b16 %v669
        %v2649 = vunpack.c.h.b16 %v669
        %v2650 = vunpack.c.l.b16 %v670
        %v2651 = vunpack.c.h.b16 %v670
        %v2652 = vunpack.c.l.b16 %v671
        %v2653 = vunpack.c.h.b16 %v671
        %v2654 = vunpack.c.l.b16 %v672
        %v2655 = vunpack.c.h.b16 %v672
        %v2656 = vunpack.c.l.b16 %v673
        %v2657 = vunpack.c.h.b16 %v673
        %v2658 = vunpack.c.l.b16 %v674
        %v2659 = vunpack.c.h.b16 %v674
        %v2660 = vunpack.c.l.b16 %v675
        %v2661 = vunpack.c.h.b16 %v675
        %v2662 = vunpack.c.l.b16 %v676
        %v2663 = vunpack.c.h.b16 %v676
        %v2664 = vunpack.c.l.b16 %v677
        %v2665 = vunpack.c.h.b16 %v677
        %v2666 = vunpack.c.l.b16 %v678
        %v2667 = vunpack.c.h.b16 %v678
        %v2668 = vunpack.c.l.b16 %v679
        %v2669 = vunpack.c.h.b16 %v679
        %v2670 = vunpack.c.l.b16 %v680
        %v2671 = vunpack.c.h.b16 %v680
        %v2672 = vunpack.c.l.b16 %v681
        %v2673 = vunpack.c.h.b16 %v681
        %v2674 = vunpack.c.l.b16 %v682
        %v2675 = vunpack.c.h.b16 %v682
        %v2676 = vunpack.c.l.b16 %v683
        %v2677 = vunpack.c.h.b16 %v683
        %v2678 = vunpack.c.l.b16 %v684
        %v2679 = vunpack.c.h.b16 %v684
        %v2680 = vunpack.c.l.b16 %v685
        %v2681 = vunpack.c.h.b16 %v685
        %v2682 = vunpack.c.l.b16 %v686
        %v2683 = vunpack.c.h.b16 %v686
        %v2684 = vunpack.c.l.b16 %v687
        %v2685 = vunpack.c.h.b16 %v687
        %v2686 = vunpack.c.l.b16 %v688
        %v2687 = vunpack.c.h.b16 %v688
        %v2688 = vunpack.c.l.b16 %v689
        %v2689 = vunpack.c.h.b16 %v689
        %v2690 = vunpack.c.l.b16 %v690
        %v2691 = vunpack.c.h.b16 %v690
        %v2692 = vunpack.c.l.b16 %v691
        %v2693 = vunpack.c.h.b16 %v691
        %v2694 = vunpack.c.l.b16 %v692
        %v2695 = vunpack.c.h.b16 %v692
        %v2696 = vunpack.c.l.b16 %v693
        %v2697 = vunpack.c.h.b16 %v693
        %v2698 = vunpack.c.l.b16 %v694
        %v2699 = vunpack.c.h.b16 %v694
        %v2700 = vunpack.c.l.b16 %v695
        %v2701 = vunpack.c.h.b16 %v695
        %v2702 = vunpack.c.l.b16 %v696
        %v2703 = vunpack.c.h.b16 %v696
        %v2704 = vunpack.c.l.b16 %v697
        %v2705 = vunpack.c.h.b16 %v697
        %v2706 = vunpack.c.l.b16 %v698
        %v2707 = vunpack.c.h.b16 %v698
        %v2708 = vunpack.c.l.b16 %v699
        %v2709 = vunpack.c.h.b16 %v699
        %v2710 = vunpack.c.l.b16 %v700
        %v2711 = vunpack.c.h.b16 %v700
        %v2712 = vunpack.c.l.b16 %v701
        %v2713 = vunpack.c.h.b16 %v701
        %v2714 = vunpack.c.l.b16 %v702
        %v2715 = vunpack.c.h.b16 %v702
        %v2716 = vunpack.c.l.b16 %v703
        %v2717 = vunpack.c.h.b16 %v703
        %v2718 = vunpack.c.l.b16 %v704
        %v2719 = vunpack.c.h.b16 %v704
        %v2720 = vunpack.c.l.b16 %v705
        %v2721 = vunpack.c.h.b16 %v705
        %v2722 = vunpack.c.l.b16 %v706
        %v2723 = vunpack.c.h.b16 %v706
        %v2724 = vunpack.c.l.b16 %v707
        %v2725 = vunpack.c.h.b16 %v707
        %v2726 = vunpack.c.l.b16 %v708
        %v2727 = vunpack.c.h.b16 %v708
        %v2728 = vpack.c.b16 %v2348, %v2344
        %v2729 = vpack.c.b16 %v2349, %v2345
        %v2730 = vpack.c.b16 %v2350, %v2346
        %v2731 = vpack.c.b16 %v2351, %v2347
        %v2732 = vpack.c.b16 %v2356, %v2352
        %v2733 = vpack.c.b16 %v2357, %v2353
        %v2734 = vpack.c.b16 %v2358, %v2354
        %v2735 = vpack.c.b16 %v2359, %v2355
        %v2736 = vpack.c.b16 %v2364, %v2360
        %v2737 = vpack.c.b16 %v2365, %v2361
        %v2738 = vpack.c.b16 %v2366, %v2362
        %v2739 = vpack.c.b16 %v2367, %v2363
        %v2740 = vpack.c.b16 %v2372, %v2368
        %v2741 = vpack.c.b16 %v2373, %v2369
        %v2742 = vpack.c.b16 %v2374, %v2370
        %v2743 = vpack.c.b16 %v2375, %v2371
        %v2744 = vpack.c.b16 %v2380, %v2376
        %v2745 = vpack.c.b16 %v2381, %v2377
        %v2746 = vpack.c.b16 %v2382, %v2378
        %v2747 = vpack.c.b16 %v2383, %v2379
        %v2748 = vpack.c.b16 %v2388, %v2384
        %v2749 = vpack.c.b16 %v2389, %v2385
        %v2750 = vpack.c.b16 %v2390, %v2386
        %v2751 = vpack.c.b16 %v2391, %v2387
        %v2752 = vpack.c.b16 %v2396, %v2392
        %v2753 = vpack.c.b16 %v2397, %v2393
        %v2754 = vpack.c.b16 %v2398, %v2394
        %v2755 = vpack.c.b16 %v2399, %v2395
        %v2756 = vpack.c.b16 %v2404, %v2400
        %v2757 = vpack.c.b16 %v2405, %v2401
        %v2758 = vpack.c.b16 %v2406, %v2402
        %v2759 = vpack.c.b16 %v2407, %v2403
        %v2760 = vpack.c.b16 %v2412, %v2408
        %v2761 = vpack.c.b16 %v2413, %v2409
        %v2762 = vpack.c.b16 %v2414, %v2410
        %v2763 = vpack.c.b16 %v2415, %v2411
        %v2764 = vpack.c.b16 %v2420, %v2416
        %v2765 = vpack.c.b16 %v2421, %v2417
        %v2766 = vpack.c.b16 %v2422, %v2418
        %v2767 = vpack.c.b16 %v2423, %v2419
        %v2768 = vpack.c.b16 %v2428, %v2424
        %v2769 = vpack.c.b16 %v2429, %v2425
        %v2770 = vpack.c.b16 %v2430, %v2426
        %v2771 = vpack.c.b16 %v2431, %v2427
        %v2772 = vpack.c.b16 %v2436, %v2432
        %v2773 = vpack.c.b16 %v2437, %v2433
        %v2774 = vpack.c.b16 %v2438, %v2434
        %v2775 = vpack.c.b16 %v2439, %v2435
        %v2776 = vpack.c.b16 %v2444, %v2440
        %v2777 = vpack.c.b16 %v2445, %v2441
        %v2778 = vpack.c.b16 %v2446, %v2442
        %v2779 = vpack.c.b16 %v2447, %v2443
        %v2780 = vpack.c.b16 %v2452, %v2448
        %v2781 = vpack.c.b16 %v2453, %v2449
        %v2782 = vpack.c.b16 %v2454, %v2450
        %v2783 = vpack.c.b16 %v2455, %v2451
        %v2784 = vpack.c.b16 %v2460, %v2456
        %v2785 = vpack.c.b16 %v2461, %v2457
        %v2786 = vpack.c.b16 %v2462, %v2458
        %v2787 = vpack.c.b16 %v2463, %v2459
        %v2788 = vpack.c.b16 %v2468, %v2464
        %v2789 = vpack.c.b16 %v2469, %v2465
        %v2790 = vpack.c.b16 %v2470, %v2466
        %v2791 = vpack.c.b16 %v2471, %v2467
        %v2792 = vpack.c.b16 %v2476, %v2472
        %v2793 = vpack.c.b16 %v2477, %v2473
        %v2794 = vpack.c.b16 %v2478, %v2474
        %v2795 = vpack.c.b16 %v2479, %v2475
        %v2796 = vpack.c.b16 %v2484, %v2480
        %v2797 = vpack.c.b16 %v2485, %v2481
        %v2798 = vpack.c.b16 %v2486, %v2482
        %v2799 = vpack.c.b16 %v2487, %v2483
        %v2800 = vpack.c.b16 %v2492, %v2488
        %v2801 = vpack.c.b16 %v2493, %v2489
        %v2802 = vpack.c.b16 %v2494, %v2490
        %v2803 = vpack.c.b16 %v2495, %v2491
        %v2804 = vpack.c.b16 %v2500, %v2496
        %v2805 = vpack.c.b16 %v2501, %v2497
        %v2806 = vpack.c.b16 %v2502, %v2498
        %v2807 = vpack.c.b16 %v2503, %v2499
        %v2808 = vpack.c.b16 %v2508, %v2504
        %v2809 = vpack.c.b16 %v2509, %v2505
        %v2810 = vpack.c.b16 %v2510, %v2506
        %v2811 = vpack.c.b16 %v2511, %v2507
        %v2812 = vpack.c.b16 %v2516, %v2512
        %v2813 = vpack.c.b16 %v2517, %v2513
        %v2814 = vpack.c.b16 %v2518, %v2514
        %v2815 = vpack.c.b16 %v2519, %v2515
        %v2816 = vpack.c.b16 %v2524, %v2520
        %v2817 = vpack.c.b16 %v2525, %v2521
        %v2818 = vpack.c.b16 %v2526, %v2522
        %v2819 = vpack.c.b16 %v2527, %v2523
        %v2820 = vpack.c.b16 %v2532, %v2528
        %v2821 = vpack.c.b16 %v2533, %v2529
        %v2822 = vpack.c.b16 %v2534, %v2530
        %v2823 = vpack.c.b16 %v2535, %v2531
        %v2824 = vpack.c.b16 %v2540, %v2536
        %v2825 = vpack.c.b16 %v2541, %v2537
        %v2826 = vpack.c.b16 %v2542, %v2538
        %v2827 = vpack.c.b16 %v2543, %v2539
        %v2828 = vpack.c.b16 %v2548, %v2544
        %v2829 = vpack.c.b16 %v2549, %v2545
        %v2830 = vpack.c.b16 %v2550, %v2546
        %v2831 = vpack.c.b16 %v2551, %v2547
        %v2832 = vpack.c.b16 %v2556, %v2552
        %v2833 = vpack.c.b16 %v2557, %v2553
        %v2834 = vpack.c.b16 %v2558, %v2554
        %v2835 = vpack.c.b16 %v2559, %v2555
        %v2836 = vpack.c.b16 %v2564, %v2560
        %v2837 = vpack.c.b16 %v2565, %v2561
        %v2838 = vpack.c.b16 %v2566, %v2562
        %v2839 = vpack.c.b16 %v2567, %v2563
        %v2840 = vpack.c.b16 %v2572, %v2568
        %v2841 = vpack.c.b16 %v2573, %v2569
        %v2842 = vpack.c.b16 %v2574, %v2570
        %v2843 = vpack.c.b16 %v2575, %v2571
        %v2844 = vpack.c.b16 %v2580, %v2576
        %v2845 = vpack.c.b16 %v2581, %v2577
        %v2846 = vpack.c.b16 %v2582, %v2578
        %v2847 = vpack.c.b16 %v2583, %v2579
        %v2848 = vpack.c.b16 %v2588, %v2584
        %v2849 = vpack.c.b16 %v2589, %v2585
        %v2850 = vpack.c.b16 %v2590, %v2586
        %v2851 = vpack.c.b16 %v2591, %v2587
        %v2852 = vpack.c.b16 %v2596, %v2592
        %v2853 = vpack.c.b16 %v2597, %v2593
        %v2854 = vpack.c.b16 %v2598, %v2594
        %v2855 = vpack.c.b16 %v2599, %v2595
        %v2856 = vpack.c.b16 %v2604, %v2600
        %v2857 = vpack.c.b16 %v2605, %v2601
        %v2858 = vpack.c.b16 %v2606, %v2602
        %v2859 = vpack.c.b16 %v2607, %v2603
        %v2860 = vpack.c.b16 %v2612, %v2608
        %v2861 = vpack.c.b16 %v2613, %v2609
        %v2862 = vpack.c.b16 %v2614, %v2610
        %v2863 = vpack.c.b16 %v2615, %v2611
        %v2864 = vpack.c.b16 %v2620, %v2616
        %v2865 = vpack.c.b16 %v2621, %v2617
        %v2866 = vpack.c.b16 %v2622, %v2618
        %v2867 = vpack.c.b16 %v2623, %v2619
        %v2868 = vpack.c.b16 %v2628, %v2624
        %v2869 = vpack.c.b16 %v2629, %v2625
        %v2870 = vpack.c.b16 %v2630, %v2626
        %v2871 = vpack.c.b16 %v2631, %v2627
        %v2872 = vpack.c.b16 %v2636, %v2632
        %v2873 = vpack.c.b16 %v2637, %v2633
        %v2874 = vpack.c.b16 %v2638, %v2634
        %v2875 = vpack.c.b16 %v2639, %v2635
        %v2876 = vpack.c.b16 %v2644, %v2640
        %v2877 = vpack.c.b16 %v2645, %v2641
        %v2878 = vpack.c.b16 %v2646, %v2642
        %v2879 = vpack.c.b16 %v2647, %v2643
        %v2880 = vpack.c.b16 %v2652, %v2648
        %v2881 = vpack.c.b16 %v2653, %v2649
        %v2882 = vpack.c.b16 %v2654, %v2650
        %v2883 = vpack.c.b16 %v2655, %v2651
        %v2884 = vpack.c.b16 %v2660, %v2656
        %v2885 = vpack.c.b16 %v2661, %v2657
        %v2886 = vpack.c.b16 %v2662, %v2658
        %v2887 = vpack.c.b16 %v2663, %v2659
        %v2888 = vpack.c.b16 %v2668, %v2664
        %v2889 = vpack.c.b16 %v2669, %v2665
        %v2890 = vpack.c.b16 %v2670, %v2666
        %v2891 = vpack.c.b16 %v2671, %v2667
        %v2892 = vpack.c.b16 %v2676, %v2672
        %v2893 = vpack.c.b16 %v2677, %v2673
        %v2894 = vpack.c.b16 %v2678, %v2674
        %v2895 = vpack.c.b16 %v2679, %v2675
        %v2896 = vpack.c.b16 %v2684, %v2680
        %v2897 = vpack.c.b16 %v2685, %v2681
        %v2898 = vpack.c.b16 %v2686, %v2682
        %v2899 = vpack.c.b16 %v2687, %v2683
        %v2900 = vpack.c.b16 %v2692, %v2688
        %v2901 = vpack.c.b16 %v2693, %v2689
        %v2902 = vpack.c.b16 %v2694, %v2690
        %v2903 = vpack.c.b16 %v2695, %v2691
        %v2904 = vpack.c.b16 %v2700, %v2696
        %v2905 = vpack.c.b16 %v2701, %v2697
        %v2906 = vpack.c.b16 %v2702, %v2698
        %v2907 = vpack.c.b16 %v2703, %v2699
        %v2908 = vpack.c.b16 %v2708, %v2704
        %v2909 = vpack.c.b16 %v2709, %v2705
        %v2910 = vpack.c.b16 %v2710, %v2706
        %v2911 = vpack.c.b16 %v2711, %v2707
        %v2912 = vpack.c.b16 %v2716, %v2712
        %v2913 = vpack.c.b16 %v2717, %v2713
        %v2914 = vpack.c.b16 %v2718, %v2714
        %v2915 = vpack.c.b16 %v2719, %v2715
        %v2916 = vpack.c.b16 %v2724, %v2720
        %v2917 = vpack.c.b16 %v2725, %v2721
        %v2918 = vpack.c.b16 %v2726, %v2722
        %v2919 = vpack.c.b16 %v2727, %v2723
        %3112 = vmatprep.subr.bf16.mxu0 %v2729
        %3113 = vmatpush1.bf16.msra.mxu0 %v2728
        %3114 = vmatprep.subr.bf16.mxu0 %v2733
        %3115 = vmatpush1.bf16.msra.mxu0 %v2732
        %3116 = vmatprep.subr.bf16.mxu0 %v2737
        %3117 = vmatpush1.bf16.msra.mxu0 %v2736
        %3118 = vmatprep.subr.bf16.mxu0 %v2741
        %3119 = vmatpush1.bf16.msra.mxu0 %v2740
        %3120 = vmatprep.subr.bf16.mxu0 %v2745
        %3121 = vmatpush1.bf16.msra.mxu0 %v2744
        %3122 = vmatprep.subr.bf16.mxu0 %v2749
        %3123 = vmatpush1.bf16.msra.mxu0 %v2748
        %3124 = vmatprep.subr.bf16.mxu0 %v2753
        %3125 = vmatpush1.bf16.msra.mxu0 %v2752
        %3126 = vmatprep.subr.bf16.mxu0 %v2757
        %3127 = vmatpush1.bf16.msra.mxu0 %v2756
        %3128 = vmatprep.subr.bf16.mxu0 %v2761
        %3129 = vmatpush1.bf16.msra.mxu0 %v2760
        %3130 = vmatprep.subr.bf16.mxu0 %v2765
        %3131 = vmatpush1.bf16.msra.mxu0 %v2764
        %3132 = vmatprep.subr.bf16.mxu0 %v2769
        %3133 = vmatpush1.bf16.msra.mxu0 %v2768
        %3134 = vmatprep.subr.bf16.mxu0 %v2773
        %3135 = vmatpush1.bf16.msra.mxu0 %v2772
        %3136 = vmatprep.subr.bf16.mxu0 %v2777
        %3137 = vmatpush1.bf16.msra.mxu0 %v2776
        %3138 = vmatprep.subr.bf16.mxu0 %v2781
        %3139 = vmatpush1.bf16.msra.mxu0 %v2780
        %3140 = vmatprep.subr.bf16.mxu0 %v2785
        %3141 = vmatpush1.bf16.msra.mxu0 %v2784
        %3142 = vmatprep.subr.bf16.mxu0 %v2789
        %3143 = vmatpush1.bf16.msra.mxu0 %v2788
        %3144 = vmatprep.mubr.bf16.mxu0 %v2141
        %3145 = vmatmul.mubr.bf16.gmra.mrb[0].mxu0 %v2140
        %v3146 = vpop.f32.mrb[0].mxu0
        %v3147 = vadd.f32 %v2002, %v3146
        %v3148 = vpop.f32.mrb[0].mxu0
        %v3149 = vadd.f32 %v2004, %v3148
        %v3150 = vpop.f32.mrb[0].mxu0
        %v3151 = vpop.f32.mrb[0].mxu0
        %3152 = vdwg.mxu0
        %3153 = vmatprep.subr.bf16.mxu0 %v2793
        %3154 = vmatpush1.bf16.msra.mxu0 %v2792
        %3155 = vmatprep.subr.bf16.mxu0 %v2797
        %3156 = vmatpush1.bf16.msra.mxu0 %v2796
        %3157 = vmatprep.subr.bf16.mxu0 %v2801
        %3158 = vmatpush1.bf16.msra.mxu0 %v2800
        %3159 = vmatprep.subr.bf16.mxu0 %v2805
        %3160 = vmatpush1.bf16.msra.mxu0 %v2804
        %3161 = vmatprep.subr.bf16.mxu0 %v2809
        %3162 = vmatpush1.bf16.msra.mxu0 %v2808
        %3163 = vmatprep.subr.bf16.mxu0 %v2813
        %3164 = vmatpush1.bf16.msra.mxu0 %v2812
        %3165 = vmatprep.subr.bf16.mxu0 %v2817
        %3166 = vmatpush1.bf16.msra.mxu0 %v2816
        %3167 = vmatprep.subr.bf16.mxu0 %v2821
        %3168 = vmatpush1.bf16.msra.mxu0 %v2820
        %3169 = vmatprep.subr.bf16.mxu0 %v2825
        %3170 = vmatpush1.bf16.msra.mxu0 %v2824
        %3171 = vmatprep.subr.bf16.mxu0 %v2829
        %3172 = vmatpush1.bf16.msra.mxu0 %v2828
        %3173 = vmatprep.subr.bf16.mxu0 %v2833
        %3174 = vmatpush1.bf16.msra.mxu0 %v2832
        %3175 = vmatprep.subr.bf16.mxu0 %v2837
        %3176 = vmatpush1.bf16.msra.mxu0 %v2836
        %3177 = vmatprep.subr.bf16.mxu0 %v2841
        %3178 = vmatpush1.bf16.msra.mxu0 %v2840
        %3179 = vmatprep.subr.bf16.mxu0 %v2845
        %3180 = vmatpush1.bf16.msra.mxu0 %v2844
        %3181 = vmatprep.subr.bf16.mxu0 %v2849
        %3182 = vmatpush1.bf16.msra.mxu0 %v2848
        %3183 = vmatprep.subr.bf16.mxu0 %v2853
        %3184 = vmatpush1.bf16.msra.mxu0 %v2852
        %3185 = vmatprep.mubr.bf16.mxu0 %v2143
        %3186 = vmatmul.mubr.bf16.gmra.mrb[0].mxu0 %v2142
        %v3187 = vpop.f32.mrb[0].mxu0
        %v3188 = vadd.f32 %v3147, %v3187
        %v3189 = vpop.f32.mrb[0].mxu0
        %v3190 = vadd.f32 %v3149, %v3189
        %v3191 = vpop.f32.mrb[0].mxu0
        %v3192 = vpop.f32.mrb[0].mxu0
        %3193 = vdwg.mxu0
        %3194 = vmatprep.subr.bf16.mxu0 %v2857
        %3195 = vmatpush1.bf16.msra.mxu0 %v2856
        %3196 = vmatprep.subr.bf16.mxu0 %v2861
        %3197 = vmatpush1.bf16.msra.mxu0 %v2860
        %3198 = vmatprep.subr.bf16.mxu0 %v2865
        %3199 = vmatpush1.bf16.msra.mxu0 %v2864
        %3200 = vmatprep.subr.bf16.mxu0 %v2869
        %3201 = vmatpush1.bf16.msra.mxu0 %v2868
        %3202 = vmatprep.subr.bf16.mxu0 %v2873
        %3203 = vmatpush1.bf16.msra.mxu0 %v2872
        %3204 = vmatprep.subr.bf16.mxu0 %v2877
        %3205 = vmatpush1.bf16.msra.mxu0 %v2876
        %3206 = vmatprep.subr.bf16.mxu0 %v2881
        %3207 = vmatpush1.bf16.msra.mxu0 %v2880
        %3208 = vmatprep.subr.bf16.mxu0 %v2885
        %3209 = vmatpush1.bf16.msra.mxu0 %v2884
        %3210 = vmatprep.subr.bf16.mxu0 %v2889
        %3211 = vmatpush1.bf16.msra.mxu0 %v2888
        %3212 = vmatprep.subr.bf16.mxu0 %v2893
        %3213 = vmatpush1.bf16.msra.mxu0 %v2892
        %3214 = vmatprep.subr.bf16.mxu0 %v2897
        %3215 = vmatpush1.bf16.msra.mxu0 %v2896
        %3216 = vmatprep.subr.bf16.mxu0 %v2901
        %3217 = vmatpush1.bf16.msra.mxu0 %v2900
        %3218 = vmatprep.subr.bf16.mxu0 %v2905
        %3219 = vmatpush1.bf16.msra.mxu0 %v2904
        %3220 = vmatprep.subr.bf16.mxu0 %v2909
        %3221 = vmatpush1.bf16.msra.mxu0 %v2908
        %3222 = vmatprep.subr.bf16.mxu0 %v2913
        %3223 = vmatpush1.bf16.msra.mxu0 %v2912
        %3224 = vmatprep.subr.bf16.mxu0 %v2917
        %3225 = vmatpush1.bf16.msra.mxu0 %v2916
        %3226 = vmatprep.mubr.bf16.mxu0 %v2145
        %3227 = vmatmul.mubr.bf16.gmra.mrb[0].mxu0 %v2144
        %v3228 = vpop.f32.mrb[0].mxu0
        %v3229 = vadd.f32 %v3188, %v3228
        %v3230 = vpop.f32.mrb[0].mxu0
        %v3231 = vadd.f32 %v3190, %v3230
        %v3232 = vpop.f32.mrb[0].mxu0
        %v3233 = vpop.f32.mrb[0].mxu0
        %3234 = vdwg.mxu0
        %3235 = vmatprep.subr.bf16.mxu0 %v2731
        %3236 = vmatpush1.bf16.msra.mxu0 %v2730
        %3237 = vmatprep.subr.bf16.mxu0 %v2735
        %3238 = vmatpush1.bf16.msra.mxu0 %v2734
        %3239 = vmatprep.subr.bf16.mxu0 %v2739
        %3240 = vmatpush1.bf16.msra.mxu0 %v2738
        %3241 = vmatprep.subr.bf16.mxu0 %v2743
        %3242 = vmatpush1.bf16.msra.mxu0 %v2742
        %3243 = vmatprep.subr.bf16.mxu0 %v2747
        %3244 = vmatpush1.bf16.msra.mxu0 %v2746
        %3245 = vmatprep.subr.bf16.mxu0 %v2751
        %3246 = vmatpush1.bf16.msra.mxu0 %v2750
        %3247 = vmatprep.subr.bf16.mxu0 %v2755
        %3248 = vmatpush1.bf16.msra.mxu0 %v2754
        %3249 = vmatprep.subr.bf16.mxu0 %v2759
        %3250 = vmatpush1.bf16.msra.mxu0 %v2758
        %3251 = vmatprep.subr.bf16.mxu0 %v2763
        %3252 = vmatpush1.bf16.msra.mxu0 %v2762
        %3253 = vmatprep.subr.bf16.mxu0 %v2767
        %3254 = vmatpush1.bf16.msra.mxu0 %v2766
        %3255 = vmatprep.subr.bf16.mxu0 %v2771
        %3256 = vmatpush1.bf16.msra.mxu0 %v2770
        %3257 = vmatprep.subr.bf16.mxu0 %v2775
        %3258 = vmatpush1.bf16.msra.mxu0 %v2774
        %3259 = vmatprep.subr.bf16.mxu0 %v2779
        %3260 = vmatpush1.bf16.msra.mxu0 %v2778
        %3261 = vmatprep.subr.bf16.mxu0 %v2783
        %3262 = vmatpush1.bf16.msra.mxu0 %v2782
        %3263 = vmatprep.subr.bf16.mxu0 %v2787
        %3264 = vmatpush1.bf16.msra.mxu0 %v2786
        %3265 = vmatprep.subr.bf16.mxu0 %v2791
        %3266 = vmatpush1.bf16.msra.mxu0 %v2790
        %3267 = vmatprep.mubr.bf16.mxu0 %v2141
        %3268 = vmatmul.mubr.bf16.gmra.mrb[0].mxu0 %v2140
        %v3269 = vpop.f32.mrb[0].mxu0
        %v3270 = vadd.f32 %v2125, %v3269
        %v3271 = vpop.f32.mrb[0].mxu0
        %v3272 = vadd.f32 %v2127, %v3271
        %v3273 = vpop.f32.mrb[0].mxu0
        %v3274 = vpop.f32.mrb[0].mxu0
        %3275 = vdwg.mxu0
        %3276 = vmatprep.subr.bf16.mxu0 %v2795
        %3277 = vmatpush1.bf16.msra.mxu0 %v2794
        %3278 = vmatprep.subr.bf16.mxu0 %v2799
        %3279 = vmatpush1.bf16.msra.mxu0 %v2798
        %3280 = vmatprep.subr.bf16.mxu0 %v2803
        %3281 = vmatpush1.bf16.msra.mxu0 %v2802
        %3282 = vmatprep.subr.bf16.mxu0 %v2807
        %3283 = vmatpush1.bf16.msra.mxu0 %v2806
        %3284 = vmatprep.subr.bf16.mxu0 %v2811
        %3285 = vmatpush1.bf16.msra.mxu0 %v2810
        %3286 = vmatprep.subr.bf16.mxu0 %v2815
        %3287 = vmatpush1.bf16.msra.mxu0 %v2814
        %3288 = vmatprep.subr.bf16.mxu0 %v2819
        %3289 = vmatpush1.bf16.msra.mxu0 %v2818
        %3290 = vmatprep.subr.bf16.mxu0 %v2823
        %3291 = vmatpush1.bf16.msra.mxu0 %v2822
        %3292 = vmatprep.subr.bf16.mxu0 %v2827
        %3293 = vmatpush1.bf16.msra.mxu0 %v2826
        %3294 = vmatprep.subr.bf16.mxu0 %v2831
        %3295 = vmatpush1.bf16.msra.mxu0 %v2830
        %3296 = vmatprep.subr.bf16.mxu0 %v2835
        %3297 = vmatpush1.bf16.msra.mxu0 %v2834
        %3298 = vmatprep.subr.bf16.mxu0 %v2839
        %3299 = vmatpush1.bf16.msra.mxu0 %v2838
        %3300 = vmatprep.subr.bf16.mxu0 %v2843
        %3301 = vmatpush1.bf16.msra.mxu0 %v2842
        %3302 = vmatprep.subr.bf16.mxu0 %v2847
        %3303 = vmatpush1.bf16.msra.mxu0 %v2846
        %3304 = vmatprep.subr.bf16.mxu0 %v2851
        %3305 = vmatpush1.bf16.msra.mxu0 %v2850
        %3306 = vmatprep.subr.bf16.mxu0 %v2855
        %3307 = vmatpush1.bf16.msra.mxu0 %v2854
        %3308 = vmatprep.mubr.bf16.mxu0 %v2143
        %3309 = vmatmul.mubr.bf16.gmra.mrb[0].mxu0 %v2142
        %v3310 = vpop.f32.mrb[0].mxu0
        %v3311 = vadd.f32 %v3270, %v3310
        %v3312 = vpop.f32.mrb[0].mxu0
        %v3313 = vadd.f32 %v3272, %v3312
        %v3314 = vpop.f32.mrb[0].mxu0
        %v3315 = vpop.f32.mrb[0].mxu0
        %3316 = vdwg.mxu0
        %3317 = vmatprep.subr.bf16.mxu0 %v2859
        %3318 = vmatpush1.bf16.msra.mxu0 %v2858
        %3319 = vmatprep.subr.bf16.mxu0 %v2863
        %3320 = vmatpush1.bf16.msra.mxu0 %v2862
        %3321 = vmatprep.subr.bf16.mxu0 %v2867
        %3322 = vmatpush1.bf16.msra.mxu0 %v2866
        %3323 = vmatprep.subr.bf16.mxu0 %v2871
        %3324 = vmatpush1.bf16.msra.mxu0 %v2870
        %3325 = vmatprep.subr.bf16.mxu0 %v2875
        %3326 = vmatpush1.bf16.msra.mxu0 %v2874
        %3327 = vmatprep.subr.bf16.mxu0 %v2879
        %3328 = vmatpush1.bf16.msra.mxu0 %v2878
        %3329 = vmatprep.subr.bf16.mxu0 %v2883
        %3330 = vmatpush1.bf16.msra.mxu0 %v2882
        %3331 = vmatprep.subr.bf16.mxu0 %v2887
        %3332 = vmatpush1.bf16.msra.mxu0 %v2886
        %3333 = vmatprep.subr.bf16.mxu0 %v2891
        %3334 = vmatpush1.bf16.msra.mxu0 %v2890
        %3335 = vmatprep.subr.bf16.mxu0 %v2895
        %3336 = vmatpush1.bf16.msra.mxu0 %v2894
        %3337 = vmatprep.subr.bf16.mxu0 %v2899
        %3338 = vmatpush1.bf16.msra.mxu0 %v2898
        %3339 = vmatprep.subr.bf16.mxu0 %v2903
        %3340 = vmatpush1.bf16.msra.mxu0 %v2902
        %3341 = vmatprep.subr.bf16.mxu0 %v2907
        %3342 = vmatpush1.bf16.msra.mxu0 %v2906
        %3343 = vmatprep.subr.bf16.mxu0 %v2911
        %3344 = vmatpush1.bf16.msra.mxu0 %v2910
        %3345 = vmatprep.subr.bf16.mxu0 %v2915
        %3346 = vmatpush1.bf16.msra.mxu0 %v2914
        %3347 = vmatprep.subr.bf16.mxu0 %v2919
        %3348 = vmatpush1.bf16.msra.mxu0 %v2918
        %3349 = vmatprep.mubr.bf16.mxu0 %v2145
        %3350 = vmatmul.mubr.bf16.gmra.mrb[0].mxu0 %v2144
        %v3351 = vpop.f32.mrb[0].mxu0
        %v3352 = vadd.f32 %v3311, %v3351
        %v3353 = vpop.f32.mrb[0].mxu0
        %v3354 = vadd.f32 %v3313, %v3353
        %v3355 = vpop.f32.mrb[0].mxu0
        %v3356 = vpop.f32.mrb[0].mxu0
        %3357 = vdwg.mxu0
        %v3358 = vld [vmem:[%s4] sm:$0xf]
        %v3360 = vlaneseq
        %v3361 = vshrl.u32 %v3360, 7
        %v3362 = vsub.s32 0, %v3361
        %v3363 = vrot.slane %v3358, %v3362
        %v3364 = vlaneseq
        %v3365 = vshrl.u32 %v3364, 7
        %v3366 = vsub.s32 1, %v3365
        %v3367 = vrot.slane %v3358, %v3366
        %v3368 = vlaneseq
        %v3369 = vshrl.u32 %v3368, 7
        %v3370 = vsub.s32 2, %v3369
        %v3371 = vrot.slane %v3358, %v3370
        %v3372 = vlaneseq
        %v3373 = vshrl.u32 %v3372, 7
        %v3374 = vsub.s32 3, %v3373
        %v3375 = vrot.slane %v3358, %v3374
        %v3380 = vadd.f32 %v3229, %v3363
        %v3381 = vadd.f32 %v3231, %v3367
        %v3382 = vadd.f32 %v3352, %v3371
        %v3383 = vadd.f32 %v3354, %v3375
        %v3384 = vmax.f32 %v3380, 0.0
        %v3385 = vmax.f32 %v3381, 0.0
        %v3386 = vmax.f32 %v3382, 0.0
        %v3387 = vmax.f32 %v3383, 0.0
        %v3388 = vpack.c.bf16 %v3384, %v3384
        %v3389 = vpack.c.bf16 %v3385, %v3385
        %v3390 = vpack.c.bf16 %v3386, %v3386
        %v3391 = vpack.c.bf16 %v3387, %v3387
        %v3392 = vld [vmem:[#allocation10] sm:$0xff]
        %v3393 = vld [vmem:[#allocation10 + $0x8] sm:$0xff]
        %v3394 = vld [vmem:[#allocation10 + $0x10] sm:$0xff]
        %v3395 = vld [vmem:[#allocation10 + $0x18] sm:$0xff]
        %v3396 = vld [vmem:[#allocation10 + $0x20] sm:$0xff]
        %v3397 = vld [vmem:[#allocation10 + $0x28] sm:$0xff]
        %v3398 = vld [vmem:[#allocation10 + $0x30] sm:$0xff]
        %v3399 = vld [vmem:[#allocation10 + $0x38] sm:$0xff]
        %v3400 = vld [vmem:[#allocation10 + $0x40] sm:$0xff]
        %v3401 = vld [vmem:[#allocation10 + $0x48] sm:$0xff]
        %v3402 = vld [vmem:[#allocation10 + $0x50] sm:$0xff]
        %v3403 = vld [vmem:[#allocation10 + $0x58] sm:$0xff]
        %v3404 = vld [vmem:[#allocation10 + $0x60] sm:$0xff]
        %v3405 = vld [vmem:[#allocation10 + $0x68] sm:$0xff]
        %v3406 = vld [vmem:[#allocation10 + $0x70] sm:$0xff]
        %v3407 = vld [vmem:[#allocation10 + $0x78] sm:$0xff]
        %v3408 = vld [vmem:[#allocation10 + $0x80] sm:$0xff]
        %v3409 = vld [vmem:[#allocation10 + $0x88] sm:$0xff]
        %v3410 = vld [vmem:[#allocation10 + $0x90] sm:$0xff]
        %v3411 = vld [vmem:[#allocation10 + $0x98] sm:$0xff]
        %v3412 = vld [vmem:[#allocation10 + $0xa0] sm:$0xff]
        %v3413 = vld [vmem:[#allocation10 + $0xa8] sm:$0xff]
        %v3414 = vld [vmem:[#allocation10 + $0xb0] sm:$0xff]
        %v3415 = vld [vmem:[#allocation10 + $0xb8] sm:$0xff]
        %v3416 = vld [vmem:[#allocation10 + $0xc0] sm:$0xff]
        %v3417 = vld [vmem:[#allocation10 + $0xc8] sm:$0xff]
        %v3418 = vld [vmem:[#allocation10 + $0xd0] sm:$0xff]
        %v3419 = vld [vmem:[#allocation10 + $0xd8] sm:$0xff]
        %v3420 = vld [vmem:[#allocation10 + $0xe0] sm:$0xff]
        %v3421 = vld [vmem:[#allocation10 + $0xe8] sm:$0xff]
        %v3422 = vld [vmem:[#allocation10 + $0xf0] sm:$0xff]
        %v3423 = vld [vmem:[#allocation10 + $0xf8] sm:$0xff]
        %v3424 = vld [vmem:[#allocation10 + $0x100] sm:$0xff]
        %v3425 = vld [vmem:[#allocation10 + $0x108] sm:$0xff]
        %v3426 = vld [vmem:[#allocation10 + $0x110] sm:$0xff]
        %v3427 = vld [vmem:[#allocation10 + $0x118] sm:$0xff]
        %v3428 = vld [vmem:[#allocation10 + $0x120] sm:$0xff]
        %v3429 = vld [vmem:[#allocation10 + $0x128] sm:$0xff]
        %v3430 = vld [vmem:[#allocation10 + $0x130] sm:$0xff]
        %v3431 = vld [vmem:[#allocation10 + $0x138] sm:$0xff]
        %v3432 = vld [vmem:[#allocation10 + $0x140] sm:$0xff]
        %v3433 = vld [vmem:[#allocation10 + $0x148] sm:$0xff]
        %v3434 = vld [vmem:[#allocation10 + $0x150] sm:$0xff]
        %v3435 = vld [vmem:[#allocation10 + $0x158] sm:$0xff]
        %v3436 = vld [vmem:[#allocation10 + $0x160] sm:$0xff]
        %v3437 = vld [vmem:[#allocation10 + $0x168] sm:$0xff]
        %v3438 = vld [vmem:[#allocation10 + $0x170] sm:$0xff]
        %v3439 = vld [vmem:[#allocation10 + $0x178] sm:$0xff]
        %v3440 = vld [vmem:[#allocation10 + $0x180] sm:$0xff]
        %v3441 = vld [vmem:[#allocation10 + $0x188] sm:$0xff]
        %v3442 = vld [vmem:[#allocation10 + $0x190] sm:$0xff]
        %v3443 = vld [vmem:[#allocation10 + $0x198] sm:$0xff]
        %v3444 = vld [vmem:[#allocation10 + $0x1a0] sm:$0xff]
        %v3445 = vld [vmem:[#allocation10 + $0x1a8] sm:$0xff]
        %v3446 = vld [vmem:[#allocation10 + $0x1b0] sm:$0xff]
        %v3447 = vld [vmem:[#allocation10 + $0x1b8] sm:$0xff]
        %v3448 = vld [vmem:[#allocation10 + $0x1c0] sm:$0xff]
        %v3449 = vld [vmem:[#allocation10 + $0x1c8] sm:$0xff]
        %v3450 = vld [vmem:[#allocation10 + $0x1d0] sm:$0xff]
        %v3451 = vld [vmem:[#allocation10 + $0x1d8] sm:$0xff]
        %v3452 = vld [vmem:[#allocation10 + $0x1e0] sm:$0xff]
        %v3453 = vld [vmem:[#allocation10 + $0x1e8] sm:$0xff]
        %v3454 = vld [vmem:[#allocation10 + $0x1f0] sm:$0xff]
        %v3455 = vld [vmem:[#allocation10 + $0x1f8] sm:$0xff]
        %v3456 = vld [vmem:[%s6] sm:$0x3]
        %v3458 = vlaneseq
        %v3459 = vshrl.u32 %v3458, 7
        %v3460 = vsub.s32 0, %v3459
        %v3461 = vrot.slane %v3456, %v3460
        %v3462 = vlaneseq
        %v3463 = vshrl.u32 %v3462, 7
        %v3464 = vsub.s32 1, %v3463
        %v3465 = vrot.slane %v3456, %v3464
        %v3532 = vunpack.c.l.b16 %v3392
        %v3533 = vunpack.c.h.b16 %v3392
        %v3534 = vunpack.c.l.b16 %v3393
        %v3535 = vunpack.c.h.b16 %v3393
        %v3536 = vunpack.c.l.b16 %v3394
        %v3537 = vunpack.c.h.b16 %v3394
        %v3538 = vunpack.c.l.b16 %v3395
        %v3539 = vunpack.c.h.b16 %v3395
        %v3540 = vunpack.c.l.b16 %v3396
        %v3541 = vunpack.c.h.b16 %v3396
        %v3542 = vunpack.c.l.b16 %v3397
        %v3543 = vunpack.c.h.b16 %v3397
        %v3544 = vunpack.c.l.b16 %v3398
        %v3545 = vunpack.c.h.b16 %v3398
        %v3546 = vunpack.c.l.b16 %v3399
        %v3547 = vunpack.c.h.b16 %v3399
        %v3548 = vunpack.c.l.b16 %v3400
        %v3549 = vunpack.c.h.b16 %v3400
        %v3550 = vunpack.c.l.b16 %v3401
        %v3551 = vunpack.c.h.b16 %v3401
        %v3552 = vunpack.c.l.b16 %v3402
        %v3553 = vunpack.c.h.b16 %v3402
        %v3554 = vunpack.c.l.b16 %v3403
        %v3555 = vunpack.c.h.b16 %v3403
        %v3556 = vunpack.c.l.b16 %v3404
        %v3557 = vunpack.c.h.b16 %v3404
        %v3558 = vunpack.c.l.b16 %v3405
        %v3559 = vunpack.c.h.b16 %v3405
        %v3560 = vunpack.c.l.b16 %v3406
        %v3561 = vunpack.c.h.b16 %v3406
        %v3562 = vunpack.c.l.b16 %v3407
        %v3563 = vunpack.c.h.b16 %v3407
        %v3564 = vunpack.c.l.b16 %v3408
        %v3565 = vunpack.c.h.b16 %v3408
        %v3566 = vunpack.c.l.b16 %v3409
        %v3567 = vunpack.c.h.b16 %v3409
        %v3568 = vunpack.c.l.b16 %v3410
        %v3569 = vunpack.c.h.b16 %v3410
        %v3570 = vunpack.c.l.b16 %v3411
        %v3571 = vunpack.c.h.b16 %v3411
        %v3572 = vunpack.c.l.b16 %v3412
        %v3573 = vunpack.c.h.b16 %v3412
        %v3574 = vunpack.c.l.b16 %v3413
        %v3575 = vunpack.c.h.b16 %v3413
        %v3576 = vunpack.c.l.b16 %v3414
        %v3577 = vunpack.c.h.b16 %v3414
        %v3578 = vunpack.c.l.b16 %v3415
        %v3579 = vunpack.c.h.b16 %v3415
        %v3580 = vunpack.c.l.b16 %v3416
        %v3581 = vunpack.c.h.b16 %v3416
        %v3582 = vunpack.c.l.b16 %v3417
        %v3583 = vunpack.c.h.b16 %v3417
        %v3584 = vunpack.c.l.b16 %v3418
        %v3585 = vunpack.c.h.b16 %v3418
        %v3586 = vunpack.c.l.b16 %v3419
        %v3587 = vunpack.c.h.b16 %v3419
        %v3588 = vunpack.c.l.b16 %v3420
        %v3589 = vunpack.c.h.b16 %v3420
        %v3590 = vunpack.c.l.b16 %v3421
        %v3591 = vunpack.c.h.b16 %v3421
        %v3592 = vunpack.c.l.b16 %v3422
        %v3593 = vunpack.c.h.b16 %v3422
        %v3594 = vunpack.c.l.b16 %v3423
        %v3595 = vunpack.c.h.b16 %v3423
        %v3596 = vunpack.c.l.b16 %v3424
        %v3597 = vunpack.c.h.b16 %v3424
        %v3598 = vunpack.c.l.b16 %v3425
        %v3599 = vunpack.c.h.b16 %v3425
        %v3600 = vunpack.c.l.b16 %v3426
        %v3601 = vunpack.c.h.b16 %v3426
        %v3602 = vunpack.c.l.b16 %v3427
        %v3603 = vunpack.c.h.b16 %v3427
        %v3604 = vunpack.c.l.b16 %v3428
        %v3605 = vunpack.c.h.b16 %v3428
        %v3606 = vunpack.c.l.b16 %v3429
        %v3607 = vunpack.c.h.b16 %v3429
        %v3608 = vunpack.c.l.b16 %v3430
        %v3609 = vunpack.c.h.b16 %v3430
        %v3610 = vunpack.c.l.b16 %v3431
        %v3611 = vunpack.c.h.b16 %v3431
        %v3612 = vunpack.c.l.b16 %v3432
        %v3613 = vunpack.c.h.b16 %v3432
        %v3614 = vunpack.c.l.b16 %v3433
        %v3615 = vunpack.c.h.b16 %v3433
        %v3616 = vunpack.c.l.b16 %v3434
        %v3617 = vunpack.c.h.b16 %v3434
        %v3618 = vunpack.c.l.b16 %v3435
        %v3619 = vunpack.c.h.b16 %v3435
        %v3620 = vunpack.c.l.b16 %v3436
        %v3621 = vunpack.c.h.b16 %v3436
        %v3622 = vunpack.c.l.b16 %v3437
        %v3623 = vunpack.c.h.b16 %v3437
        %v3624 = vunpack.c.l.b16 %v3438
        %v3625 = vunpack.c.h.b16 %v3438
        %v3626 = vunpack.c.l.b16 %v3439
        %v3627 = vunpack.c.h.b16 %v3439
        %v3628 = vunpack.c.l.b16 %v3440
        %v3629 = vunpack.c.h.b16 %v3440
        %v3630 = vunpack.c.l.b16 %v3441
        %v3631 = vunpack.c.h.b16 %v3441
        %v3632 = vunpack.c.l.b16 %v3442
        %v3633 = vunpack.c.h.b16 %v3442
        %v3634 = vunpack.c.l.b16 %v3443
        %v3635 = vunpack.c.h.b16 %v3443
        %v3636 = vunpack.c.l.b16 %v3444
        %v3637 = vunpack.c.h.b16 %v3444
        %v3638 = vunpack.c.l.b16 %v3445
        %v3639 = vunpack.c.h.b16 %v3445
        %v3640 = vunpack.c.l.b16 %v3446
        %v3641 = vunpack.c.h.b16 %v3446
        %v3642 = vunpack.c.l.b16 %v3447
        %v3643 = vunpack.c.h.b16 %v3447
        %v3644 = vunpack.c.l.b16 %v3448
        %v3645 = vunpack.c.h.b16 %v3448
        %v3646 = vunpack.c.l.b16 %v3449
        %v3647 = vunpack.c.h.b16 %v3449
        %v3648 = vunpack.c.l.b16 %v3450
        %v3649 = vunpack.c.h.b16 %v3450
        %v3650 = vunpack.c.l.b16 %v3451
        %v3651 = vunpack.c.h.b16 %v3451
        %v3652 = vunpack.c.l.b16 %v3452
        %v3653 = vunpack.c.h.b16 %v3452
        %v3654 = vunpack.c.l.b16 %v3453
        %v3655 = vunpack.c.h.b16 %v3453
        %v3656 = vunpack.c.l.b16 %v3454
        %v3657 = vunpack.c.h.b16 %v3454
        %v3658 = vunpack.c.l.b16 %v3455
        %v3659 = vunpack.c.h.b16 %v3455
        %v3660 = vpack.c.b16 %v3534, %v3532
        %v3661 = vpack.c.b16 %v3535, %v3533
        %v3662 = vpack.c.b16 %v3538, %v3536
        %v3663 = vpack.c.b16 %v3539, %v3537
        %v3664 = vpack.c.b16 %v3542, %v3540
        %v3665 = vpack.c.b16 %v3543, %v3541
        %v3666 = vpack.c.b16 %v3546, %v3544
        %v3667 = vpack.c.b16 %v3547, %v3545
        %v3668 = vpack.c.b16 %v3550, %v3548
        %v3669 = vpack.c.b16 %v3551, %v3549
        %v3670 = vpack.c.b16 %v3554, %v3552
        %v3671 = vpack.c.b16 %v3555, %v3553
        %v3672 = vpack.c.b16 %v3558, %v3556
        %v3673 = vpack.c.b16 %v3559, %v3557
        %v3674 = vpack.c.b16 %v3562, %v3560
        %v3675 = vpack.c.b16 %v3563, %v3561
        %v3676 = vpack.c.b16 %v3566, %v3564
        %v3677 = vpack.c.b16 %v3567, %v3565
        %v3678 = vpack.c.b16 %v3570, %v3568
        %v3679 = vpack.c.b16 %v3571, %v3569
        %v3680 = vpack.c.b16 %v3574, %v3572
        %v3681 = vpack.c.b16 %v3575, %v3573
        %v3682 = vpack.c.b16 %v3578, %v3576
        %v3683 = vpack.c.b16 %v3579, %v3577
        %v3684 = vpack.c.b16 %v3582, %v3580
        %v3685 = vpack.c.b16 %v3583, %v3581
        %v3686 = vpack.c.b16 %v3586, %v3584
        %v3687 = vpack.c.b16 %v3587, %v3585
        %v3688 = vpack.c.b16 %v3590, %v3588
        %v3689 = vpack.c.b16 %v3591, %v3589
        %v3690 = vpack.c.b16 %v3594, %v3592
        %v3691 = vpack.c.b16 %v3595, %v3593
        %v3692 = vpack.c.b16 %v3598, %v3596
        %v3693 = vpack.c.b16 %v3599, %v3597
        %v3694 = vpack.c.b16 %v3602, %v3600
        %v3695 = vpack.c.b16 %v3603, %v3601
        %v3696 = vpack.c.b16 %v3606, %v3604
        %v3697 = vpack.c.b16 %v3607, %v3605
        %v3698 = vpack.c.b16 %v3610, %v3608
        %v3699 = vpack.c.b16 %v3611, %v3609
        %v3700 = vpack.c.b16 %v3614, %v3612
        %v3701 = vpack.c.b16 %v3615, %v3613
        %v3702 = vpack.c.b16 %v3618, %v3616
        %v3703 = vpack.c.b16 %v3619, %v3617
        %v3704 = vpack.c.b16 %v3622, %v3620
        %v3705 = vpack.c.b16 %v3623, %v3621
        %v3706 = vpack.c.b16 %v3626, %v3624
        %v3707 = vpack.c.b16 %v3627, %v3625
        %v3708 = vpack.c.b16 %v3630, %v3628
        %v3709 = vpack.c.b16 %v3631, %v3629
        %v3710 = vpack.c.b16 %v3634, %v3632
        %v3711 = vpack.c.b16 %v3635, %v3633
        %v3712 = vpack.c.b16 %v3638, %v3636
        %v3713 = vpack.c.b16 %v3639, %v3637
        %v3714 = vpack.c.b16 %v3642, %v3640
        %v3715 = vpack.c.b16 %v3643, %v3641
        %v3716 = vpack.c.b16 %v3646, %v3644
        %v3717 = vpack.c.b16 %v3647, %v3645
        %v3718 = vpack.c.b16 %v3650, %v3648
        %v3719 = vpack.c.b16 %v3651, %v3649
        %v3720 = vpack.c.b16 %v3654, %v3652
        %v3721 = vpack.c.b16 %v3655, %v3653
        %v3722 = vpack.c.b16 %v3658, %v3656
        %v3723 = vpack.c.b16 %v3659, %v3657
        %3788 = vmatprep.subr.bf16.mxu0 %v3661
        %3789 = vmatpush1.bf16.msra.mxu0 %v3660
        %3790 = vmatprep.subr.bf16.mxu0 %v3663
        %3791 = vmatpush1.bf16.msra.mxu0 %v3662
        %3792 = vmatprep.subr.bf16.mxu0 %v3665
        %3793 = vmatpush1.bf16.msra.mxu0 %v3664
        %3794 = vmatprep.subr.bf16.mxu0 %v3667
        %3795 = vmatpush1.bf16.msra.mxu0 %v3666
        %3796 = vmatprep.subr.bf16.mxu0 %v3669
        %3797 = vmatpush1.bf16.msra.mxu0 %v3668
        %3798 = vmatprep.subr.bf16.mxu0 %v3671
        %3799 = vmatpush1.bf16.msra.mxu0 %v3670
        %3800 = vmatprep.subr.bf16.mxu0 %v3673
        %3801 = vmatpush1.bf16.msra.mxu0 %v3672
        %3802 = vmatprep.subr.bf16.mxu0 %v3675
        %3803 = vmatpush1.bf16.msra.mxu0 %v3674
        %3804 = vmatprep.subr.bf16.mxu0 %v3677
        %3805 = vmatpush1.bf16.msra.mxu0 %v3676
        %3806 = vmatprep.subr.bf16.mxu0 %v3679
        %3807 = vmatpush1.bf16.msra.mxu0 %v3678
        %3808 = vmatprep.subr.bf16.mxu0 %v3681
        %3809 = vmatpush1.bf16.msra.mxu0 %v3680
        %3810 = vmatprep.subr.bf16.mxu0 %v3683
        %3811 = vmatpush1.bf16.msra.mxu0 %v3682
        %3812 = vmatprep.subr.bf16.mxu0 %v3685
        %3813 = vmatpush1.bf16.msra.mxu0 %v3684
        %3814 = vmatprep.subr.bf16.mxu0 %v3687
        %3815 = vmatpush1.bf16.msra.mxu0 %v3686
        %3816 = vmatprep.subr.bf16.mxu0 %v3689
        %3817 = vmatpush1.bf16.msra.mxu0 %v3688
        %3818 = vmatprep.subr.bf16.mxu0 %v3691
        %3819 = vmatpush1.bf16.msra.mxu0 %v3690
        %3820 = vmatprep.mubr.bf16.mxu0 %v3389
        %3821 = vmatmul.mubr.bf16.gmra.mrb[0].mxu0 %v3388
        %v3822 = vpop.f32.mrb[0].mxu0
        %v3823 = vadd.f32 %v3461, %v3822
        %v3824 = vpop.f32.mrb[0].mxu0
        %v3825 = vadd.f32 %v3465, %v3824
        %v3826 = vpop.f32.mrb[0].mxu0
        %v3827 = vpop.f32.mrb[0].mxu0
        %3828 = vdwg.mxu0
        %3829 = vmatprep.subr.bf16.mxu0 %v3693
        %3830 = vmatpush1.bf16.msra.mxu0 %v3692
        %3831 = vmatprep.subr.bf16.mxu0 %v3695
        %3832 = vmatpush1.bf16.msra.mxu0 %v3694
        %3833 = vmatprep.subr.bf16.mxu0 %v3697
        %3834 = vmatpush1.bf16.msra.mxu0 %v3696
        %3835 = vmatprep.subr.bf16.mxu0 %v3699
        %3836 = vmatpush1.bf16.msra.mxu0 %v3698
        %3837 = vmatprep.subr.bf16.mxu0 %v3701
        %3838 = vmatpush1.bf16.msra.mxu0 %v3700
        %3839 = vmatprep.subr.bf16.mxu0 %v3703
        %3840 = vmatpush1.bf16.msra.mxu0 %v3702
        %3841 = vmatprep.subr.bf16.mxu0 %v3705
        %3842 = vmatpush1.bf16.msra.mxu0 %v3704
        %3843 = vmatprep.subr.bf16.mxu0 %v3707
        %3844 = vmatpush1.bf16.msra.mxu0 %v3706
        %3845 = vmatprep.subr.bf16.mxu0 %v3709
        %3846 = vmatpush1.bf16.msra.mxu0 %v3708
        %3847 = vmatprep.subr.bf16.mxu0 %v3711
        %3848 = vmatpush1.bf16.msra.mxu0 %v3710
        %3849 = vmatprep.subr.bf16.mxu0 %v3713
        %3850 = vmatpush1.bf16.msra.mxu0 %v3712
        %3851 = vmatprep.subr.bf16.mxu0 %v3715
        %3852 = vmatpush1.bf16.msra.mxu0 %v3714
        %3853 = vmatprep.subr.bf16.mxu0 %v3717
        %3854 = vmatpush1.bf16.msra.mxu0 %v3716
        %3855 = vmatprep.subr.bf16.mxu0 %v3719
        %3856 = vmatpush1.bf16.msra.mxu0 %v3718
        %3857 = vmatprep.subr.bf16.mxu0 %v3721
        %3858 = vmatpush1.bf16.msra.mxu0 %v3720
        %3859 = vmatprep.subr.bf16.mxu0 %v3723
        %3860 = vmatpush1.bf16.msra.mxu0 %v3722
        %3861 = vmatprep.mubr.bf16.mxu0 %v3391
        %3862 = vmatmul.mubr.bf16.gmra.mrb[0].mxu0 %v3390
        %v3863 = vpop.f32.mrb[0].mxu0
        %v3864 = vadd.f32 %v3823, %v3863
        %v3865 = vpop.f32.mrb[0].mxu0
        %v3866 = vadd.f32 %v3825, %v3865
        %v3867 = vpop.f32.mrb[0].mxu0
        %v3868 = vpop.f32.mrb[0].mxu0
        %3869 = vdwg.mxu0
        %v3870 = vmax.f32 %v3864, 0.0
        %v3871 = vmax.f32 %v3866, 0.0
        %v3872 = vpack.c.bf16 %v3870, %v3870
        %v3873 = vpack.c.bf16 %v3871, %v3871
        %v3874 = vld [vmem:[#allocation11] sm:$0xf]
        %v3875 = vld [vmem:[#allocation11 + $0x4] sm:$0xf]
        %v3876 = vld [vmem:[#allocation11 + $0x8] sm:$0xf]
        %v3877 = vld [vmem:[#allocation11 + $0xc] sm:$0xf]
        %v3878 = vld [vmem:[#allocation11 + $0x10] sm:$0xf]
        %v3879 = vld [vmem:[#allocation11 + $0x14] sm:$0xf]
        %v3880 = vld [vmem:[#allocation11 + $0x18] sm:$0xf]
        %v3881 = vld [vmem:[#allocation11 + $0x1c] sm:$0xf]
        %v3882 = vld [vmem:[#allocation11 + $0x20] sm:$0xf]
        %v3883 = vld [vmem:[#allocation11 + $0x24] sm:$0xf]
        %v3884 = vld [vmem:[#allocation11 + $0x28] sm:$0xf]
        %v3885 = vld [vmem:[#allocation11 + $0x2c] sm:$0xf]
        %v3886 = vld [vmem:[#allocation11 + $0x30] sm:$0xf]
        %v3887 = vld [vmem:[#allocation11 + $0x34] sm:$0xf]
        %v3888 = vld [vmem:[#allocation11 + $0x38] sm:$0xf]
        %v3889 = vld [vmem:[#allocation11 + $0x3c] sm:$0xf]
        %v3890 = vld [vmem:[#allocation11 + $0x40] sm:$0xf]
        %v3891 = vld [vmem:[#allocation11 + $0x44] sm:$0xf]
        %v3892 = vld [vmem:[#allocation11 + $0x48] sm:$0xf]
        %v3893 = vld [vmem:[#allocation11 + $0x4c] sm:$0xf]
        %v3894 = vld [vmem:[#allocation11 + $0x50] sm:$0xf]
        %v3895 = vld [vmem:[#allocation11 + $0x54] sm:$0xf]
        %v3896 = vld [vmem:[#allocation11 + $0x58] sm:$0xf]
        %v3897 = vld [vmem:[#allocation11 + $0x5c] sm:$0xf]
        %v3898 = vld [vmem:[#allocation11 + $0x60] sm:$0xf]
        %v3899 = vld [vmem:[#allocation11 + $0x64] sm:$0xf]
        %v3900 = vld [vmem:[#allocation11 + $0x68] sm:$0xf]
        %v3901 = vld [vmem:[#allocation11 + $0x6c] sm:$0xf]
        %v3902 = vld [vmem:[#allocation11 + $0x70] sm:$0xf]
        %v3903 = vld [vmem:[#allocation11 + $0x74] sm:$0xf]
        %v3904 = vld [vmem:[#allocation11 + $0x78] sm:$0xf]
        %v3905 = vld [vmem:[#allocation11 + $0x7c] sm:$0xf]
        %v3906 = vld [vmem:[%s8] sm:$0x1]
        %v3908 = vlaneseq
        %v3909 = vshrl.u32 %v3908, 7
        %v3910 = vsub.s32 0, %v3909
        %v3911 = vrot.slane %v3906, %v3910
        %v3945 = vunpack.c.l.b16 %v3874
        %v3946 = vunpack.c.l.b16 %v3875
        %v3947 = vunpack.c.l.b16 %v3876
        %v3948 = vunpack.c.l.b16 %v3877
        %v3949 = vunpack.c.l.b16 %v3878
        %v3950 = vunpack.c.l.b16 %v3879
        %v3951 = vunpack.c.l.b16 %v3880
        %v3952 = vunpack.c.l.b16 %v3881
        %v3953 = vunpack.c.l.b16 %v3882
        %v3954 = vunpack.c.l.b16 %v3883
        %v3955 = vunpack.c.l.b16 %v3884
        %v3956 = vunpack.c.l.b16 %v3885
        %v3957 = vunpack.c.l.b16 %v3886
        %v3958 = vunpack.c.l.b16 %v3887
        %v3959 = vunpack.c.l.b16 %v3888
        %v3960 = vunpack.c.l.b16 %v3889
        %v3961 = vunpack.c.l.b16 %v3890
        %v3962 = vunpack.c.l.b16 %v3891
        %v3963 = vunpack.c.l.b16 %v3892
        %v3964 = vunpack.c.l.b16 %v3893
        %v3965 = vunpack.c.l.b16 %v3894
        %v3966 = vunpack.c.l.b16 %v3895
        %v3967 = vunpack.c.l.b16 %v3896
        %v3968 = vunpack.c.l.b16 %v3897
        %v3969 = vunpack.c.l.b16 %v3898
        %v3970 = vunpack.c.l.b16 %v3899
        %v3971 = vunpack.c.l.b16 %v3900
        %v3972 = vunpack.c.l.b16 %v3901
        %v3973 = vunpack.c.l.b16 %v3902
        %v3974 = vunpack.c.l.b16 %v3903
        %v3975 = vunpack.c.l.b16 %v3904
        %v3976 = vunpack.c.l.b16 %v3905
        %v3977 = vpack.c.b16 %v3946, %v3945
        %v3978 = vpack.c.b16 %v3948, %v3947
        %v3979 = vpack.c.b16 %v3950, %v3949
        %v3980 = vpack.c.b16 %v3952, %v3951
        %v3981 = vpack.c.b16 %v3954, %v3953
        %v3982 = vpack.c.b16 %v3956, %v3955
        %v3983 = vpack.c.b16 %v3958, %v3957
        %v3984 = vpack.c.b16 %v3960, %v3959
        %v3985 = vpack.c.b16 %v3962, %v3961
        %v3986 = vpack.c.b16 %v3964, %v3963
        %v3987 = vpack.c.b16 %v3966, %v3965
        %v3988 = vpack.c.b16 %v3968, %v3967
        %v3989 = vpack.c.b16 %v3970, %v3969
        %v3990 = vpack.c.b16 %v3972, %v3971
        %v3991 = vpack.c.b16 %v3974, %v3973
        %v3992 = vpack.c.b16 %v3976, %v3975
        %4009 = vmatprep.subr.bf16.mxu0 0
        %4010 = vmatpush1.bf16.msra.mxu0 %v3977
        %4011 = vmatprep.subr.bf16.mxu0 0
        %4012 = vmatpush1.bf16.msra.mxu0 %v3978
        %4013 = vmatprep.subr.bf16.mxu0 0
        %4014 = vmatpush1.bf16.msra.mxu0 %v3979
        %4015 = vmatprep.subr.bf16.mxu0 0
        %4016 = vmatpush1.bf16.msra.mxu0 %v3980
        %4017 = vmatprep.subr.bf16.mxu0 0
        %4018 = vmatpush1.bf16.msra.mxu0 %v3981
        %4019 = vmatprep.subr.bf16.mxu0 0
        %4020 = vmatpush1.bf16.msra.mxu0 %v3982
        %4021 = vmatprep.subr.bf16.mxu0 0
        %4022 = vmatpush1.bf16.msra.mxu0 %v3983
        %4023 = vmatprep.subr.bf16.mxu0 0
        %4024 = vmatpush1.bf16.msra.mxu0 %v3984
        %4025 = vmatprep.subr.bf16.mxu0 0
        %4026 = vmatpush1.bf16.msra.mxu0 %v3985
        %4027 = vmatprep.subr.bf16.mxu0 0
        %4028 = vmatpush1.bf16.msra.mxu0 %v3986
        %4029 = vmatprep.subr.bf16.mxu0 0
        %4030 = vmatpush1.bf16.msra.mxu0 %v3987
        %4031 = vmatprep.subr.bf16.mxu0 0
        %4032 = vmatpush1.bf16.msra.mxu0 %v3988
        %4033 = vmatprep.subr.bf16.mxu0 0
        %4034 = vmatpush1.bf16.msra.mxu0 %v3989
        %4035 = vmatprep.subr.bf16.mxu0 0
        %4036 = vmatpush1.bf16.msra.mxu0 %v3990
        %4037 = vmatprep.subr.bf16.mxu0 0
        %4038 = vmatpush1.bf16.msra.mxu0 %v3991
        %4039 = vmatprep.subr.bf16.mxu0 0
        %4040 = vmatpush1.bf16.msra.mxu0 %v3992
        %4041 = vmatprep.mubr.bf16.mxu0 %v3873
        %4042 = vmatmul.mubr.bf16.gmra.mrb[0].mxu0 %v3872
        %v4043 = vpop.f32.mrb[0].mxu0
        %v4044 = vadd.f32 %v3911, %v4043
        %v4045 = vpop.f32.mrb[0].mxu0
        %v4046 = vpop.f32.mrb[0].mxu0
        %v4047 = vpop.f32.mrb[0].mxu0
        %4048 = vdwg.mxu0
        %v4049 = vmax.f32 %v4044, 0.0
        %v4050 = vpack.c.bf16 %v4049, %v4049
        %v4051 = vld [vmem:[#allocation13] sm:$0xf]
        %v4052 = vld [vmem:[#allocation13 + $0x4] sm:$0xf]
        %v4053 = vld [vmem:[#allocation13 + $0x8] sm:$0xf]
        %v4054 = vld [vmem:[#allocation13 + $0xc] sm:$0xf]
        %v4055 = vld [vmem:[#allocation13 + $0x10] sm:$0xf]
        %v4056 = vld [vmem:[#allocation13 + $0x14] sm:$0xf]
        %v4057 = vld [vmem:[#allocation13 + $0x18] sm:$0xf]
        %v4058 = vld [vmem:[#allocation13 + $0x1c] sm:$0xf]
        %v4059 = vld [vmem:[#allocation13 + $0x20] sm:$0xf]
        %v4060 = vld [vmem:[#allocation13 + $0x24] sm:$0xf]
        %v4061 = vld [vmem:[#allocation13 + $0x28] sm:$0xf]
        %v4062 = vld [vmem:[#allocation13 + $0x2c] sm:$0xf]
        %v4063 = vld [vmem:[#allocation13 + $0x30] sm:$0xf]
        %v4064 = vld [vmem:[#allocation13 + $0x34] sm:$0xf]
        %v4065 = vld [vmem:[#allocation13 + $0x38] sm:$0xf]
        %v4066 = vld [vmem:[#allocation13 + $0x3c] sm:$0xf]
        %v4067 = vld [vmem:[%s10] sm:$0x1]
        %v4069 = vlaneseq
        %v4070 = vshrl.u32 %v4069, 7
        %v4071 = vsub.s32 0, %v4070
        %v4072 = vrot.slane %v4067, %v4071
        %v4090 = vunpack.c.l.b16 %v4051
        %v4091 = vunpack.c.l.b16 %v4052
        %v4092 = vunpack.c.l.b16 %v4053
        %v4093 = vunpack.c.l.b16 %v4054
        %v4094 = vunpack.c.l.b16 %v4055
        %v4095 = vunpack.c.l.b16 %v4056
        %v4096 = vunpack.c.l.b16 %v4057
        %v4097 = vunpack.c.l.b16 %v4058
        %v4098 = vunpack.c.l.b16 %v4059
        %v4099 = vunpack.c.l.b16 %v4060
        %v4100 = vunpack.c.l.b16 %v4061
        %v4101 = vunpack.c.l.b16 %v4062
        %v4102 = vunpack.c.l.b16 %v4063
        %v4103 = vunpack.c.l.b16 %v4064
        %v4104 = vunpack.c.l.b16 %v4065
        %v4105 = vunpack.c.l.b16 %v4066
        %v4106 = vpack.c.b16 %v4091, %v4090
        %v4107 = vpack.c.b16 %v4093, %v4092
        %v4108 = vpack.c.b16 %v4095, %v4094
        %v4109 = vpack.c.b16 %v4097, %v4096
        %v4110 = vpack.c.b16 %v4099, %v4098
        %v4111 = vpack.c.b16 %v4101, %v4100
        %v4112 = vpack.c.b16 %v4103, %v4102
        %v4113 = vpack.c.b16 %v4105, %v4104
        %4122 = vmatprep.subr.bf16.mxu0 0
        %4123 = vmatpush1.bf16.msra.mxu0 %v4106
        %4124 = vmatprep.subr.bf16.mxu0 0
        %4125 = vmatpush1.bf16.msra.mxu0 %v4107
        %4126 = vmatprep.subr.bf16.mxu0 0
        %4127 = vmatpush1.bf16.msra.mxu0 %v4108
        %4128 = vmatprep.subr.bf16.mxu0 0
        %4129 = vmatpush1.bf16.msra.mxu0 %v4109
        %4130 = vmatprep.subr.bf16.mxu0 0
        %4131 = vmatpush1.bf16.msra.mxu0 %v4110
        %4132 = vmatprep.subr.bf16.mxu0 0
        %4133 = vmatpush1.bf16.msra.mxu0 %v4111
        %4134 = vmatprep.subr.bf16.mxu0 0
        %4135 = vmatpush1.bf16.msra.mxu0 %v4112
        %4136 = vmatprep.subr.bf16.mxu0 0
        %4137 = vmatpush1.bf16.msra.mxu0 %v4113
        %4138 = vmatprep.subr.bf16.mxu0 0
        %4139 = vmatpush1.bf16.msra.mxu0 0
        %4140 = vmatprep.subr.bf16.mxu0 0
        %4141 = vmatpush1.bf16.msra.mxu0 0
        %4142 = vmatprep.subr.bf16.mxu0 0
        %4143 = vmatpush1.bf16.msra.mxu0 0
        %4144 = vmatprep.subr.bf16.mxu0 0
        %4145 = vmatpush1.bf16.msra.mxu0 0
        %4146 = vmatprep.subr.bf16.mxu0 0
        %4147 = vmatpush1.bf16.msra.mxu0 0
        %4148 = vmatprep.subr.bf16.mxu0 0
        %4149 = vmatpush1.bf16.msra.mxu0 0
        %4150 = vmatprep.subr.bf16.mxu0 0
        %4151 = vmatpush1.bf16.msra.mxu0 0
        %4152 = vmatprep.subr.bf16.mxu0 0
        %4153 = vmatpush1.bf16.msra.mxu0 0
        %4154 = vmatprep.mubr.bf16.mxu0 0
        %4155 = vmatmul.mubr.bf16.gmra.mrb[0].mxu0 %v4050
        %v4156 = vpop.f32.mrb[0].mxu0
        %v4157 = vadd.f32 %v4072, %v4156
        %v4158 = vpop.f32.mrb[0].mxu0
        %v4159 = vpop.f32.mrb[0].mxu0
        %v4160 = vpop.f32.mrb[0].mxu0
        %4161 = vdwg.mxu0
        %4162 = vst [vmem:[%s512] sm:$0xff] %v4157
        %s4163 = sand.u32 %s282, 1
        %s4164 = scalar_lea.sflag [#allocation4], %s4163
        %s4165 = sand.u32 %s282, 1
        %s4166 = smul.addr %s4165, 8
        %s4167 = scalar_lea.vmem [#allocation14], %s4166
        // Predicated region
        $region93: #{tpu_custom_call.1} parent=63 // pred_check
          %p4168 = pneg %p292
        $region94: #{tpu_custom_call.1} parent=63 // pred_check_branch
          %4170 = sbr.rel (%p4168) target = $region96
        $region95: #{tpu_custom_call.1} parent=63 // pred_region
          %s4172 = ssub.s32 128, 128
          %4173 = vsyncadd %s4164, %s4172
          %s4174 = smul.addr %s33, 128
          %s4175 = scalar_lea.hbm %s11, %s4174
          %s4177 = sshll.u32 %s4167, 4
          %s4178 = int_to_ptr.vmem [resolvable:$true] %s4177
          %4180 = dma.vmem_to_hbm [thread:$0]  %s4178, 128, %s4175, %s4164
        $region96: #{tpu_custom_call.1} parent=63 // pred_fallthru
          _
      $region64: #{tpu_custom_call.1} parent=5 // pred_fallthru
        _
      %p4181 = scmp.le.s32.totalorder 2, %s28
      // Predicated region
      $region97: #{tpu_custom_call.1} parent=5 // pred_check
        %p4182 = pneg %p4181
      $region98: #{tpu_custom_call.1} parent=5 // pred_check_branch
        %4184 = sbr.rel (%p4182) target = $region100
      $region99: #{tpu_custom_call.1} parent=5 // pred_region
        %s4185 = ssub.s32 %s28, 2
        // Predicated region
        $region101: #{tpu_custom_call.1} parent=99 // pred_check
          %p4186 = pneg %p298
        $region102: #{tpu_custom_call.1} parent=99 // pred_check_branch
          %4188 = sbr.rel (%p4186) target = $region104
        $region103: #{tpu_custom_call.1} parent=99 // pred_region
          %s4189 = sand.u32 %s283, 1
          %s4190 = scalar_lea.sflag [#allocation4], %s4189
          %s4191 = sand.u32 %s283, 1
          %s4192 = smul.addr %s4191, 8
          %s4193 = scalar_lea.vmem [#allocation14], %s4192
          %4194 = dma.done %s4190, 128
        $region104: #{tpu_custom_call.1} parent=99 // pred_fallthru
          _
      $region100: #{tpu_custom_call.1} parent=5 // pred_fallthru
        _
    $region6: #{tpu_custom_call.1} parent=1 // loop_footer
      %s32 = sadd.s32 1, %s28
    $region7: #{tpu_custom_call.1} parent=1 // loop_footer_branch
      %27 = sbr.rel target = $region3
    $region8: #{tpu_custom_call.1} parent=1 // loop_exit
      _
    %4195 = vsyncpa [#allocation3], 1
    %s4196 = scalar_lea.sflag [#allocation3], 1
    %4197 = vsyncpa %s4196, 1
    %4198 = vsyncpa [#allocation6], 1
    %s4199 = scalar_lea.sflag [#allocation6], 1
    %4200 = vsyncpa %s4199, 1
    %4201 = vsyncpa [#allocation9], 1
    %4202 = vsyncpa [#allocation12], 1
    %4203 = vsyncpa [#allocation4], 1
    %s4204 = scalar_lea.sflag [#allocation4], 1
    %4205 = vsyncpa %s4204, 1

</llo_original>
